<compile_context>
chip_gen: v7x
topology: tpu7x:2x2x1
jax: 0.10.0
libtpu: 0.0.40
codegen_flags: <defaults>
</compile_context>

<pallas_src>
import functools
import numpy as np
import jax
import jax.numpy as jnp
from jax import lax
from jax.experimental import pallas as pl
from jax.experimental.pallas import tpu as pltpu

# ---- config (small, consistent with the module) ----
BS = 2
N_DEC_SEQ = 8
N_ENC_SEQ = 8
D_HIDN = 32
N_HEAD = 2
D_HEAD = 16
D_FF = 64
EPS = 1e-6
NEG_INF = -1e9
INV_SQRT2 = 0.7071067811865476

HD = N_HEAD * D_HEAD          # 32 (== D_HIDN for this config; packing relies on it)
LANES = 128

# ---- packed-parameter slab row offsets (lanes are always 0..127) ----
R_SA_W = 0                    # rows [0,32):   [wq*scale | wk | wv | wo]
R_DA_W = D_HIDN               # rows [32,64):  same for dec-enc attention
R_FF_W1 = 2 * D_HIDN          # rows [64,96):  [ff_w1 (32,64) | pad]
R_FF_W2 = 3 * D_HIDN          # rows [96,160): [ff_w2 (64,32) | pad]
R_SA_B = 3 * D_HIDN + D_FF    # row 160: [bq*scale | bk | bv | bo]
R_DA_B = R_SA_B + 1           # row 161
R_FF_B = R_SA_B + 2           # row 162: [ff_b1 (64) | ff_b2 (32) | pad]
R_LN12 = R_SA_B + 3           # row 163: [ln1_g | ln1_b | ln2_g | ln2_b]
R_LN3 = R_SA_B + 4            # row 164: [ln3_g | ln3_b | pad]
P_ROWS = ((R_LN3 + 1 + 7) // 8) * 8   # 168 (pad rows to sublane multiple)


# ============================ parameter packing ============================

def _pack_params(params):
    """Pack every weight/bias/LayerNorm param into one [P_ROWS, 128] f32 slab
    (one HBM->VMEM DMA).  1/sqrt(d_head) is folded into wq / bq here."""
    sa, da, ff = params["self_attn"], params["dec_enc_attn"], params["ffn"]
    scale = 1.0 / (D_HEAD ** 0.5)

    def lane_pad(x):
        return jnp.pad(x, ((0, 0), (0, LANES - x.shape[1])))

    def attn_rows(p):
        w = jnp.concatenate([p["wq"] * scale, p["wk"], p["wv"], p["wo"]], axis=1)
        b = jnp.concatenate([p["bq"] * scale, p["bk"], p["bv"], p["bo"]], axis=1)
        return lane_pad(w), lane_pad(b)

    sa_w, sa_b = attn_rows(sa)
    da_w, da_b = attn_rows(da)
    ff_b = lane_pad(jnp.concatenate([ff["b1"], ff["b2"]], axis=1))
    ln12 = lane_pad(jnp.concatenate([params["ln1_g"], params["ln1_b"],
                                     params["ln2_g"], params["ln2_b"]], axis=1))
    ln3 = lane_pad(jnp.concatenate([params["ln3_g"], params["ln3_b"]], axis=1))

    slab = jnp.concatenate(
        [sa_w, da_w, lane_pad(ff["w1"]), lane_pad(ff["w2"]),
         sa_b, da_b, ff_b, ln12, ln3], axis=0)
    return jnp.pad(slab, ((0, P_ROWS - slab.shape[0]), (0, 0)))


# ============================ fused decoder-layer kernel ============================

def _decoder_layer_kernel(acts_ref, masks_ref, p_ref, out_ref, *, bs, seq_q, seq_k):
    nq, nk = bs * seq_q, bs * seq_k
    dec = acts_ref[0:nq, :]                       # [bs*sq, d_hidn]
    enc = acts_ref[nq:nq + nk, :]                 # [bs*sk, d_hidn]
    self_mask = masks_ref[0][:, :, 0:seq_q]       # [bs, sq, sq]
    de_mask = masks_ref[1][:, :, 0:seq_k]         # [bs, sq, sk]

    def mha(x_q, x_k, x_v, mask, w_row, b_row, seq_kv):
        """Multi-head attention; weights/biases are static slices of p_ref.
        No lane-relayouts of activations: per-head projections come out
        already head-separated, all reshapes are leading-dim (tile-aligned)."""
        out2d, probs = None, []
        for h in range(N_HEAD):                   # static unroll (2 heads)
            c = h * D_HEAD
            wq = p_ref[w_row:w_row + D_HIDN, c:c + D_HEAD]
            wk = p_ref[w_row:w_row + D_HIDN, HD + c:HD + c + D_HEAD]
            wv = p_ref[w_row:w_row + D_HIDN, 2 * HD + c:2 * HD + c + D_HEAD]
            wo = p_ref[w_row + c:w_row + c + D_HEAD, 3 * HD:3 * HD + D_HIDN]
            bq = p_ref[b_row:b_row + 1, c:c + D_HEAD]
            bk = p_ref[b_row:b_row + 1, HD + c:HD + c + D_HEAD]
            bv = p_ref[b_row:b_row + 1, 2 * HD + c:2 * HD + c + D_HEAD]

            # scale already folded into wq/bq at pack time
            q = (jnp.dot(x_q, wq, preferred_element_type=jnp.float32) + bq
                 ).reshape(bs, seq_q, D_HEAD)
            k = (jnp.dot(x_k, wk, preferred_element_type=jnp.float32) + bk
                 ).reshape(bs, seq_kv, D_HEAD)
            v = (jnp.dot(x_v, wv, preferred_element_type=jnp.float32) + bv
                 ).reshape(bs, seq_kv, D_HEAD)

            scores = jnp.einsum("bqd,bkd->bqk", q, k,
                                preferred_element_type=jnp.float32)
            scores = jnp.where(mask > 0.0, NEG_INF, scores)    # masked_fill_
            m = jnp.max(scores, axis=-1, keepdims=True)
            e = jnp.exp(scores - m)
            prob = e / jnp.sum(e, axis=-1, keepdims=True)      # softmax(dim=-1)
            ctx = jnp.einsum("bqk,bkd->bqd", prob, v,
                             preferred_element_type=jnp.float32)
            h_out = jnp.dot(ctx.reshape(bs * seq_q, D_HEAD), wo,
                            preferred_element_type=jnp.float32)
            out2d = h_out if out2d is None else out2d + h_out
            probs.append(prob.reshape(bs * seq_q, seq_kv))
        bo = p_ref[b_row:b_row + 1, 3 * HD:3 * HD + D_HIDN]
        return out2d + bo, probs

    def add_ln(x, y, row, col):
        """LayerNorm(x + y) over last dim (biased variance, like nn.LayerNorm)."""
        g = p_ref[row:row + 1, col:col + D_HIDN]
        b = p_ref[row:row + 1, col + D_HIDN:col + 2 * D_HIDN]
        s = x + y
        mu = jnp.mean(s, axis=-1, keepdims=True)
        var = jnp.mean((s - mu) * (s - mu), axis=-1, keepdims=True)
        return (s - mu) * lax.rsqrt(var + EPS) * g + b

    def ffn(x):
        """conv1d(k=1) -> exact gelu -> conv1d(k=1), channel-last matmuls."""
        w1 = p_ref[R_FF_W1:R_FF_W1 + D_HIDN, 0:D_FF]
        b1 = p_ref[R_FF_B:R_FF_B + 1, 0:D_FF]
        w2 = p_ref[R_FF_W2:R_FF_W2 + D_FF, 0:D_HIDN]
        b2 = p_ref[R_FF_B:R_FF_B + 1, D_FF:D_FF + D_HIDN]
        h = jnp.dot(x, w1, preferred_element_type=jnp.float32) + b1
        h = 0.5 * h * (1.0 + lax.erf(h * INV_SQRT2))   # exact gelu (F.gelu default)
        return jnp.dot(h, w2, preferred_element_type=jnp.float32) + b2

    # 1) masked self attention + add&norm
    sa_out, sa_probs = mha(dec, dec, dec, self_mask, R_SA_W, R_SA_B, seq_q)
    x1 = add_ln(dec, sa_out, R_LN12, 0)
    # 2) decoder-encoder attention + add&norm
    de_out, de_probs = mha(x1, enc, enc, de_mask, R_DA_W, R_DA_B, seq_k)
    x2 = add_ln(x1, de_out, R_LN12, 2 * D_HIDN)
    # 3) position-wise FFN + add&norm
    x3 = add_ln(x2, ffn(x2), R_LN3, 0)

    # single packed output store: [out | sa_prob heads | de_prob heads]
    out_ref[...] = jnp.concatenate([x3] + sa_probs + de_probs, axis=1)


# ============================ wrapper ============================

def decoder_layer(params, dec_inputs, enc_outputs, self_attn_mask, dec_enc_attn_mask):
    bs, sq, d = dec_inputs.shape
    sk = enc_outputs.shape[1]

    # 3 input DMAs total: activations, masks, packed parameters.
    acts = jnp.concatenate([dec_inputs.reshape(bs * sq, d),
                            enc_outputs.reshape(bs * sk, d)], axis=0)
    msk = max(sq, sk)
    masks = jnp.stack(
        [jnp.pad(self_attn_mask, ((0, 0), (0, 0), (0, msk - sq))),
         jnp.pad(dec_enc_attn_mask, ((0, 0), (0, 0), (0, msk - sk)))], axis=0)
    pparams = _pack_params(params)

    kernel = functools.partial(_decoder_layer_kernel, bs=bs, seq_q=sq, seq_k=sk)
    vmem = pl.BlockSpec(memory_space=pltpu.MemorySpace.VMEM)
    out_w = d + N_HEAD * (sq + sk)

    # Gridless: whole layer in one invocation (all intermediates stay in VMEM).
    # TODO(synk): on v7x (2 TensorCores) a (bs,)-parallel grid would shard the
    # batch across cores; not worth the per-step overhead on v5e/v6e at bs=2.
    slab = pl.pallas_call(
        kernel,
        out_shape=jax.ShapeDtypeStruct((bs * sq, out_w), jnp.float32),
        in_specs=[vmem, vmem, vmem],
        out_specs=vmem,
    )(acts, masks, pparams)

    out = slab[:, 0:d].reshape(bs, sq, d)
    o = d
    sa_prob = slab[:, o:o + N_HEAD * sq].reshape(bs, sq, N_HEAD, sq).transpose(0, 2, 1, 3)
    o += N_HEAD * sq
    de_prob = slab[:, o:o + N_HEAD * sk].reshape(bs, sq, N_HEAD, sk).transpose(0, 2, 1, 3)
    return out, sa_prob, de_prob


# ============================ pure-JAX reference ============================

def _ref_mha(xq, xk, xv, mask, p):
    bs, seq_q, _ = xq.shape
    seq_k = xk.shape[1]
    q = (xq @ p["wq"] + p["bq"][0]).reshape(bs, seq_q, N_HEAD, D_HEAD).transpose(0, 2, 1, 3)
    k = (xk @ p["wk"] + p["bk"][0]).reshape(bs, seq_k, N_HEAD, D_HEAD).transpose(0, 2, 1, 3)
    v = (xv @ p["wv"] + p["bv"][0]).reshape(bs, seq_k, N_HEAD, D_HEAD).transpose(0, 2, 1, 3)
    scores = jnp.einsum("bhqd,bhkd->bhqk", q, k) / (D_HEAD ** 0.5)
    scores = jnp.where(mask[:, None] > 0.0, NEG_INF, scores)
    prob = jax.nn.softmax(scores, axis=-1)
    ctx = jnp.einsum("bhqk,bhkd->bhqd", prob, v)
    ctx = ctx.transpose(0, 2, 1, 3).reshape(bs, seq_q, N_HEAD * D_HEAD)
    return ctx @ p["wo"] + p["bo"][0], prob


def _ref_ln(x, g, b, eps=EPS):
    mu = x.mean(-1, keepdims=True)
    var = ((x - mu) ** 2).mean(-1, keepdims=True)
    return (x - mu) / jnp.sqrt(var + eps) * g[0] + b[0]


def _ref_decoder_layer(params, dec, enc, m1, m2):
    a, p1 = _ref_mha(dec, dec, dec, m1, params["self_attn"])
    a = _ref_ln(dec + a, params["ln1_g"], params["ln1_b"])
    b, p2 = _ref_mha(a, enc, enc, m2, params["dec_enc_attn"])
    b = _ref_ln(a + b, params["ln2_g"], params["ln2_b"])
    h = b @ params["ffn"]["w1"] + params["ffn"]["b1"][0]
    h = 0.5 * h * (1.0 + lax.erf(h * INV_SQRT2))
    f = h @ params["ffn"]["w2"] + params["ffn"]["b2"][0]
    f = _ref_ln(b + f, params["ln3_g"], params["ln3_b"])
    return f, p1, p2


# ============================ main ============================

def _init_params(key):
    hd = N_HEAD * D_HEAD
    ks = jax.random.split(key, 10)

    def lin(k, fan_in, fan_out):
        return 0.05 * jax.random.normal(k, (fan_in, fan_out), jnp.float32)

    def mha_params(k0, k1, k2, k3):
        return {
            "wq": lin(k0, D_HIDN, hd), "bq": jnp.zeros((1, hd), jnp.float32),
            "wk": lin(k1, D_HIDN, hd), "bk": jnp.zeros((1, hd), jnp.float32),
            "wv": lin(k2, D_HIDN, hd), "bv": jnp.zeros((1, hd), jnp.float32),
            "wo": lin(k3, hd, D_HIDN), "bo": jnp.zeros((1, D_HIDN), jnp.float32),
        }

    return {
        "self_attn": mha_params(ks[0], ks[1], ks[2], ks[3]),
        "dec_enc_attn": mha_params(ks[4], ks[5], ks[6], ks[7]),
        "ffn": {
            "w1": lin(ks[8], D_HIDN, D_FF), "b1": jnp.zeros((1, D_FF), jnp.float32),
            "w2": lin(ks[9], D_FF, D_HIDN), "b2": jnp.zeros((1, D_HIDN), jnp.float32),
        },
        "ln1_g": jnp.ones((1, D_HIDN), jnp.float32), "ln1_b": jnp.zeros((1, D_HIDN), jnp.float32),
        "ln2_g": jnp.ones((1, D_HIDN), jnp.float32), "ln2_b": jnp.zeros((1, D_HIDN), jnp.float32),
        "ln3_g": jnp.ones((1, D_HIDN), jnp.float32), "ln3_b": jnp.zeros((1, D_HIDN), jnp.float32),
    }


if __name__ == "__main__":
    key = jax.random.PRNGKey(0)
    k_par, k_dec, k_enc = jax.random.split(key, 3)
    params = _init_params(k_par)

    dec_inputs = jax.random.normal(k_dec, (BS, N_DEC_SEQ, D_HIDN), jnp.float32)
    enc_outputs = jax.random.normal(k_enc, (BS, N_ENC_SEQ, D_HIDN), jnp.float32)

    # causal self-attention mask (1.0 => masked), no mask for dec-enc attention
    causal = (jnp.arange(N_DEC_SEQ)[:, None] < jnp.arange(N_DEC_SEQ)[None, :])
    self_attn_mask = jnp.broadcast_to(causal.astype(jnp.float32),
                                      (BS, N_DEC_SEQ, N_DEC_SEQ))
    dec_enc_attn_mask = jnp.zeros((BS, N_DEC_SEQ, N_ENC_SEQ), jnp.float32)

    out, sa_prob, de_prob = jax.jit(decoder_layer)(
        params, dec_inputs, enc_outputs, self_attn_mask, dec_enc_attn_mask)
    jax.block_until_ready((out, sa_prob, de_prob))

    ref_out, ref_sa, ref_de = _ref_decoder_layer(
        params, dec_inputs, enc_outputs, self_attn_mask, dec_enc_attn_mask)

    np.testing.assert_allclose(np.asarray(out), np.asarray(ref_out), atol=1e-4, rtol=1e-4)
    np.testing.assert_allclose(np.asarray(sa_prob), np.asarray(ref_sa), atol=1e-4, rtol=1e-4)
    np.testing.assert_allclose(np.asarray(de_prob), np.asarray(ref_de), atol=1e-4, rtol=1e-4)

    print("KERNEL_OK")
</pallas_src>

<mosaic_0001>
module attributes {stable_mosaic.version = 11 : i64} {
  func.func @_decoder_layer_kernel(%arg0: memref<32x32xf32, #tpu.memory_space<vmem>>, %arg1: memref<2x2x8x8xf32, #tpu.memory_space<vmem>>, %arg2: memref<168x128xf32, #tpu.memory_space<vmem>>, %arg3: memref<16x64xf32, #tpu.memory_space<vmem>>) attributes {dimension_semantics = [], scalar_prefetch = 0 : i64, scratch_operands = 0 : i64, tpu.core_type = #tpu.core_type<tc>} {
    %c0 = arith.constant 0 : index
    %c0_0 = arith.constant 0 : index
    %0 = vector.load %arg0[%c0, %c0_0] : memref<32x32xf32, #tpu.memory_space<vmem>>, vector<16x32xf32>
    %c16 = arith.constant 16 : index
    %c0_1 = arith.constant 0 : index
    %1 = vector.load %arg0[%c16, %c0_1] : memref<32x32xf32, #tpu.memory_space<vmem>>, vector<16x32xf32>
    %c0_2 = arith.constant 0 : index
    %c0_3 = arith.constant 0 : index
    %c0_4 = arith.constant 0 : index
    %c0_5 = arith.constant 0 : index
    %2 = vector.load %arg1[%c0_2, %c0_3, %c0_4, %c0_5] : memref<2x2x8x8xf32, #tpu.memory_space<vmem>>, vector<1x2x8x8xf32>
    %3 = vector.shape_cast %2 : vector<1x2x8x8xf32> to vector<2x8x8xf32>
    %c1 = arith.constant 1 : index
    %c0_6 = arith.constant 0 : index
    %c0_7 = arith.constant 0 : index
    %c0_8 = arith.constant 0 : index
    %4 = vector.load %arg1[%c1, %c0_6, %c0_7, %c0_8] : memref<2x2x8x8xf32, #tpu.memory_space<vmem>>, vector<1x2x8x8xf32>
    %5 = vector.shape_cast %4 : vector<1x2x8x8xf32> to vector<2x8x8xf32>
    %c0_9 = arith.constant 0 : index
    %c0_10 = arith.constant 0 : index
    %6 = vector.load %arg2[%c0_9, %c0_10] : memref<168x128xf32, #tpu.memory_space<vmem>>, vector<32x16xf32>
    %c0_11 = arith.constant 0 : index
    %c32 = arith.constant 32 : index
    %7 = vector.load %arg2[%c0_11, %c32] : memref<168x128xf32, #tpu.memory_space<vmem>>, vector<32x16xf32>
    %c0_12 = arith.constant 0 : index
    %c64 = arith.constant 64 : index
    %8 = vector.load %arg2[%c0_12, %c64] : memref<168x128xf32, #tpu.memory_space<vmem>>, vector<32x16xf32>
    %c0_13 = arith.constant 0 : index
    %c96 = arith.constant 96 : index
    %9 = vector.load %arg2[%c0_13, %c96] : memref<168x128xf32, #tpu.memory_space<vmem>>, vector<16x32xf32>
    %c160 = arith.constant 160 : index
    %c0_14 = arith.constant 0 : index
    %10 = vector.load %arg2[%c160, %c0_14] : memref<168x128xf32, #tpu.memory_space<vmem>>, vector<1x16xf32>
    %c160_15 = arith.constant 160 : index
    %c32_16 = arith.constant 32 : index
    %11 = vector.load %arg2[%c160_15, %c32_16] : memref<168x128xf32, #tpu.memory_space<vmem>>, vector<1x16xf32>
    %c160_17 = arith.constant 160 : index
    %c64_18 = arith.constant 64 : index
    %12 = vector.load %arg2[%c160_17, %c64_18] : memref<168x128xf32, #tpu.memory_space<vmem>>, vector<1x16xf32>
    %cst = arith.constant dense<0.000000e+00> : vector<16x16xf32>
    %13 = tpu.matmul %0, %6, %cst {dimension_numbers = #tpu.dot_dimension_numbers<[1], [0], [0], [1], [0, 0, 1, 1], [], []>} : vector<16x32xf32>, vector<32x16xf32>, vector<16x16xf32> -> vector<16x16xf32>
    %14 = vector.broadcast %10 : vector<1x16xf32> to vector<16x16xf32>
    %15 = arith.addf %13, %14 : vector<16x16xf32>
    %16 = vector.shape_cast %15 : vector<16x16xf32> to vector<2x8x16xf32>
    %cst_19 = arith.constant dense<0.000000e+00> : vector<16x16xf32>
    %17 = tpu.matmul %0, %7, %cst_19 {dimension_numbers = #tpu.dot_dimension_numbers<[1], [0], [0], [1], [0, 0, 1, 1], [], []>} : vector<16x32xf32>, vector<32x16xf32>, vector<16x16xf32> -> vector<16x16xf32>
    %18 = vector.broadcast %11 : vector<1x16xf32> to vector<16x16xf32>
    %19 = arith.addf %17, %18 : vector<16x16xf32>
    %20 = vector.shape_cast %19 : vector<16x16xf32> to vector<2x8x16xf32>
    %cst_20 = arith.constant dense<0.000000e+00> : vector<16x16xf32>
    %21 = tpu.matmul %0, %8, %cst_20 {dimension_numbers = #tpu.dot_dimension_numbers<[1], [0], [0], [1], [0, 0, 1, 1], [], []>} : vector<16x32xf32>, vector<32x16xf32>, vector<16x16xf32> -> vector<16x16xf32>
    %22 = vector.broadcast %12 : vector<1x16xf32> to vector<16x16xf32>
    %23 = arith.addf %21, %22 : vector<16x16xf32>
    %24 = vector.shape_cast %23 : vector<16x16xf32> to vector<2x8x16xf32>
    "tpu.trace_start"() <{level = 10 : i32, message = "bqd,bkd->bqk"}> : () -> ()
    %cst_21 = arith.constant dense<0.000000e+00> : vector<2x8x8xf32>
    %25 = tpu.matmul %16, %20, %cst_21 {dimension_numbers = #tpu.dot_dimension_numbers<[2], [2], [1], [1], [0, 0, 0, 1, 1, 1], [0], [0]>} : vector<2x8x16xf32>, vector<2x8x16xf32>, vector<2x8x8xf32> -> vector<2x8x8xf32>
    %cst_22 = arith.constant 0.000000e+00 : f32
    "tpu.trace_stop"() : () -> ()
    %26 = vector.broadcast %cst_22 : f32 to vector<2x8x8xf32>
    %27 = arith.cmpf ogt, %3, %26 : vector<2x8x8xf32>
    %cst_23 = arith.constant -1.000000e+09 : f32
    %28 = vector.broadcast %cst_23 : f32 to vector<2x8x8xf32>
    %29 = arith.select %27, %28, %25 : vector<2x8x8xi1>, vector<2x8x8xf32>
    %cst_24 = arith.constant dense<0xFF800000> : vector<2x8xf32>
    %30 = vector.multi_reduction <maximumf>, %29, %cst_24 [2] : vector<2x8x8xf32> to vector<2x8xf32>
    %31 = vector.shape_cast %30 : vector<2x8xf32> to vector<2x8x1xf32>
    %32 = vector.broadcast %31 : vector<2x8x1xf32> to vector<2x8x8xf32>
    %33 = arith.subf %29, %32 : vector<2x8x8xf32>
    %34 = math.exp %33 : vector<2x8x8xf32>
    %cst_25 = arith.constant dense<0.000000e+00> : vector<2x8xf32>
    %35 = vector.multi_reduction <add>, %34, %cst_25 [2] : vector<2x8x8xf32> to vector<2x8xf32>
    %36 = vector.shape_cast %35 : vector<2x8xf32> to vector<2x8x1xf32>
    %37 = vector.broadcast %36 : vector<2x8x1xf32> to vector<2x8x8xf32>
    %38 = arith.divf %34, %37 : vector<2x8x8xf32>
    "tpu.trace_start"() <{level = 10 : i32, message = "bqk,bkd->bqd"}> : () -> ()
    %cst_26 = arith.constant dense<0.000000e+00> : vector<2x8x16xf32>
    %39 = tpu.matmul %38, %24, %cst_26 {dimension_numbers = #tpu.dot_dimension_numbers<[2], [1], [1], [2], [0, 0, 0, 1, 1, 2], [0], [0]>} : vector<2x8x8xf32>, vector<2x8x16xf32>, vector<2x8x16xf32> -> vector<2x8x16xf32>
    "tpu.trace_stop"() : () -> ()
    %40 = vector.shape_cast %39 : vector<2x8x16xf32> to vector<16x16xf32>
    %cst_27 = arith.constant dense<0.000000e+00> : vector<16x32xf32>
    %41 = tpu.matmul %40, %9, %cst_27 {dimension_numbers = #tpu.dot_dimension_numbers<[1], [0], [0], [1], [0, 0, 1, 1], [], []>} : vector<16x16xf32>, vector<16x32xf32>, vector<16x32xf32> -> vector<16x32xf32>
    %42 = vector.shape_cast %38 : vector<2x8x8xf32> to vector<16x8xf32>
    %c0_28 = arith.constant 0 : index
    %c16_29 = arith.constant 16 : index
    %43 = vector.load %arg2[%c0_28, %c16_29] : memref<168x128xf32, #tpu.memory_space<vmem>>, vector<32x16xf32>
    %c0_30 = arith.constant 0 : index
    %c48 = arith.constant 48 : index
    %44 = vector.load %arg2[%c0_30, %c48] : memref<168x128xf32, #tpu.memory_space<vmem>>, vector<32x16xf32>
    %c0_31 = arith.constant 0 : index
    %c80 = arith.constant 80 : index
    %45 = vector.load %arg2[%c0_31, %c80] : memref<168x128xf32, #tpu.memory_space<vmem>>, vector<32x16xf32>
    %c16_32 = arith.constant 16 : index
    %c96_33 = arith.constant 96 : index
    %46 = vector.load %arg2[%c16_32, %c96_33] : memref<168x128xf32, #tpu.memory_space<vmem>>, vector<16x32xf32>
    %c160_34 = arith.constant 160 : index
    %c16_35 = arith.constant 16 : index
    %47 = vector.load %arg2[%c160_34, %c16_35] : memref<168x128xf32, #tpu.memory_space<vmem>>, vector<1x16xf32>
    %c160_36 = arith.constant 160 : index
    %c48_37 = arith.constant 48 : index
    %48 = vector.load %arg2[%c160_36, %c48_37] : memref<168x128xf32, #tpu.memory_space<vmem>>, vector<1x16xf32>
    %c160_38 = arith.constant 160 : index
    %c80_39 = arith.constant 80 : index
    %49 = vector.load %arg2[%c160_38, %c80_39] : memref<168x128xf32, #tpu.memory_space<vmem>>, vector<1x16xf32>
    %cst_40 = arith.constant dense<0.000000e+00> : vector<16x16xf32>
    %50 = tpu.matmul %0, %43, %cst_40 {dimension_numbers = #tpu.dot_dimension_numbers<[1], [0], [0], [1], [0, 0, 1, 1], [], []>} : vector<16x32xf32>, vector<32x16xf32>, vector<16x16xf32> -> vector<16x16xf32>
    %51 = vector.broadcast %47 : vector<1x16xf32> to vector<16x16xf32>
    %52 = arith.addf %50, %51 : vector<16x16xf32>
    %53 = vector.shape_cast %52 : vector<16x16xf32> to vector<2x8x16xf32>
    %cst_41 = arith.constant dense<0.000000e+00> : vector<16x16xf32>
    %54 = tpu.matmul %0, %44, %cst_41 {dimension_numbers = #tpu.dot_dimension_numbers<[1], [0], [0], [1], [0, 0, 1, 1], [], []>} : vector<16x32xf32>, vector<32x16xf32>, vector<16x16xf32> -> vector<16x16xf32>
    %55 = vector.broadcast %48 : vector<1x16xf32> to vector<16x16xf32>
    %56 = arith.addf %54, %55 : vector<16x16xf32>
    %57 = vector.shape_cast %56 : vector<16x16xf32> to vector<2x8x16xf32>
    %cst_42 = arith.constant dense<0.000000e+00> : vector<16x16xf32>
    %58 = tpu.matmul %0, %45, %cst_42 {dimension_numbers = #tpu.dot_dimension_numbers<[1], [0], [0], [1], [0, 0, 1, 1], [], []>} : vector<16x32xf32>, vector<32x16xf32>, vector<16x16xf32> -> vector<16x16xf32>
    %59 = vector.broadcast %49 : vector<1x16xf32> to vector<16x16xf32>
    %60 = arith.addf %58, %59 : vector<16x16xf32>
    %61 = vector.shape_cast %60 : vector<16x16xf32> to vector<2x8x16xf32>
    "tpu.trace_start"() <{level = 10 : i32, message = "bqd,bkd->bqk"}> : () -> ()
    %cst_43 = arith.constant dense<0.000000e+00> : vector<2x8x8xf32>
    %62 = tpu.matmul %53, %57, %cst_43 {dimension_numbers = #tpu.dot_dimension_numbers<[2], [2], [1], [1], [0, 0, 0, 1, 1, 1], [0], [0]>} : vector<2x8x16xf32>, vector<2x8x16xf32>, vector<2x8x8xf32> -> vector<2x8x8xf32>
    %cst_44 = arith.constant 0.000000e+00 : f32
    "tpu.trace_stop"() : () -> ()
    %63 = vector.broadcast %cst_44 : f32 to vector<2x8x8xf32>
    %64 = arith.cmpf ogt, %3, %63 : vector<2x8x8xf32>
    %cst_45 = arith.constant -1.000000e+09 : f32
    %65 = vector.broadcast %cst_45 : f32 to vector<2x8x8xf32>
    %66 = arith.select %64, %65, %62 : vector<2x8x8xi1>, vector<2x8x8xf32>
    %cst_46 = arith.constant dense<0xFF800000> : vector<2x8xf32>
    %67 = vector.multi_reduction <maximumf>, %66, %cst_46 [2] : vector<2x8x8xf32> to vector<2x8xf32>
    %68 = vector.shape_cast %67 : vector<2x8xf32> to vector<2x8x1xf32>
    %69 = vector.broadcast %68 : vector<2x8x1xf32> to vector<2x8x8xf32>
    %70 = arith.subf %66, %69 : vector<2x8x8xf32>
    %71 = math.exp %70 : vector<2x8x8xf32>
    %cst_47 = arith.constant dense<0.000000e+00> : vector<2x8xf32>
    %72 = vector.multi_reduction <add>, %71, %cst_47 [2] : vector<2x8x8xf32> to vector<2x8xf32>
    %73 = vector.shape_cast %72 : vector<2x8xf32> to vector<2x8x1xf32>
    %74 = vector.broadcast %73 : vector<2x8x1xf32> to vector<2x8x8xf32>
    %75 = arith.divf %71, %74 : vector<2x8x8xf32>
    "tpu.trace_start"() <{level = 10 : i32, message = "bqk,bkd->bqd"}> : () -> ()
    %cst_48 = arith.constant dense<0.000000e+00> : vector<2x8x16xf32>
    %76 = tpu.matmul %75, %61, %cst_48 {dimension_numbers = #tpu.dot_dimension_numbers<[2], [1], [1], [2], [0, 0, 0, 1, 1, 2], [0], [0]>} : vector<2x8x8xf32>, vector<2x8x16xf32>, vector<2x8x16xf32> -> vector<2x8x16xf32>
    "tpu.trace_stop"() : () -> ()
    %77 = vector.shape_cast %76 : vector<2x8x16xf32> to vector<16x16xf32>
    %cst_49 = arith.constant dense<0.000000e+00> : vector<16x32xf32>
    %78 = tpu.matmul %77, %46, %cst_49 {dimension_numbers = #tpu.dot_dimension_numbers<[1], [0], [0], [1], [0, 0, 1, 1], [], []>} : vector<16x16xf32>, vector<16x32xf32>, vector<16x32xf32> -> vector<16x32xf32>
    %79 = arith.addf %41, %78 : vector<16x32xf32>
    %80 = vector.shape_cast %75 : vector<2x8x8xf32> to vector<16x8xf32>
    %c160_50 = arith.constant 160 : index
    %c96_51 = arith.constant 96 : index
    %81 = vector.load %arg2[%c160_50, %c96_51] : memref<168x128xf32, #tpu.memory_space<vmem>>, vector<1x32xf32>
    %82 = vector.broadcast %81 : vector<1x32xf32> to vector<16x32xf32>
    %83 = arith.addf %79, %82 : vector<16x32xf32>
    %c163 = arith.constant 163 : index
    %c0_52 = arith.constant 0 : index
    %84 = vector.load %arg2[%c163, %c0_52] : memref<168x128xf32, #tpu.memory_space<vmem>>, vector<1x32xf32>
    %c163_53 = arith.constant 163 : index
    %c32_54 = arith.constant 32 : index
    %85 = vector.load %arg2[%c163_53, %c32_54] : memref<168x128xf32, #tpu.memory_space<vmem>>, vector<1x32xf32>
    %86 = arith.addf %0, %83 : vector<16x32xf32>
    %cst_55 = arith.constant dense<0.000000e+00> : vector<16xf32>
    %87 = vector.multi_reduction <add>, %86, %cst_55 [1] : vector<16x32xf32> to vector<16xf32>
    %88 = vector.shape_cast %87 : vector<16xf32> to vector<16x1xf32>
    %cst_56 = arith.constant 3.200000e+01 : f32
    %89 = vector.broadcast %cst_56 : f32 to vector<16x1xf32>
    %90 = arith.divf %88, %89 : vector<16x1xf32>
    %91 = vector.broadcast %90 : vector<16x1xf32> to vector<16x32xf32>
    %92 = arith.subf %86, %91 : vector<16x32xf32>
    %93 = vector.broadcast %90 : vector<16x1xf32> to vector<16x32xf32>
    %94 = arith.subf %86, %93 : vector<16x32xf32>
    %95 = arith.mulf %92, %94 : vector<16x32xf32>
    %cst_57 = arith.constant dense<0.000000e+00> : vector<16xf32>
    %96 = vector.multi_reduction <add>, %95, %cst_57 [1] : vector<16x32xf32> to vector<16xf32>
    %97 = vector.shape_cast %96 : vector<16xf32> to vector<16x1xf32>
    %cst_58 = arith.constant 3.200000e+01 : f32
    %98 = vector.broadcast %cst_58 : f32 to vector<16x1xf32>
    %99 = arith.divf %97, %98 : vector<16x1xf32>
    %100 = vector.broadcast %90 : vector<16x1xf32> to vector<16x32xf32>
    %101 = arith.subf %86, %100 : vector<16x32xf32>
    %cst_59 = arith.constant 9.99999997E-7 : f32
    %102 = vector.broadcast %cst_59 : f32 to vector<16x1xf32>
    %103 = arith.addf %99, %102 : vector<16x1xf32>
    %104 = math.rsqrt %103 : vector<16x1xf32>
    %105 = vector.broadcast %104 : vector<16x1xf32> to vector<16x32xf32>
    %106 = arith.mulf %101, %105 : vector<16x32xf32>
    %107 = vector.broadcast %84 : vector<1x32xf32> to vector<16x32xf32>
    %108 = arith.mulf %106, %107 : vector<16x32xf32>
    %109 = vector.broadcast %85 : vector<1x32xf32> to vector<16x32xf32>
    %110 = arith.addf %108, %109 : vector<16x32xf32>
    %c32_60 = arith.constant 32 : index
    %c0_61 = arith.constant 0 : index
    %111 = vector.load %arg2[%c32_60, %c0_61] : memref<168x128xf32, #tpu.memory_space<vmem>>, vector<32x16xf32>
    %c32_62 = arith.constant 32 : index
    %c32_63 = arith.constant 32 : index
    %112 = vector.load %arg2[%c32_62, %c32_63] : memref<168x128xf32, #tpu.memory_space<vmem>>, vector<32x16xf32>
    %c32_64 = arith.constant 32 : index
    %c64_65 = arith.constant 64 : index
    %113 = vector.load %arg2[%c32_64, %c64_65] : memref<168x128xf32, #tpu.memory_space<vmem>>, vector<32x16xf32>
    %c32_66 = arith.constant 32 : index
    %c96_67 = arith.constant 96 : index
    %114 = vector.load %arg2[%c32_66, %c96_67] : memref<168x128xf32, #tpu.memory_space<vmem>>, vector<16x32xf32>
    %c161 = arith.constant 161 : index
    %c0_68 = arith.constant 0 : index
    %115 = vector.load %arg2[%c161, %c0_68] : memref<168x128xf32, #tpu.memory_space<vmem>>, vector<1x16xf32>
    %c161_69 = arith.constant 161 : index
    %c32_70 = arith.constant 32 : index
    %116 = vector.load %arg2[%c161_69, %c32_70] : memref<168x128xf32, #tpu.memory_space<vmem>>, vector<1x16xf32>
    %c161_71 = arith.constant 161 : index
    %c64_72 = arith.constant 64 : index
    %117 = vector.load %arg2[%c161_71, %c64_72] : memref<168x128xf32, #tpu.memory_space<vmem>>, vector<1x16xf32>
    %cst_73 = arith.constant dense<0.000000e+00> : vector<16x16xf32>
    %118 = tpu.matmul %110, %111, %cst_73 {dimension_numbers = #tpu.dot_dimension_numbers<[1], [0], [0], [1], [0, 0, 1, 1], [], []>} : vector<16x32xf32>, vector<32x16xf32>, vector<16x16xf32> -> vector<16x16xf32>
    %119 = vector.broadcast %115 : vector<1x16xf32> to vector<16x16xf32>
    %120 = arith.addf %118, %119 : vector<16x16xf32>
    %121 = vector.shape_cast %120 : vector<16x16xf32> to vector<2x8x16xf32>
    %cst_74 = arith.constant dense<0.000000e+00> : vector<16x16xf32>
    %122 = tpu.matmul %1, %112, %cst_74 {dimension_numbers = #tpu.dot_dimension_numbers<[1], [0], [0], [1], [0, 0, 1, 1], [], []>} : vector<16x32xf32>, vector<32x16xf32>, vector<16x16xf32> -> vector<16x16xf32>
    %123 = vector.broadcast %116 : vector<1x16xf32> to vector<16x16xf32>
    %124 = arith.addf %122, %123 : vector<16x16xf32>
    %125 = vector.shape_cast %124 : vector<16x16xf32> to vector<2x8x16xf32>
    %cst_75 = arith.constant dense<0.000000e+00> : vector<16x16xf32>
    %126 = tpu.matmul %1, %113, %cst_75 {dimension_numbers = #tpu.dot_dimension_numbers<[1], [0], [0], [1], [0, 0, 1, 1], [], []>} : vector<16x32xf32>, vector<32x16xf32>, vector<16x16xf32> -> vector<16x16xf32>
    %127 = vector.broadcast %117 : vector<1x16xf32> to vector<16x16xf32>
    %128 = arith.addf %126, %127 : vector<16x16xf32>
    %129 = vector.shape_cast %128 : vector<16x16xf32> to vector<2x8x16xf32>
    "tpu.trace_start"() <{level = 10 : i32, message = "bqd,bkd->bqk"}> : () -> ()
    %cst_76 = arith.constant dense<0.000000e+00> : vector<2x8x8xf32>
    %130 = tpu.matmul %121, %125, %cst_76 {dimension_numbers = #tpu.dot_dimension_numbers<[2], [2], [1], [1], [0, 0, 0, 1, 1, 1], [0], [0]>} : vector<2x8x16xf32>, vector<2x8x16xf32>, vector<2x8x8xf32> -> vector<2x8x8xf32>
    %cst_77 = arith.constant 0.000000e+00 : f32
    "tpu.trace_stop"() : () -> ()
    %131 = vector.broadcast %cst_77 : f32 to vector<2x8x8xf32>
    %132 = arith.cmpf ogt, %5, %131 : vector<2x8x8xf32>
    %cst_78 = arith.constant -1.000000e+09 : f32
    %133 = vector.broadcast %cst_78 : f32 to vector<2x8x8xf32>
    %134 = arith.select %132, %133, %130 : vector<2x8x8xi1>, vector<2x8x8xf32>
    %cst_79 = arith.constant dense<0xFF800000> : vector<2x8xf32>
    %135 = vector.multi_reduction <maximumf>, %134, %cst_79 [2] : vector<2x8x8xf32> to vector<2x8xf32>
    %136 = vector.shape_cast %135 : vector<2x8xf32> to vector<2x8x1xf32>
    %137 = vector.broadcast %136 : vector<2x8x1xf32> to vector<2x8x8xf32>
    %138 = arith.subf %134, %137 : vector<2x8x8xf32>
    %139 = math.exp %138 : vector<2x8x8xf32>
    %cst_80 = arith.constant dense<0.000000e+00> : vector<2x8xf32>
    %140 = vector.multi_reduction <add>, %139, %cst_80 [2] : vector<2x8x8xf32> to vector<2x8xf32>
    %141 = vector.shape_cast %140 : vector<2x8xf32> to vector<2x8x1xf32>
    %142 = vector.broadcast %141 : vector<2x8x1xf32> to vector<2x8x8xf32>
    %143 = arith.divf %139, %142 : vector<2x8x8xf32>
    "tpu.trace_start"() <{level = 10 : i32, message = "bqk,bkd->bqd"}> : () -> ()
    %cst_81 = arith.constant dense<0.000000e+00> : vector<2x8x16xf32>
    %144 = tpu.matmul %143, %129, %cst_81 {dimension_numbers = #tpu.dot_dimension_numbers<[2], [1], [1], [2], [0, 0, 0, 1, 1, 2], [0], [0]>} : vector<2x8x8xf32>, vector<2x8x16xf32>, vector<2x8x16xf32> -> vector<2x8x16xf32>
    "tpu.trace_stop"() : () -> ()
    %145 = vector.shape_cast %144 : vector<2x8x16xf32> to vector<16x16xf32>
    %cst_82 = arith.constant dense<0.000000e+00> : vector<16x32xf32>
    %146 = tpu.matmul %145, %114, %cst_82 {dimension_numbers = #tpu.dot_dimension_numbers<[1], [0], [0], [1], [0, 0, 1, 1], [], []>} : vector<16x16xf32>, vector<16x32xf32>, vector<16x32xf32> -> vector<16x32xf32>
    %147 = vector.shape_cast %143 : vector<2x8x8xf32> to vector<16x8xf32>
    %c32_83 = arith.constant 32 : index
    %c16_84 = arith.constant 16 : index
    %148 = vector.load %arg2[%c32_83, %c16_84] : memref<168x128xf32, #tpu.memory_space<vmem>>, vector<32x16xf32>
    %c32_85 = arith.constant 32 : index
    %c48_86 = arith.constant 48 : index
    %149 = vector.load %arg2[%c32_85, %c48_86] : memref<168x128xf32, #tpu.memory_space<vmem>>, vector<32x16xf32>
    %c32_87 = arith.constant 32 : index
    %c80_88 = arith.constant 80 : index
    %150 = vector.load %arg2[%c32_87, %c80_88] : memref<168x128xf32, #tpu.memory_space<vmem>>, vector<32x16xf32>
    %c48_89 = arith.constant 48 : index
    %c96_90 = arith.constant 96 : index
    %151 = vector.load %arg2[%c48_89, %c96_90] : memref<168x128xf32, #tpu.memory_space<vmem>>, vector<16x32xf32>
    %c161_91 = arith.constant 161 : index
    %c16_92 = arith.constant 16 : index
    %152 = vector.load %arg2[%c161_91, %c16_92] : memref<168x128xf32, #tpu.memory_space<vmem>>, vector<1x16xf32>
    %c161_93 = arith.constant 161 : index
    %c48_94 = arith.constant 48 : index
    %153 = vector.load %arg2[%c161_93, %c48_94] : memref<168x128xf32, #tpu.memory_space<vmem>>, vector<1x16xf32>
    %c161_95 = arith.constant 161 : index
    %c80_96 = arith.constant 80 : index
    %154 = vector.load %arg2[%c161_95, %c80_96] : memref<168x128xf32, #tpu.memory_space<vmem>>, vector<1x16xf32>
    %cst_97 = arith.constant dense<0.000000e+00> : vector<16x16xf32>
    %155 = tpu.matmul %110, %148, %cst_97 {dimension_numbers = #tpu.dot_dimension_numbers<[1], [0], [0], [1], [0, 0, 1, 1], [], []>} : vector<16x32xf32>, vector<32x16xf32>, vector<16x16xf32> -> vector<16x16xf32>
    %156 = vector.broadcast %152 : vector<1x16xf32> to vector<16x16xf32>
    %157 = arith.addf %155, %156 : vector<16x16xf32>
    %158 = vector.shape_cast %157 : vector<16x16xf32> to vector<2x8x16xf32>
    %cst_98 = arith.constant dense<0.000000e+00> : vector<16x16xf32>
    %159 = tpu.matmul %1, %149, %cst_98 {dimension_numbers = #tpu.dot_dimension_numbers<[1], [0], [0], [1], [0, 0, 1, 1], [], []>} : vector<16x32xf32>, vector<32x16xf32>, vector<16x16xf32> -> vector<16x16xf32>
    %160 = vector.broadcast %153 : vector<1x16xf32> to vector<16x16xf32>
    %161 = arith.addf %159, %160 : vector<16x16xf32>
    %162 = vector.shape_cast %161 : vector<16x16xf32> to vector<2x8x16xf32>
    %cst_99 = arith.constant dense<0.000000e+00> : vector<16x16xf32>
    %163 = tpu.matmul %1, %150, %cst_99 {dimension_numbers = #tpu.dot_dimension_numbers<[1], [0], [0], [1], [0, 0, 1, 1], [], []>} : vector<16x32xf32>, vector<32x16xf32>, vector<16x16xf32> -> vector<16x16xf32>
    %164 = vector.broadcast %154 : vector<1x16xf32> to vector<16x16xf32>
    %165 = arith.addf %163, %164 : vector<16x16xf32>
    %166 = vector.shape_cast %165 : vector<16x16xf32> to vector<2x8x16xf32>
    "tpu.trace_start"() <{level = 10 : i32, message = "bqd,bkd->bqk"}> : () -> ()
    %cst_100 = arith.constant dense<0.000000e+00> : vector<2x8x8xf32>
    %167 = tpu.matmul %158, %162, %cst_100 {dimension_numbers = #tpu.dot_dimension_numbers<[2], [2], [1], [1], [0, 0, 0, 1, 1, 1], [0], [0]>} : vector<2x8x16xf32>, vector<2x8x16xf32>, vector<2x8x8xf32> -> vector<2x8x8xf32>
    %cst_101 = arith.constant 0.000000e+00 : f32
    "tpu.trace_stop"() : () -> ()
    %168 = vector.broadcast %cst_101 : f32 to vector<2x8x8xf32>
    %169 = arith.cmpf ogt, %5, %168 : vector<2x8x8xf32>
    %cst_102 = arith.constant -1.000000e+09 : f32
    %170 = vector.broadcast %cst_102 : f32 to vector<2x8x8xf32>
    %171 = arith.select %169, %170, %167 : vector<2x8x8xi1>, vector<2x8x8xf32>
    %cst_103 = arith.constant dense<0xFF800000> : vector<2x8xf32>
    %172 = vector.multi_reduction <maximumf>, %171, %cst_103 [2] : vector<2x8x8xf32> to vector<2x8xf32>
    %173 = vector.shape_cast %172 : vector<2x8xf32> to vector<2x8x1xf32>
    %174 = vector.broadcast %173 : vector<2x8x1xf32> to vector<2x8x8xf32>
    %175 = arith.subf %171, %174 : vector<2x8x8xf32>
    %176 = math.exp %175 : vector<2x8x8xf32>
    %cst_104 = arith.constant dense<0.000000e+00> : vector<2x8xf32>
    %177 = vector.multi_reduction <add>, %176, %cst_104 [2] : vector<2x8x8xf32> to vector<2x8xf32>
    %178 = vector.shape_cast %177 : vector<2x8xf32> to vector<2x8x1xf32>
    %179 = vector.broadcast %178 : vector<2x8x1xf32> to vector<2x8x8xf32>
    %180 = arith.divf %176, %179 : vector<2x8x8xf32>
    "tpu.trace_start"() <{level = 10 : i32, message = "bqk,bkd->bqd"}> : () -> ()
    %cst_105 = arith.constant dense<0.000000e+00> : vector<2x8x16xf32>
    %181 = tpu.matmul %180, %166, %cst_105 {dimension_numbers = #tpu.dot_dimension_numbers<[2], [1], [1], [2], [0, 0, 0, 1, 1, 2], [0], [0]>} : vector<2x8x8xf32>, vector<2x8x16xf32>, vector<2x8x16xf32> -> vector<2x8x16xf32>
    "tpu.trace_stop"() : () -> ()
    %182 = vector.shape_cast %181 : vector<2x8x16xf32> to vector<16x16xf32>
    %cst_106 = arith.constant dense<0.000000e+00> : vector<16x32xf32>
    %183 = tpu.matmul %182, %151, %cst_106 {dimension_numbers = #tpu.dot_dimension_numbers<[1], [0], [0], [1], [0, 0, 1, 1], [], []>} : vector<16x16xf32>, vector<16x32xf32>, vector<16x32xf32> -> vector<16x32xf32>
    %184 = arith.addf %146, %183 : vector<16x32xf32>
    %185 = vector.shape_cast %180 : vector<2x8x8xf32> to vector<16x8xf32>
    %c161_107 = arith.constant 161 : index
    %c96_108 = arith.constant 96 : index
    %186 = vector.load %arg2[%c161_107, %c96_108] : memref<168x128xf32, #tpu.memory_space<vmem>>, vector<1x32xf32>
    %187 = vector.broadcast %186 : vector<1x32xf32> to vector<16x32xf32>
    %188 = arith.addf %184, %187 : vector<16x32xf32>
    %c163_109 = arith.constant 163 : index
    %c64_110 = arith.constant 64 : index
    %189 = vector.load %arg2[%c163_109, %c64_110] : memref<168x128xf32, #tpu.memory_space<vmem>>, vector<1x32xf32>
    %c163_111 = arith.constant 163 : index
    %c96_112 = arith.constant 96 : index
    %190 = vector.load %arg2[%c163_111, %c96_112] : memref<168x128xf32, #tpu.memory_space<vmem>>, vector<1x32xf32>
    %191 = arith.addf %110, %188 : vector<16x32xf32>
    %cst_113 = arith.constant dense<0.000000e+00> : vector<16xf32>
    %192 = vector.multi_reduction <add>, %191, %cst_113 [1] : vector<16x32xf32> to vector<16xf32>
    %193 = vector.shape_cast %192 : vector<16xf32> to vector<16x1xf32>
    %cst_114 = arith.constant 3.200000e+01 : f32
    %194 = vector.broadcast %cst_114 : f32 to vector<16x1xf32>
    %195 = arith.divf %193, %194 : vector<16x1xf32>
    %196 = vector.broadcast %195 : vector<16x1xf32> to vector<16x32xf32>
    %197 = arith.subf %191, %196 : vector<16x32xf32>
    %198 = vector.broadcast %195 : vector<16x1xf32> to vector<16x32xf32>
    %199 = arith.subf %191, %198 : vector<16x32xf32>
    %200 = arith.mulf %197, %199 : vector<16x32xf32>
    %cst_115 = arith.constant dense<0.000000e+00> : vector<16xf32>
    %201 = vector.multi_reduction <add>, %200, %cst_115 [1] : vector<16x32xf32> to vector<16xf32>
    %202 = vector.shape_cast %201 : vector<16xf32> to vector<16x1xf32>
    %cst_116 = arith.constant 3.200000e+01 : f32
    %203 = vector.broadcast %cst_116 : f32 to vector<16x1xf32>
    %204 = arith.divf %202, %203 : vector<16x1xf32>
    %205 = vector.broadcast %195 : vector<16x1xf32> to vector<16x32xf32>
    %206 = arith.subf %191, %205 : vector<16x32xf32>
    %cst_117 = arith.constant 9.99999997E-7 : f32
    %207 = vector.broadcast %cst_117 : f32 to vector<16x1xf32>
    %208 = arith.addf %204, %207 : vector<16x1xf32>
    %209 = math.rsqrt %208 : vector<16x1xf32>
    %210 = vector.broadcast %209 : vector<16x1xf32> to vector<16x32xf32>
    %211 = arith.mulf %206, %210 : vector<16x32xf32>
    %212 = vector.broadcast %189 : vector<1x32xf32> to vector<16x32xf32>
    %213 = arith.mulf %211, %212 : vector<16x32xf32>
    %214 = vector.broadcast %190 : vector<1x32xf32> to vector<16x32xf32>
    %215 = arith.addf %213, %214 : vector<16x32xf32>
    %c64_118 = arith.constant 64 : index
    %c0_119 = arith.constant 0 : index
    %216 = vector.load %arg2[%c64_118, %c0_119] : memref<168x128xf32, #tpu.memory_space<vmem>>, vector<32x64xf32>
    %c162 = arith.constant 162 : index
    %c0_120 = arith.constant 0 : index
    %217 = vector.load %arg2[%c162, %c0_120] : memref<168x128xf32, #tpu.memory_space<vmem>>, vector<1x64xf32>
    %c96_121 = arith.constant 96 : index
    %c0_122 = arith.constant 0 : index
    %218 = vector.load %arg2[%c96_121, %c0_122] : memref<168x128xf32, #tpu.memory_space<vmem>>, vector<64x32xf32>
    %c162_123 = arith.constant 162 : index
    %c64_124 = arith.constant 64 : index
    %219 = vector.load %arg2[%c162_123, %c64_124] : memref<168x128xf32, #tpu.memory_space<vmem>>, vector<1x32xf32>
    %cst_125 = arith.constant dense<0.000000e+00> : vector<16x64xf32>
    %220 = tpu.matmul %215, %216, %cst_125 {dimension_numbers = #tpu.dot_dimension_numbers<[1], [0], [0], [1], [0, 0, 1, 1], [], []>} : vector<16x32xf32>, vector<32x64xf32>, vector<16x64xf32> -> vector<16x64xf32>
    %221 = vector.broadcast %217 : vector<1x64xf32> to vector<16x64xf32>
    %222 = arith.addf %220, %221 : vector<16x64xf32>
    %cst_126 = arith.constant 5.000000e-01 : f32
    %223 = vector.broadcast %cst_126 : f32 to vector<16x64xf32>
    %224 = arith.mulf %223, %222 : vector<16x64xf32>
    %cst_127 = arith.constant 0.707106769 : f32
    %225 = vector.broadcast %cst_127 : f32 to vector<16x64xf32>
    %226 = arith.mulf %222, %225 : vector<16x64xf32>
    %227 = math.erf %226 : vector<16x64xf32>
    %cst_128 = arith.constant 1.000000e+00 : f32
    %228 = vector.broadcast %cst_128 : f32 to vector<16x64xf32>
    %229 = arith.addf %228, %227 : vector<16x64xf32>
    %230 = arith.mulf %224, %229 : vector<16x64xf32>
    %cst_129 = arith.constant dense<0.000000e+00> : vector<16x32xf32>
    %231 = tpu.matmul %230, %218, %cst_129 {dimension_numbers = #tpu.dot_dimension_numbers<[1], [0], [0], [1], [0, 0, 1, 1], [], []>} : vector<16x64xf32>, vector<64x32xf32>, vector<16x32xf32> -> vector<16x32xf32>
    %232 = vector.broadcast %219 : vector<1x32xf32> to vector<16x32xf32>
    %233 = arith.addf %231, %232 : vector<16x32xf32>
    %c164 = arith.constant 164 : index
    %c0_130 = arith.constant 0 : index
    %234 = vector.load %arg2[%c164, %c0_130] : memref<168x128xf32, #tpu.memory_space<vmem>>, vector<1x32xf32>
    %c164_131 = arith.constant 164 : index
    %c32_132 = arith.constant 32 : index
    %235 = vector.load %arg2[%c164_131, %c32_132] : memref<168x128xf32, #tpu.memory_space<vmem>>, vector<1x32xf32>
    %236 = arith.addf %215, %233 : vector<16x32xf32>
    %cst_133 = arith.constant dense<0.000000e+00> : vector<16xf32>
    %237 = vector.multi_reduction <add>, %236, %cst_133 [1] : vector<16x32xf32> to vector<16xf32>
    %238 = vector.shape_cast %237 : vector<16xf32> to vector<16x1xf32>
    %cst_134 = arith.constant 3.200000e+01 : f32
    %239 = vector.broadcast %cst_134 : f32 to vector<16x1xf32>
    %240 = arith.divf %238, %239 : vector<16x1xf32>
    %241 = vector.broadcast %240 : vector<16x1xf32> to vector<16x32xf32>
    %242 = arith.subf %236, %241 : vector<16x32xf32>
    %243 = vector.broadcast %240 : vector<16x1xf32> to vector<16x32xf32>
    %244 = arith.subf %236, %243 : vector<16x32xf32>
    %245 = arith.mulf %242, %244 : vector<16x32xf32>
    %cst_135 = arith.constant dense<0.000000e+00> : vector<16xf32>
    %246 = vector.multi_reduction <add>, %245, %cst_135 [1] : vector<16x32xf32> to vector<16xf32>
    %247 = vector.shape_cast %246 : vector<16xf32> to vector<16x1xf32>
    %cst_136 = arith.constant 3.200000e+01 : f32
    %248 = vector.broadcast %cst_136 : f32 to vector<16x1xf32>
    %249 = arith.divf %247, %248 : vector<16x1xf32>
    %250 = vector.broadcast %240 : vector<16x1xf32> to vector<16x32xf32>
    %251 = arith.subf %236, %250 : vector<16x32xf32>
    %cst_137 = arith.constant 9.99999997E-7 : f32
    %252 = vector.broadcast %cst_137 : f32 to vector<16x1xf32>
    %253 = arith.addf %249, %252 : vector<16x1xf32>
    %254 = math.rsqrt %253 : vector<16x1xf32>
    %255 = vector.broadcast %254 : vector<16x1xf32> to vector<16x32xf32>
    %256 = arith.mulf %251, %255 : vector<16x32xf32>
    %257 = vector.broadcast %234 : vector<1x32xf32> to vector<16x32xf32>
    %258 = arith.mulf %256, %257 : vector<16x32xf32>
    %259 = vector.broadcast %235 : vector<1x32xf32> to vector<16x32xf32>
    %260 = arith.addf %258, %259 : vector<16x32xf32>
    %261 = tpu.concatenate %260, %42, %80, %147, %185 in 1 : vector<16x32xf32>, vector<16x8xf32>, vector<16x8xf32>, vector<16x8xf32>, vector<16x8xf32> -> vector<16x64xf32>
    %c0_138 = arith.constant 0 : index
    %c0_139 = arith.constant 0 : index
    %262 = vector.load %arg3[%c0_138, %c0_139] : memref<16x64xf32, #tpu.memory_space<vmem>>, vector<16x64xf32>
    tpu.vector_store %arg3[%c0_138, %c0_139], %261 {strides = array<i32>} : memref<16x64xf32, #tpu.memory_space<vmem>>, vector<16x64xf32>,
    return
  }
}

</mosaic_0001>

<llo_original>
// kernel: decoder_layer.1
$region0: #{decoder_layer.1}
  #allocation0 [shape = 'u32[]', space=smem, size = 0x4, offset = 0x4, fixed_abs, tag = 'smem constant byte address 0x4 - core index']
  #allocation1 [shape = 'u32[144,128]{1,0:T(1,128)}', space=vmem, size = 0x12000, scoped, tag = 'internal scratch']
  %s0 = inlined_call_operand.vmem [shape: f32[32,32], index: 0, kind: input, shape index: {}]
  %s1 = inlined_call_operand.vmem [shape: f32[2,2,8,8], index: 1, kind: input, shape index: {}]
  %s2 = inlined_call_operand.vmem [shape: f32[168,128], index: 2, kind: input, shape index: {}]
  %s3 = inlined_call_operand.vmem [shape: f32[16,64], index: 3, kind: output, shape index: {}]
  %s4 = sld [smem:[#allocation0]]
  $region22: #{decoder_layer.1} parent=0
    _
  %s6 = ssub.s32 1, %s4
  %s7 = scalar_select 0, %s6, %s4
  // Predicated region
  $region2: #{decoder_layer.1} parent=0 // pred_check
    _
  $region3: #{decoder_layer.1} parent=0 // pred_check_branch
    %9 = sbr.rel (0) target = $region5
  $region4: #{decoder_layer.1} parent=0 // pred_region
    _
  $region5: #{decoder_layer.1} parent=0 // pred_fallthru
    _
  // Predicated region
  $region6: #{decoder_layer.1} parent=0 // pred_check
    _
  $region7: #{decoder_layer.1} parent=0 // pred_check_branch
    %11 = sbr.rel (0) target = $region9
  $region8: #{decoder_layer.1} parent=0 // pred_region
    _
  $region9: #{decoder_layer.1} parent=0 // pred_fallthru
    _
  // Predicated region
  $region10: #{decoder_layer.1} parent=0 // pred_check
    _
  $region11: #{decoder_layer.1} parent=0 // pred_check_branch
    %13 = sbr.rel (0) target = $region13
  $region12: #{decoder_layer.1} parent=0 // pred_region
    _
  $region13: #{decoder_layer.1} parent=0 // pred_fallthru
    _
  %v14 = vld [vmem:[%s0] sm:$0xff]
  %v15 = vld [vmem:[%s0 + $0x8] sm:$0xff]
  %v16 = vld [vmem:[%s0 + $0x10] sm:$0xff]
  %v17 = vld [vmem:[%s0 + $0x18] sm:$0xff]
  %v18 = vld [vmem:[%s1] sm:$0xff]
  %v19 = vld [vmem:[%s1 + $0x8] sm:$0xff]
  %s20 = scalar_lea.vmem %s1, 16
  %v21 = vld [vmem:[%s20] sm:$0xff]
  %v22 = vld [vmem:[%s20 + $0x8] sm:$0xff]
  %v23 = vld [vmem:[%s2] sm:$0xff]
  %v24 = vld [vmem:[%s2 + $0x8] sm:$0xff]
  %v25 = vld [vmem:[%s2 + $0x10] sm:$0xff]
  %v26 = vld [vmem:[%s2 + $0x18] sm:$0xff]
  %v27 = vld [vmem:[%s2 + $0xa0] sm:$0x1]
  %v28 = vlaneseq
  %v29 = vshrl.u32 %v28, 7
  %v30 = vsub.s32 0, %v29
  %v31 = vrot.slane %v27, %v30
  %vm32 = vcmask 261120
  %v34 = vsel %vm32, %v14, 0
  %v37 = vsel %vm32, %v15, 0
  %39 = vmatprep.subr.mxu0 0.0
  %40 = vmatpush1.msra.mxu0 %v23
  %41 = vmatprep.subr.mxu0 0.0
  %42 = vmatpush1.msra.mxu0 %v24
  %43 = vmatprep.subr.mxu0 0.0
  %44 = vmatpush1.msra.mxu0 %v25
  %45 = vmatprep.subr.mxu0 0.0
  %46 = vmatpush1.msra.mxu0 %v26
  %47 = vmatprep.subr.mxu0 0.0
  %48 = vmatpush1.msra.mxu0 0.0
  %49 = vmatprep.subr.mxu0 0.0
  %50 = vmatpush1.msra.mxu0 0.0
  %51 = vmatprep.subr.mxu0 0.0
  %52 = vmatpush1.msra.mxu0 0.0
  %53 = vmatprep.subr.mxu0 0.0
  %54 = vmatpush1.msra.mxu0 0.0
  %55 = vmatprep.subr.mxu0 0.0
  %56 = vmatpush1.msra.mxu0 0.0
  %57 = vmatprep.subr.mxu0 0.0
  %58 = vmatpush1.msra.mxu0 0.0
  %59 = vmatprep.subr.mxu0 0.0
  %60 = vmatpush1.msra.mxu0 0.0
  %61 = vmatprep.subr.mxu0 0.0
  %62 = vmatpush1.msra.mxu0 0.0
  %63 = vmatprep.subr.mxu0 0.0
  %64 = vmatpush1.msra.mxu0 0.0
  %65 = vmatprep.subr.mxu0 0.0
  %66 = vmatpush1.msra.mxu0 0.0
  %67 = vmatprep.subr.mxu0 0.0
  %68 = vmatpush1.msra.mxu0 0.0
  %69 = vmatprep.subr.mxu0 0.0
  %70 = vmatpush1.msra.mxu0 0.0
  %71 = vmatprep.subr.mxu0 0.0
  %72 = vmatpush1.msra.mxu0 0.0
  %73 = vmatprep.subr.mxu0 0.0
  %74 = vmatpush1.msra.mxu0 0.0
  %75 = vmatprep.subr.mxu0 0.0
  %76 = vmatpush1.msra.mxu0 0.0
  %77 = vmatprep.subr.mxu0 0.0
  %78 = vmatpush1.msra.mxu0 0.0
  %79 = vmatprep.subr.mxu0 0.0
  %80 = vmatpush1.msra.mxu0 0.0
  %81 = vmatprep.subr.mxu0 0.0
  %82 = vmatpush1.msra.mxu0 0.0
  %83 = vmatprep.subr.mxu0 0.0
  %84 = vmatpush1.msra.mxu0 0.0
  %85 = vmatprep.subr.mxu0 0.0
  %86 = vmatpush1.msra.mxu0 0.0
  %87 = vmatprep.subr.mxu0 0.0
  %88 = vmatpush1.msra.mxu0 0.0
  %89 = vmatprep.subr.mxu0 0.0
  %90 = vmatpush1.msra.mxu0 0.0
  %91 = vmatprep.subr.mxu0 0.0
  %92 = vmatpush1.msra.mxu0 0.0
  %93 = vmatprep.subr.mxu0 0.0
  %94 = vmatpush1.msra.mxu0 0.0
  %95 = vmatprep.subr.mxu0 0.0
  %96 = vmatpush1.msra.mxu0 0.0
  %97 = vmatprep.subr.mxu0 0.0
  %98 = vmatpush1.msra.mxu0 0.0
  %99 = vmatprep.subr.mxu0 0.0
  %100 = vmatpush1.msra.mxu0 0.0
  %101 = vmatprep.subr.mxu0 0.0
  %102 = vmatpush1.msra.mxu0 0.0
  %103 = vmatprep.mubr.f32.mxu0 0.0
  %104 = vmatmul.mubr.f32.gmra.mrb[0].mxu0 %v34
  %v105 = vpop.f32.mrb[0].mxu0
  %v106 = vadd.f32 %v31, %v105
  %v107 = vpop.f32.mrb[0].mxu0
  %108 = vmatprep.mubr.f32.mxu0 0.0
  %109 = vmatmul.mubr.f32.gmra.mrb[0].mxu0 %v37
  %v110 = vpop.f32.mrb[0].mxu0
  %v111 = vadd.f32 %v31, %v110
  %v112 = vpop.f32.mrb[0].mxu0
  %113 = vdwg.mxu0
  %118 = vrot.lane.b32.xlu0 %v23, 96
  %v119 = vpop.permute.xlu0 %118
  %120 = vrot.lane.b32.xlu0 %v24, 96
  %v121 = vpop.permute.xlu0 %120
  %122 = vrot.lane.b32.xlu0 %v25, 96
  %v123 = vpop.permute.xlu0 %122
  %124 = vrot.lane.b32.xlu0 %v26, 96
  %v125 = vpop.permute.xlu0 %124
  %131 = vrot.lane.b32.xlu0 %v31, 96
  %v132 = vpop.permute.xlu0 %131
  %134 = vmatprep.subr.mxu0 0.0
  %135 = vmatpush1.msra.mxu0 %v119
  %136 = vmatprep.subr.mxu0 0.0
  %137 = vmatpush1.msra.mxu0 %v121
  %138 = vmatprep.subr.mxu0 0.0
  %139 = vmatpush1.msra.mxu0 %v123
  %140 = vmatprep.subr.mxu0 0.0
  %141 = vmatpush1.msra.mxu0 %v125
  %142 = vmatprep.subr.mxu0 0.0
  %143 = vmatpush1.msra.mxu0 0.0
  %144 = vmatprep.subr.mxu0 0.0
  %145 = vmatpush1.msra.mxu0 0.0
  %146 = vmatprep.subr.mxu0 0.0
  %147 = vmatpush1.msra.mxu0 0.0
  %148 = vmatprep.subr.mxu0 0.0
  %149 = vmatpush1.msra.mxu0 0.0
  %150 = vmatprep.subr.mxu0 0.0
  %151 = vmatpush1.msra.mxu0 0.0
  %152 = vmatprep.subr.mxu0 0.0
  %153 = vmatpush1.msra.mxu0 0.0
  %154 = vmatprep.subr.mxu0 0.0
  %155 = vmatpush1.msra.mxu0 0.0
  %156 = vmatprep.subr.mxu0 0.0
  %157 = vmatpush1.msra.mxu0 0.0
  %158 = vmatprep.subr.mxu0 0.0
  %159 = vmatpush1.msra.mxu0 0.0
  %160 = vmatprep.subr.mxu0 0.0
  %161 = vmatpush1.msra.mxu0 0.0
  %162 = vmatprep.subr.mxu0 0.0
  %163 = vmatpush1.msra.mxu0 0.0
  %164 = vmatprep.subr.mxu0 0.0
  %165 = vmatpush1.msra.mxu0 0.0
  %166 = vmatprep.subr.mxu0 0.0
  %167 = vmatpush1.msra.mxu0 0.0
  %168 = vmatprep.subr.mxu0 0.0
  %169 = vmatpush1.msra.mxu0 0.0
  %170 = vmatprep.subr.mxu0 0.0
  %171 = vmatpush1.msra.mxu0 0.0
  %172 = vmatprep.subr.mxu0 0.0
  %173 = vmatpush1.msra.mxu0 0.0
  %174 = vmatprep.subr.mxu0 0.0
  %175 = vmatpush1.msra.mxu0 0.0
  %176 = vmatprep.subr.mxu0 0.0
  %177 = vmatpush1.msra.mxu0 0.0
  %178 = vmatprep.subr.mxu0 0.0
  %179 = vmatpush1.msra.mxu0 0.0
  %180 = vmatprep.subr.mxu0 0.0
  %181 = vmatpush1.msra.mxu0 0.0
  %182 = vmatprep.subr.mxu0 0.0
  %183 = vmatpush1.msra.mxu0 0.0
  %184 = vmatprep.subr.mxu0 0.0
  %185 = vmatpush1.msra.mxu0 0.0
  %186 = vmatprep.subr.mxu0 0.0
  %187 = vmatpush1.msra.mxu0 0.0
  %188 = vmatprep.subr.mxu0 0.0
  %189 = vmatpush1.msra.mxu0 0.0
  %190 = vmatprep.subr.mxu0 0.0
  %191 = vmatpush1.msra.mxu0 0.0
  %192 = vmatprep.subr.mxu0 0.0
  %193 = vmatpush1.msra.mxu0 0.0
  %194 = vmatprep.subr.mxu0 0.0
  %195 = vmatpush1.msra.mxu0 0.0
  %196 = vmatprep.subr.mxu0 0.0
  %197 = vmatpush1.msra.mxu0 0.0
  %198 = vmatprep.mubr.f32.mxu0 0.0
  %199 = vmatmul.mubr.f32.gmra.mrb[0].mxu0 %v34
  %v200 = vpop.f32.mrb[0].mxu0
  %v201 = vadd.f32 %v132, %v200
  %v202 = vpop.f32.mrb[0].mxu0
  %203 = vmatprep.mubr.f32.mxu0 0.0
  %204 = vmatmul.mubr.f32.gmra.mrb[0].mxu0 %v37
  %v205 = vpop.f32.mrb[0].mxu0
  %v206 = vadd.f32 %v132, %v205
  %v207 = vpop.f32.mrb[0].mxu0
  %208 = vdwg.mxu0
  %209 = vrot.lane.b32.xlu0 %v23, 64
  %v210 = vpop.permute.xlu0 %209
  %211 = vrot.lane.b32.xlu0 %v24, 64
  %v212 = vpop.permute.xlu0 %211
  %213 = vrot.lane.b32.xlu0 %v25, 64
  %v214 = vpop.permute.xlu0 %213
  %215 = vrot.lane.b32.xlu0 %v26, 64
  %v216 = vpop.permute.xlu0 %215
  %221 = vrot.lane.b32.xlu0 %v31, 64
  %v222 = vpop.permute.xlu0 %221
  %224 = vmatprep.subr.mxu0 0.0
  %225 = vmatpush1.msra.mxu0 %v210
  %226 = vmatprep.subr.mxu0 0.0
  %227 = vmatpush1.msra.mxu0 %v212
  %228 = vmatprep.subr.mxu0 0.0
  %229 = vmatpush1.msra.mxu0 %v214
  %230 = vmatprep.subr.mxu0 0.0
  %231 = vmatpush1.msra.mxu0 %v216
  %232 = vmatprep.subr.mxu0 0.0
  %233 = vmatpush1.msra.mxu0 0.0
  %234 = vmatprep.subr.mxu0 0.0
  %235 = vmatpush1.msra.mxu0 0.0
  %236 = vmatprep.subr.mxu0 0.0
  %237 = vmatpush1.msra.mxu0 0.0
  %238 = vmatprep.subr.mxu0 0.0
  %239 = vmatpush1.msra.mxu0 0.0
  %240 = vmatprep.subr.mxu0 0.0
  %241 = vmatpush1.msra.mxu0 0.0
  %242 = vmatprep.subr.mxu0 0.0
  %243 = vmatpush1.msra.mxu0 0.0
  %244 = vmatprep.subr.mxu0 0.0
  %245 = vmatpush1.msra.mxu0 0.0
  %246 = vmatprep.subr.mxu0 0.0
  %247 = vmatpush1.msra.mxu0 0.0
  %248 = vmatprep.subr.mxu0 0.0
  %249 = vmatpush1.msra.mxu0 0.0
  %250 = vmatprep.subr.mxu0 0.0
  %251 = vmatpush1.msra.mxu0 0.0
  %252 = vmatprep.subr.mxu0 0.0
  %253 = vmatpush1.msra.mxu0 0.0
  %254 = vmatprep.subr.mxu0 0.0
  %255 = vmatpush1.msra.mxu0 0.0
  %256 = vmatprep.subr.mxu0 0.0
  %257 = vmatpush1.msra.mxu0 0.0
  %258 = vmatprep.subr.mxu0 0.0
  %259 = vmatpush1.msra.mxu0 0.0
  %260 = vmatprep.subr.mxu0 0.0
  %261 = vmatpush1.msra.mxu0 0.0
  %262 = vmatprep.subr.mxu0 0.0
  %263 = vmatpush1.msra.mxu0 0.0
  %264 = vmatprep.subr.mxu0 0.0
  %265 = vmatpush1.msra.mxu0 0.0
  %266 = vmatprep.subr.mxu0 0.0
  %267 = vmatpush1.msra.mxu0 0.0
  %268 = vmatprep.subr.mxu0 0.0
  %269 = vmatpush1.msra.mxu0 0.0
  %270 = vmatprep.subr.mxu0 0.0
  %271 = vmatpush1.msra.mxu0 0.0
  %272 = vmatprep.subr.mxu0 0.0
  %273 = vmatpush1.msra.mxu0 0.0
  %274 = vmatprep.subr.mxu0 0.0
  %275 = vmatpush1.msra.mxu0 0.0
  %276 = vmatprep.subr.mxu0 0.0
  %277 = vmatpush1.msra.mxu0 0.0
  %278 = vmatprep.subr.mxu0 0.0
  %279 = vmatpush1.msra.mxu0 0.0
  %280 = vmatprep.subr.mxu0 0.0
  %281 = vmatpush1.msra.mxu0 0.0
  %282 = vmatprep.subr.mxu0 0.0
  %283 = vmatpush1.msra.mxu0 0.0
  %284 = vmatprep.subr.mxu0 0.0
  %285 = vmatpush1.msra.mxu0 0.0
  %286 = vmatprep.subr.mxu0 0.0
  %287 = vmatpush1.msra.mxu0 0.0
  %288 = vmatprep.mubr.f32.mxu0 0.0
  %289 = vmatmul.mubr.f32.gmra.mrb[0].mxu0 %v34
  %v290 = vpop.f32.mrb[0].mxu0
  %v291 = vadd.f32 %v222, %v290
  %v292 = vpop.f32.mrb[0].mxu0
  %293 = vmatprep.mubr.f32.mxu0 0.0
  %294 = vmatmul.mubr.f32.gmra.mrb[0].mxu0 %v37
  %v295 = vpop.f32.mrb[0].mxu0
  %v296 = vadd.f32 %v222, %v295
  %v297 = vpop.f32.mrb[0].mxu0
  %298 = vdwg.mxu0
  %vm299 = vcmask 130048
  %v301 = vsel %vm299, %v106, 0
  %v304 = vsel %vm299, %v201, 0
  %306 = vmatprep.subr.mxu0 0.0
  %307 = vmatpush1.xpose.msra.mxu0 %v304
  %308 = vmatprep.subr.mxu0 0.0
  %309 = vmatpush1.xpose.msra.mxu0 0.0
  %310 = vmatprep.subr.mxu0 0.0
  %311 = vmatpush1.xpose.msra.mxu0 0.0
  %312 = vmatprep.subr.mxu0 0.0
  %313 = vmatpush1.xpose.msra.mxu0 0.0
  %314 = vmatprep.subr.mxu0 0.0
  %315 = vmatpush1.xpose.msra.mxu0 0.0
  %316 = vmatprep.subr.mxu0 0.0
  %317 = vmatpush1.xpose.msra.mxu0 0.0
  %318 = vmatprep.subr.mxu0 0.0
  %319 = vmatpush1.xpose.msra.mxu0 0.0
  %320 = vmatprep.subr.mxu0 0.0
  %321 = vmatpush1.xpose.msra.mxu0 0.0
  %322 = vmatprep.subr.mxu0 0.0
  %323 = vmatpush1.xpose.msra.mxu0 0.0
  %324 = vmatprep.subr.mxu0 0.0
  %325 = vmatpush1.xpose.msra.mxu0 0.0
  %326 = vmatprep.subr.mxu0 0.0
  %327 = vmatpush1.xpose.msra.mxu0 0.0
  %328 = vmatprep.subr.mxu0 0.0
  %329 = vmatpush1.xpose.msra.mxu0 0.0
  %330 = vmatprep.subr.mxu0 0.0
  %331 = vmatpush1.xpose.msra.mxu0 0.0
  %332 = vmatprep.subr.mxu0 0.0
  %333 = vmatpush1.xpose.msra.mxu0 0.0
  %334 = vmatprep.subr.mxu0 0.0
  %335 = vmatpush1.xpose.msra.mxu0 0.0
  %336 = vmatprep.subr.mxu0 0.0
  %337 = vmatpush1.xpose.msra.mxu0 0.0
  %338 = vmatprep.subr.mxu0 0.0
  %339 = vmatpush1.xpose.msra.mxu0 0.0
  %340 = vmatprep.subr.mxu0 0.0
  %341 = vmatpush1.xpose.msra.mxu0 0.0
  %342 = vmatprep.subr.mxu0 0.0
  %343 = vmatpush1.xpose.msra.mxu0 0.0
  %344 = vmatprep.subr.mxu0 0.0
  %345 = vmatpush1.xpose.msra.mxu0 0.0
  %346 = vmatprep.subr.mxu0 0.0
  %347 = vmatpush1.xpose.msra.mxu0 0.0
  %348 = vmatprep.subr.mxu0 0.0
  %349 = vmatpush1.xpose.msra.mxu0 0.0
  %350 = vmatprep.subr.mxu0 0.0
  %351 = vmatpush1.xpose.msra.mxu0 0.0
  %352 = vmatprep.subr.mxu0 0.0
  %353 = vmatpush1.xpose.msra.mxu0 0.0
  %354 = vmatprep.subr.mxu0 0.0
  %355 = vmatpush1.xpose.msra.mxu0 0.0
  %356 = vmatprep.subr.mxu0 0.0
  %357 = vmatpush1.xpose.msra.mxu0 0.0
  %358 = vmatprep.subr.mxu0 0.0
  %359 = vmatpush1.xpose.msra.mxu0 0.0
  %360 = vmatprep.subr.mxu0 0.0
  %361 = vmatpush1.xpose.msra.mxu0 0.0
  %362 = vmatprep.subr.mxu0 0.0
  %363 = vmatpush1.xpose.msra.mxu0 0.0
  %364 = vmatprep.subr.mxu0 0.0
  %365 = vmatpush1.xpose.msra.mxu0 0.0
  %366 = vmatprep.subr.mxu0 0.0
  %367 = vmatpush1.xpose.msra.mxu0 0.0
  %368 = vmatprep.subr.mxu0 0.0
  %369 = vmatpush1.xpose.msra.mxu0 0.0
  %370 = vmatprep.mubr.f32.mxu0 0.0
  %371 = vmatmul.mubr.f32.gmra.mrb[0].mxu0 %v301
  %v372 = vpop.f32.mrb[0].mxu0
  %v373 = vadd.f32 0.0, %v372
  %v374 = vpop.f32.mrb[0].mxu0
  %375 = vdwg.mxu0
  %v377 = vsel %vm299, %v111, 0
  %v380 = vsel %vm299, %v206, 0
  %382 = vmatprep.subr.mxu0 0.0
  %383 = vmatpush1.xpose.msra.mxu0 %v380
  %384 = vmatprep.subr.mxu0 0.0
  %385 = vmatpush1.xpose.msra.mxu0 0.0
  %386 = vmatprep.subr.mxu0 0.0
  %387 = vmatpush1.xpose.msra.mxu0 0.0
  %388 = vmatprep.subr.mxu0 0.0
  %389 = vmatpush1.xpose.msra.mxu0 0.0
  %390 = vmatprep.subr.mxu0 0.0
  %391 = vmatpush1.xpose.msra.mxu0 0.0
  %392 = vmatprep.subr.mxu0 0.0
  %393 = vmatpush1.xpose.msra.mxu0 0.0
  %394 = vmatprep.subr.mxu0 0.0
  %395 = vmatpush1.xpose.msra.mxu0 0.0
  %396 = vmatprep.subr.mxu0 0.0
  %397 = vmatpush1.xpose.msra.mxu0 0.0
  %398 = vmatprep.subr.mxu0 0.0
  %399 = vmatpush1.xpose.msra.mxu0 0.0
  %400 = vmatprep.subr.mxu0 0.0
  %401 = vmatpush1.xpose.msra.mxu0 0.0
  %402 = vmatprep.subr.mxu0 0.0
  %403 = vmatpush1.xpose.msra.mxu0 0.0
  %404 = vmatprep.subr.mxu0 0.0
  %405 = vmatpush1.xpose.msra.mxu0 0.0
  %406 = vmatprep.subr.mxu0 0.0
  %407 = vmatpush1.xpose.msra.mxu0 0.0
  %408 = vmatprep.subr.mxu0 0.0
  %409 = vmatpush1.xpose.msra.mxu0 0.0
  %410 = vmatprep.subr.mxu0 0.0
  %411 = vmatpush1.xpose.msra.mxu0 0.0
  %412 = vmatprep.subr.mxu0 0.0
  %413 = vmatpush1.xpose.msra.mxu0 0.0
  %414 = vmatprep.subr.mxu0 0.0
  %415 = vmatpush1.xpose.msra.mxu0 0.0
  %416 = vmatprep.subr.mxu0 0.0
  %417 = vmatpush1.xpose.msra.mxu0 0.0
  %418 = vmatprep.subr.mxu0 0.0
  %419 = vmatpush1.xpose.msra.mxu0 0.0
  %420 = vmatprep.subr.mxu0 0.0
  %421 = vmatpush1.xpose.msra.mxu0 0.0
  %422 = vmatprep.subr.mxu0 0.0
  %423 = vmatpush1.xpose.msra.mxu0 0.0
  %424 = vmatprep.subr.mxu0 0.0
  %425 = vmatpush1.xpose.msra.mxu0 0.0
  %426 = vmatprep.subr.mxu0 0.0
  %427 = vmatpush1.xpose.msra.mxu0 0.0
  %428 = vmatprep.subr.mxu0 0.0
  %429 = vmatpush1.xpose.msra.mxu0 0.0
  %430 = vmatprep.subr.mxu0 0.0
  %431 = vmatpush1.xpose.msra.mxu0 0.0
  %432 = vmatprep.subr.mxu0 0.0
  %433 = vmatpush1.xpose.msra.mxu0 0.0
  %434 = vmatprep.subr.mxu0 0.0
  %435 = vmatpush1.xpose.msra.mxu0 0.0
  %436 = vmatprep.subr.mxu0 0.0
  %437 = vmatpush1.xpose.msra.mxu0 0.0
  %438 = vmatprep.subr.mxu0 0.0
  %439 = vmatpush1.xpose.msra.mxu0 0.0
  %440 = vmatprep.subr.mxu0 0.0
  %441 = vmatpush1.xpose.msra.mxu0 0.0
  %442 = vmatprep.subr.mxu0 0.0
  %443 = vmatpush1.xpose.msra.mxu0 0.0
  %444 = vmatprep.subr.mxu0 0.0
  %445 = vmatpush1.xpose.msra.mxu0 0.0
  %446 = vmatprep.mubr.f32.mxu0 0.0
  %447 = vmatmul.mubr.f32.gmra.mrb[0].mxu0 %v377
  %v448 = vpop.f32.mrb[0].mxu0
  %v449 = vadd.f32 0.0, %v448
  %v450 = vpop.f32.mrb[0].mxu0
  %451 = vdwg.mxu0
  %vm452 = vcmp.gt.f32.partialorder %v18, 0.0
  %vm453 = vcmp.gt.f32.partialorder %v19, 0.0
  %v454 = vsel %vm452, -1e+09, %v373
  %v455 = vsel %vm453, -1e+09, %v449
  %vm456 = vcmask 64512
  %v457 = vsel %vm456, %v454, -inf
  %458 = vmax.xlane.f32.xlu0 %v457
  %v459 = vpop.xlane.xlu0 %458
  %v460 = vsel %vm456, %v455, -inf
  %461 = vmax.xlane.f32.xlu0 %v460
  %v462 = vpop.xlane.xlu0 %461
  %v463 = vsub.f32 %v454, %v459
  %v464 = vsub.f32 %v455, %v462
  %v465 = vmul.f32 %v463, 1.442695
  %v466 = vpow.pop %v465
  %v467 = vmul.f32 %v464, 1.442695
  %v468 = vpow.pop %v467
  %v469 = vsel %vm456, %v466, 0.0
  %470 = vadd.xlane.f32.xlu0 %v469
  %v471 = vpop.xlane.xlu0 %470
  %v472 = vsel %vm456, %v468, 0.0
  %473 = vadd.xlane.f32.xlu0 %v472
  %v474 = vpop.xlane.xlu0 %473
  %v475 = vrcp.pop %v471
  %v476 = vmul.f32 %v466, %v475
  %v477 = vrcp.pop %v474
  %v478 = vmul.f32 %v468, %v477
  %v480 = vsel %vm456, %v476, 0
  %482 = vmatprep.subr.mxu0 0.0
  %483 = vmatpush1.msra.mxu0 %v291
  %484 = vmatprep.subr.mxu0 0.0
  %485 = vmatpush1.msra.mxu0 0.0
  %486 = vmatprep.subr.mxu0 0.0
  %487 = vmatpush1.msra.mxu0 0.0
  %488 = vmatprep.subr.mxu0 0.0
  %489 = vmatpush1.msra.mxu0 0.0
  %490 = vmatprep.subr.mxu0 0.0
  %491 = vmatpush1.msra.mxu0 0.0
  %492 = vmatprep.subr.mxu0 0.0
  %493 = vmatpush1.msra.mxu0 0.0
  %494 = vmatprep.subr.mxu0 0.0
  %495 = vmatpush1.msra.mxu0 0.0
  %496 = vmatprep.subr.mxu0 0.0
  %497 = vmatpush1.msra.mxu0 0.0
  %498 = vmatprep.subr.mxu0 0.0
  %499 = vmatpush1.msra.mxu0 0.0
  %500 = vmatprep.subr.mxu0 0.0
  %501 = vmatpush1.msra.mxu0 0.0
  %502 = vmatprep.subr.mxu0 0.0
  %503 = vmatpush1.msra.mxu0 0.0
  %504 = vmatprep.subr.mxu0 0.0
  %505 = vmatpush1.msra.mxu0 0.0
  %506 = vmatprep.subr.mxu0 0.0
  %507 = vmatpush1.msra.mxu0 0.0
  %508 = vmatprep.subr.mxu0 0.0
  %509 = vmatpush1.msra.mxu0 0.0
  %510 = vmatprep.subr.mxu0 0.0
  %511 = vmatpush1.msra.mxu0 0.0
  %512 = vmatprep.subr.mxu0 0.0
  %513 = vmatpush1.msra.mxu0 0.0
  %514 = vmatprep.subr.mxu0 0.0
  %515 = vmatpush1.msra.mxu0 0.0
  %516 = vmatprep.subr.mxu0 0.0
  %517 = vmatpush1.msra.mxu0 0.0
  %518 = vmatprep.subr.mxu0 0.0
  %519 = vmatpush1.msra.mxu0 0.0
  %520 = vmatprep.subr.mxu0 0.0
  %521 = vmatpush1.msra.mxu0 0.0
  %522 = vmatprep.subr.mxu0 0.0
  %523 = vmatpush1.msra.mxu0 0.0
  %524 = vmatprep.subr.mxu0 0.0
  %525 = vmatpush1.msra.mxu0 0.0
  %526 = vmatprep.subr.mxu0 0.0
  %527 = vmatpush1.msra.mxu0 0.0
  %528 = vmatprep.subr.mxu0 0.0
  %529 = vmatpush1.msra.mxu0 0.0
  %530 = vmatprep.subr.mxu0 0.0
  %531 = vmatpush1.msra.mxu0 0.0
  %532 = vmatprep.subr.mxu0 0.0
  %533 = vmatpush1.msra.mxu0 0.0
  %534 = vmatprep.subr.mxu0 0.0
  %535 = vmatpush1.msra.mxu0 0.0
  %536 = vmatprep.subr.mxu0 0.0
  %537 = vmatpush1.msra.mxu0 0.0
  %538 = vmatprep.subr.mxu0 0.0
  %539 = vmatpush1.msra.mxu0 0.0
  %540 = vmatprep.subr.mxu0 0.0
  %541 = vmatpush1.msra.mxu0 0.0
  %542 = vmatprep.subr.mxu0 0.0
  %543 = vmatpush1.msra.mxu0 0.0
  %544 = vmatprep.subr.mxu0 0.0
  %545 = vmatpush1.msra.mxu0 0.0
  %546 = vmatprep.mubr.f32.mxu0 0.0
  %547 = vmatmul.mubr.f32.gmra.mrb[0].mxu0 %v480
  %v548 = vpop.f32.mrb[0].mxu0
  %v549 = vadd.f32 0.0, %v548
  %v550 = vpop.f32.mrb[0].mxu0
  %551 = vdwg.mxu0
  %v553 = vsel %vm456, %v478, 0
  %555 = vmatprep.subr.mxu0 0.0
  %556 = vmatpush1.msra.mxu0 %v296
  %557 = vmatprep.subr.mxu0 0.0
  %558 = vmatpush1.msra.mxu0 0.0
  %559 = vmatprep.subr.mxu0 0.0
  %560 = vmatpush1.msra.mxu0 0.0
  %561 = vmatprep.subr.mxu0 0.0
  %562 = vmatpush1.msra.mxu0 0.0
  %563 = vmatprep.subr.mxu0 0.0
  %564 = vmatpush1.msra.mxu0 0.0
  %565 = vmatprep.subr.mxu0 0.0
  %566 = vmatpush1.msra.mxu0 0.0
  %567 = vmatprep.subr.mxu0 0.0
  %568 = vmatpush1.msra.mxu0 0.0
  %569 = vmatprep.subr.mxu0 0.0
  %570 = vmatpush1.msra.mxu0 0.0
  %571 = vmatprep.subr.mxu0 0.0
  %572 = vmatpush1.msra.mxu0 0.0
  %573 = vmatprep.subr.mxu0 0.0
  %574 = vmatpush1.msra.mxu0 0.0
  %575 = vmatprep.subr.mxu0 0.0
  %576 = vmatpush1.msra.mxu0 0.0
  %577 = vmatprep.subr.mxu0 0.0
  %578 = vmatpush1.msra.mxu0 0.0
  %579 = vmatprep.subr.mxu0 0.0
  %580 = vmatpush1.msra.mxu0 0.0
  %581 = vmatprep.subr.mxu0 0.0
  %582 = vmatpush1.msra.mxu0 0.0
  %583 = vmatprep.subr.mxu0 0.0
  %584 = vmatpush1.msra.mxu0 0.0
  %585 = vmatprep.subr.mxu0 0.0
  %586 = vmatpush1.msra.mxu0 0.0
  %587 = vmatprep.subr.mxu0 0.0
  %588 = vmatpush1.msra.mxu0 0.0
  %589 = vmatprep.subr.mxu0 0.0
  %590 = vmatpush1.msra.mxu0 0.0
  %591 = vmatprep.subr.mxu0 0.0
  %592 = vmatpush1.msra.mxu0 0.0
  %593 = vmatprep.subr.mxu0 0.0
  %594 = vmatpush1.msra.mxu0 0.0
  %595 = vmatprep.subr.mxu0 0.0
  %596 = vmatpush1.msra.mxu0 0.0
  %597 = vmatprep.subr.mxu0 0.0
  %598 = vmatpush1.msra.mxu0 0.0
  %599 = vmatprep.subr.mxu0 0.0
  %600 = vmatpush1.msra.mxu0 0.0
  %601 = vmatprep.subr.mxu0 0.0
  %602 = vmatpush1.msra.mxu0 0.0
  %603 = vmatprep.subr.mxu0 0.0
  %604 = vmatpush1.msra.mxu0 0.0
  %605 = vmatprep.subr.mxu0 0.0
  %606 = vmatpush1.msra.mxu0 0.0
  %607 = vmatprep.subr.mxu0 0.0
  %608 = vmatpush1.msra.mxu0 0.0
  %609 = vmatprep.subr.mxu0 0.0
  %610 = vmatpush1.msra.mxu0 0.0
  %611 = vmatprep.subr.mxu0 0.0
  %612 = vmatpush1.msra.mxu0 0.0
  %613 = vmatprep.subr.mxu0 0.0
  %614 = vmatpush1.msra.mxu0 0.0
  %615 = vmatprep.subr.mxu0 0.0
  %616 = vmatpush1.msra.mxu0 0.0
  %617 = vmatprep.subr.mxu0 0.0
  %618 = vmatpush1.msra.mxu0 0.0
  %619 = vmatprep.mubr.f32.mxu0 0.0
  %620 = vmatmul.mubr.f32.gmra.mrb[0].mxu0 %v553
  %v621 = vpop.f32.mrb[0].mxu0
  %v622 = vadd.f32 0.0, %v621
  %v623 = vpop.f32.mrb[0].mxu0
  %624 = vdwg.mxu0
  %v625 = vld [vmem:[%s2] sm:$0xff]
  %v626 = vld [vmem:[%s2 + $0x8] sm:$0xff]
  %v627 = vld [vmem:[%s2 + $0x10] sm:$0xff]
  %v628 = vld [vmem:[%s2 + $0x18] sm:$0xff]
  %v629 = vld [vmem:[%s2 + $0xa0] sm:$0x1]
  %v630 = vlaneseq
  %v631 = vshrl.u32 %v630, 7
  %v632 = vsub.s32 0, %v631
  %v633 = vrot.slane %v629, %v632
  %638 = vrot.lane.b32.xlu0 %v625, 112
  %v639 = vpop.permute.xlu0 %638
  %640 = vrot.lane.b32.xlu0 %v626, 112
  %v641 = vpop.permute.xlu0 %640
  %642 = vrot.lane.b32.xlu0 %v627, 112
  %v643 = vpop.permute.xlu0 %642
  %644 = vrot.lane.b32.xlu0 %v628, 112
  %v645 = vpop.permute.xlu0 %644
  %651 = vrot.lane.b32.xlu0 %v633, 112
  %v652 = vpop.permute.xlu0 %651
  %654 = vmatprep.subr.mxu0 0.0
  %655 = vmatpush1.msra.mxu0 %v639
  %656 = vmatprep.subr.mxu0 0.0
  %657 = vmatpush1.msra.mxu0 %v641
  %658 = vmatprep.subr.mxu0 0.0
  %659 = vmatpush1.msra.mxu0 %v643
  %660 = vmatprep.subr.mxu0 0.0
  %661 = vmatpush1.msra.mxu0 %v645
  %662 = vmatprep.subr.mxu0 0.0
  %663 = vmatpush1.msra.mxu0 0.0
  %664 = vmatprep.subr.mxu0 0.0
  %665 = vmatpush1.msra.mxu0 0.0
  %666 = vmatprep.subr.mxu0 0.0
  %667 = vmatpush1.msra.mxu0 0.0
  %668 = vmatprep.subr.mxu0 0.0
  %669 = vmatpush1.msra.mxu0 0.0
  %670 = vmatprep.subr.mxu0 0.0
  %671 = vmatpush1.msra.mxu0 0.0
  %672 = vmatprep.subr.mxu0 0.0
  %673 = vmatpush1.msra.mxu0 0.0
  %674 = vmatprep.subr.mxu0 0.0
  %675 = vmatpush1.msra.mxu0 0.0
  %676 = vmatprep.subr.mxu0 0.0
  %677 = vmatpush1.msra.mxu0 0.0
  %678 = vmatprep.subr.mxu0 0.0
  %679 = vmatpush1.msra.mxu0 0.0
  %680 = vmatprep.subr.mxu0 0.0
  %681 = vmatpush1.msra.mxu0 0.0
  %682 = vmatprep.subr.mxu0 0.0
  %683 = vmatpush1.msra.mxu0 0.0
  %684 = vmatprep.subr.mxu0 0.0
  %685 = vmatpush1.msra.mxu0 0.0
  %686 = vmatprep.subr.mxu0 0.0
  %687 = vmatpush1.msra.mxu0 0.0
  %688 = vmatprep.subr.mxu0 0.0
  %689 = vmatpush1.msra.mxu0 0.0
  %690 = vmatprep.subr.mxu0 0.0
  %691 = vmatpush1.msra.mxu0 0.0
  %692 = vmatprep.subr.mxu0 0.0
  %693 = vmatpush1.msra.mxu0 0.0
  %694 = vmatprep.subr.mxu0 0.0
  %695 = vmatpush1.msra.mxu0 0.0
  %696 = vmatprep.subr.mxu0 0.0
  %697 = vmatpush1.msra.mxu0 0.0
  %698 = vmatprep.subr.mxu0 0.0
  %699 = vmatpush1.msra.mxu0 0.0
  %700 = vmatprep.subr.mxu0 0.0
  %701 = vmatpush1.msra.mxu0 0.0
  %702 = vmatprep.subr.mxu0 0.0
  %703 = vmatpush1.msra.mxu0 0.0
  %704 = vmatprep.subr.mxu0 0.0
  %705 = vmatpush1.msra.mxu0 0.0
  %706 = vmatprep.subr.mxu0 0.0
  %707 = vmatpush1.msra.mxu0 0.0
  %708 = vmatprep.subr.mxu0 0.0
  %709 = vmatpush1.msra.mxu0 0.0
  %710 = vmatprep.subr.mxu0 0.0
  %711 = vmatpush1.msra.mxu0 0.0
  %712 = vmatprep.subr.mxu0 0.0
  %713 = vmatpush1.msra.mxu0 0.0
  %714 = vmatprep.subr.mxu0 0.0
  %715 = vmatpush1.msra.mxu0 0.0
  %716 = vmatprep.subr.mxu0 0.0
  %717 = vmatpush1.msra.mxu0 0.0
  %718 = vmatprep.mubr.f32.mxu0 0.0
  %719 = vmatmul.mubr.f32.gmra.mrb[0].mxu0 %v34
  %v720 = vpop.f32.mrb[0].mxu0
  %v721 = vadd.f32 %v652, %v720
  %v722 = vpop.f32.mrb[0].mxu0
  %723 = vmatprep.mubr.f32.mxu0 0.0
  %724 = vmatmul.mubr.f32.gmra.mrb[0].mxu0 %v37
  %v725 = vpop.f32.mrb[0].mxu0
  %v726 = vadd.f32 %v652, %v725
  %v727 = vpop.f32.mrb[0].mxu0
  %728 = vdwg.mxu0
  %729 = vrot.lane.b32.xlu0 %v625, 80
  %v730 = vpop.permute.xlu0 %729
  %731 = vrot.lane.b32.xlu0 %v626, 80
  %v732 = vpop.permute.xlu0 %731
  %733 = vrot.lane.b32.xlu0 %v627, 80
  %v734 = vpop.permute.xlu0 %733
  %735 = vrot.lane.b32.xlu0 %v628, 80
  %v736 = vpop.permute.xlu0 %735
  %741 = vrot.lane.b32.xlu0 %v633, 80
  %v742 = vpop.permute.xlu0 %741
  %744 = vmatprep.subr.mxu0 0.0
  %745 = vmatpush1.msra.mxu0 %v730
  %746 = vmatprep.subr.mxu0 0.0
  %747 = vmatpush1.msra.mxu0 %v732
  %748 = vmatprep.subr.mxu0 0.0
  %749 = vmatpush1.msra.mxu0 %v734
  %750 = vmatprep.subr.mxu0 0.0
  %751 = vmatpush1.msra.mxu0 %v736
  %752 = vmatprep.subr.mxu0 0.0
  %753 = vmatpush1.msra.mxu0 0.0
  %754 = vmatprep.subr.mxu0 0.0
  %755 = vmatpush1.msra.mxu0 0.0
  %756 = vmatprep.subr.mxu0 0.0
  %757 = vmatpush1.msra.mxu0 0.0
  %758 = vmatprep.subr.mxu0 0.0
  %759 = vmatpush1.msra.mxu0 0.0
  %760 = vmatprep.subr.mxu0 0.0
  %761 = vmatpush1.msra.mxu0 0.0
  %762 = vmatprep.subr.mxu0 0.0
  %763 = vmatpush1.msra.mxu0 0.0
  %764 = vmatprep.subr.mxu0 0.0
  %765 = vmatpush1.msra.mxu0 0.0
  %766 = vmatprep.subr.mxu0 0.0
  %767 = vmatpush1.msra.mxu0 0.0
  %768 = vmatprep.subr.mxu0 0.0
  %769 = vmatpush1.msra.mxu0 0.0
  %770 = vmatprep.subr.mxu0 0.0
  %771 = vmatpush1.msra.mxu0 0.0
  %772 = vmatprep.subr.mxu0 0.0
  %773 = vmatpush1.msra.mxu0 0.0
  %774 = vmatprep.subr.mxu0 0.0
  %775 = vmatpush1.msra.mxu0 0.0
  %776 = vmatprep.subr.mxu0 0.0
  %777 = vmatpush1.msra.mxu0 0.0
  %778 = vmatprep.subr.mxu0 0.0
  %779 = vmatpush1.msra.mxu0 0.0
  %780 = vmatprep.subr.mxu0 0.0
  %781 = vmatpush1.msra.mxu0 0.0
  %782 = vmatprep.subr.mxu0 0.0
  %783 = vmatpush1.msra.mxu0 0.0
  %784 = vmatprep.subr.mxu0 0.0
  %785 = vmatpush1.msra.mxu0 0.0
  %786 = vmatprep.subr.mxu0 0.0
  %787 = vmatpush1.msra.mxu0 0.0
  %788 = vmatprep.subr.mxu0 0.0
  %789 = vmatpush1.msra.mxu0 0.0
  %790 = vmatprep.subr.mxu0 0.0
  %791 = vmatpush1.msra.mxu0 0.0
  %792 = vmatprep.subr.mxu0 0.0
  %793 = vmatpush1.msra.mxu0 0.0
  %794 = vmatprep.subr.mxu0 0.0
  %795 = vmatpush1.msra.mxu0 0.0
  %796 = vmatprep.subr.mxu0 0.0
  %797 = vmatpush1.msra.mxu0 0.0
  %798 = vmatprep.subr.mxu0 0.0
  %799 = vmatpush1.msra.mxu0 0.0
  %800 = vmatprep.subr.mxu0 0.0
  %801 = vmatpush1.msra.mxu0 0.0
  %802 = vmatprep.subr.mxu0 0.0
  %803 = vmatpush1.msra.mxu0 0.0
  %804 = vmatprep.subr.mxu0 0.0
  %805 = vmatpush1.msra.mxu0 0.0
  %806 = vmatprep.subr.mxu0 0.0
  %807 = vmatpush1.msra.mxu0 0.0
  %808 = vmatprep.mubr.f32.mxu0 0.0
  %809 = vmatmul.mubr.f32.gmra.mrb[0].mxu0 %v34
  %v810 = vpop.f32.mrb[0].mxu0
  %v811 = vadd.f32 %v742, %v810
  %v812 = vpop.f32.mrb[0].mxu0
  %813 = vmatprep.mubr.f32.mxu0 0.0
  %814 = vmatmul.mubr.f32.gmra.mrb[0].mxu0 %v37
  %v815 = vpop.f32.mrb[0].mxu0
  %v816 = vadd.f32 %v742, %v815
  %v817 = vpop.f32.mrb[0].mxu0
  %818 = vdwg.mxu0
  %819 = vrot.lane.b32.xlu0 %v625, 48
  %v820 = vpop.permute.xlu0 %819
  %821 = vrot.lane.b32.xlu0 %v626, 48
  %v822 = vpop.permute.xlu0 %821
  %823 = vrot.lane.b32.xlu0 %v627, 48
  %v824 = vpop.permute.xlu0 %823
  %825 = vrot.lane.b32.xlu0 %v628, 48
  %v826 = vpop.permute.xlu0 %825
  %831 = vrot.lane.b32.xlu0 %v633, 48
  %v832 = vpop.permute.xlu0 %831
  %834 = vmatprep.subr.mxu0 0.0
  %835 = vmatpush1.msra.mxu0 %v820
  %836 = vmatprep.subr.mxu0 0.0
  %837 = vmatpush1.msra.mxu0 %v822
  %838 = vmatprep.subr.mxu0 0.0
  %839 = vmatpush1.msra.mxu0 %v824
  %840 = vmatprep.subr.mxu0 0.0
  %841 = vmatpush1.msra.mxu0 %v826
  %842 = vmatprep.subr.mxu0 0.0
  %843 = vmatpush1.msra.mxu0 0.0
  %844 = vmatprep.subr.mxu0 0.0
  %845 = vmatpush1.msra.mxu0 0.0
  %846 = vmatprep.subr.mxu0 0.0
  %847 = vmatpush1.msra.mxu0 0.0
  %848 = vmatprep.subr.mxu0 0.0
  %849 = vmatpush1.msra.mxu0 0.0
  %850 = vmatprep.subr.mxu0 0.0
  %851 = vmatpush1.msra.mxu0 0.0
  %852 = vmatprep.subr.mxu0 0.0
  %853 = vmatpush1.msra.mxu0 0.0
  %854 = vmatprep.subr.mxu0 0.0
  %855 = vmatpush1.msra.mxu0 0.0
  %856 = vmatprep.subr.mxu0 0.0
  %857 = vmatpush1.msra.mxu0 0.0
  %858 = vmatprep.subr.mxu0 0.0
  %859 = vmatpush1.msra.mxu0 0.0
  %860 = vmatprep.subr.mxu0 0.0
  %861 = vmatpush1.msra.mxu0 0.0
  %862 = vmatprep.subr.mxu0 0.0
  %863 = vmatpush1.msra.mxu0 0.0
  %864 = vmatprep.subr.mxu0 0.0
  %865 = vmatpush1.msra.mxu0 0.0
  %866 = vmatprep.subr.mxu0 0.0
  %867 = vmatpush1.msra.mxu0 0.0
  %868 = vmatprep.subr.mxu0 0.0
  %869 = vmatpush1.msra.mxu0 0.0
  %870 = vmatprep.subr.mxu0 0.0
  %871 = vmatpush1.msra.mxu0 0.0
  %872 = vmatprep.subr.mxu0 0.0
  %873 = vmatpush1.msra.mxu0 0.0
  %874 = vmatprep.subr.mxu0 0.0
  %875 = vmatpush1.msra.mxu0 0.0
  %876 = vmatprep.subr.mxu0 0.0
  %877 = vmatpush1.msra.mxu0 0.0
  %878 = vmatprep.subr.mxu0 0.0
  %879 = vmatpush1.msra.mxu0 0.0
  %880 = vmatprep.subr.mxu0 0.0
  %881 = vmatpush1.msra.mxu0 0.0
  %882 = vmatprep.subr.mxu0 0.0
  %883 = vmatpush1.msra.mxu0 0.0
  %884 = vmatprep.subr.mxu0 0.0
  %885 = vmatpush1.msra.mxu0 0.0
  %886 = vmatprep.subr.mxu0 0.0
  %887 = vmatpush1.msra.mxu0 0.0
  %888 = vmatprep.subr.mxu0 0.0
  %889 = vmatpush1.msra.mxu0 0.0
  %890 = vmatprep.subr.mxu0 0.0
  %891 = vmatpush1.msra.mxu0 0.0
  %892 = vmatprep.subr.mxu0 0.0
  %893 = vmatpush1.msra.mxu0 0.0
  %894 = vmatprep.subr.mxu0 0.0
  %895 = vmatpush1.msra.mxu0 0.0
  %896 = vmatprep.subr.mxu0 0.0
  %897 = vmatpush1.msra.mxu0 0.0
  %898 = vmatprep.mubr.f32.mxu0 0.0
  %899 = vmatmul.mubr.f32.gmra.mrb[0].mxu0 %v34
  %v900 = vpop.f32.mrb[0].mxu0
  %v901 = vadd.f32 %v832, %v900
  %v902 = vpop.f32.mrb[0].mxu0
  %903 = vmatprep.mubr.f32.mxu0 0.0
  %904 = vmatmul.mubr.f32.gmra.mrb[0].mxu0 %v37
  %v905 = vpop.f32.mrb[0].mxu0
  %v906 = vadd.f32 %v832, %v905
  %v907 = vpop.f32.mrb[0].mxu0
  %908 = vdwg.mxu0
  %v910 = vsel %vm299, %v721, 0
  %v913 = vsel %vm299, %v811, 0
  %915 = vmatprep.subr.mxu0 0.0
  %916 = vmatpush1.xpose.msra.mxu0 %v913
  %917 = vmatprep.subr.mxu0 0.0
  %918 = vmatpush1.xpose.msra.mxu0 0.0
  %919 = vmatprep.subr.mxu0 0.0
  %920 = vmatpush1.xpose.msra.mxu0 0.0
  %921 = vmatprep.subr.mxu0 0.0
  %922 = vmatpush1.xpose.msra.mxu0 0.0
  %923 = vmatprep.subr.mxu0 0.0
  %924 = vmatpush1.xpose.msra.mxu0 0.0
  %925 = vmatprep.subr.mxu0 0.0
  %926 = vmatpush1.xpose.msra.mxu0 0.0
  %927 = vmatprep.subr.mxu0 0.0
  %928 = vmatpush1.xpose.msra.mxu0 0.0
  %929 = vmatprep.subr.mxu0 0.0
  %930 = vmatpush1.xpose.msra.mxu0 0.0
  %931 = vmatprep.subr.mxu0 0.0
  %932 = vmatpush1.xpose.msra.mxu0 0.0
  %933 = vmatprep.subr.mxu0 0.0
  %934 = vmatpush1.xpose.msra.mxu0 0.0
  %935 = vmatprep.subr.mxu0 0.0
  %936 = vmatpush1.xpose.msra.mxu0 0.0
  %937 = vmatprep.subr.mxu0 0.0
  %938 = vmatpush1.xpose.msra.mxu0 0.0
  %939 = vmatprep.subr.mxu0 0.0
  %940 = vmatpush1.xpose.msra.mxu0 0.0
  %941 = vmatprep.subr.mxu0 0.0
  %942 = vmatpush1.xpose.msra.mxu0 0.0
  %943 = vmatprep.subr.mxu0 0.0
  %944 = vmatpush1.xpose.msra.mxu0 0.0
  %945 = vmatprep.subr.mxu0 0.0
  %946 = vmatpush1.xpose.msra.mxu0 0.0
  %947 = vmatprep.subr.mxu0 0.0
  %948 = vmatpush1.xpose.msra.mxu0 0.0
  %949 = vmatprep.subr.mxu0 0.0
  %950 = vmatpush1.xpose.msra.mxu0 0.0
  %951 = vmatprep.subr.mxu0 0.0
  %952 = vmatpush1.xpose.msra.mxu0 0.0
  %953 = vmatprep.subr.mxu0 0.0
  %954 = vmatpush1.xpose.msra.mxu0 0.0
  %955 = vmatprep.subr.mxu0 0.0
  %956 = vmatpush1.xpose.msra.mxu0 0.0
  %957 = vmatprep.subr.mxu0 0.0
  %958 = vmatpush1.xpose.msra.mxu0 0.0
  %959 = vmatprep.subr.mxu0 0.0
  %960 = vmatpush1.xpose.msra.mxu0 0.0
  %961 = vmatprep.subr.mxu0 0.0
  %962 = vmatpush1.xpose.msra.mxu0 0.0
  %963 = vmatprep.subr.mxu0 0.0
  %964 = vmatpush1.xpose.msra.mxu0 0.0
  %965 = vmatprep.subr.mxu0 0.0
  %966 = vmatpush1.xpose.msra.mxu0 0.0
  %967 = vmatprep.subr.mxu0 0.0
  %968 = vmatpush1.xpose.msra.mxu0 0.0
  %969 = vmatprep.subr.mxu0 0.0
  %970 = vmatpush1.xpose.msra.mxu0 0.0
  %971 = vmatprep.subr.mxu0 0.0
  %972 = vmatpush1.xpose.msra.mxu0 0.0
  %973 = vmatprep.subr.mxu0 0.0
  %974 = vmatpush1.xpose.msra.mxu0 0.0
  %975 = vmatprep.subr.mxu0 0.0
  %976 = vmatpush1.xpose.msra.mxu0 0.0
  %977 = vmatprep.subr.mxu0 0.0
  %978 = vmatpush1.xpose.msra.mxu0 0.0
  %979 = vmatprep.mubr.f32.mxu0 0.0
  %980 = vmatmul.mubr.f32.gmra.mrb[0].mxu0 %v910
  %v981 = vpop.f32.mrb[0].mxu0
  %v982 = vadd.f32 0.0, %v981
  %v983 = vpop.f32.mrb[0].mxu0
  %984 = vdwg.mxu0
  %v986 = vsel %vm299, %v726, 0
  %v989 = vsel %vm299, %v816, 0
  %991 = vmatprep.subr.mxu0 0.0
  %992 = vmatpush1.xpose.msra.mxu0 %v989
  %993 = vmatprep.subr.mxu0 0.0
  %994 = vmatpush1.xpose.msra.mxu0 0.0
  %995 = vmatprep.subr.mxu0 0.0
  %996 = vmatpush1.xpose.msra.mxu0 0.0
  %997 = vmatprep.subr.mxu0 0.0
  %998 = vmatpush1.xpose.msra.mxu0 0.0
  %999 = vmatprep.subr.mxu0 0.0
  %1000 = vmatpush1.xpose.msra.mxu0 0.0
  %1001 = vmatprep.subr.mxu0 0.0
  %1002 = vmatpush1.xpose.msra.mxu0 0.0
  %1003 = vmatprep.subr.mxu0 0.0
  %1004 = vmatpush1.xpose.msra.mxu0 0.0
  %1005 = vmatprep.subr.mxu0 0.0
  %1006 = vmatpush1.xpose.msra.mxu0 0.0
  %1007 = vmatprep.subr.mxu0 0.0
  %1008 = vmatpush1.xpose.msra.mxu0 0.0
  %1009 = vmatprep.subr.mxu0 0.0
  %1010 = vmatpush1.xpose.msra.mxu0 0.0
  %1011 = vmatprep.subr.mxu0 0.0
  %1012 = vmatpush1.xpose.msra.mxu0 0.0
  %1013 = vmatprep.subr.mxu0 0.0
  %1014 = vmatpush1.xpose.msra.mxu0 0.0
  %1015 = vmatprep.subr.mxu0 0.0
  %1016 = vmatpush1.xpose.msra.mxu0 0.0
  %1017 = vmatprep.subr.mxu0 0.0
  %1018 = vmatpush1.xpose.msra.mxu0 0.0
  %1019 = vmatprep.subr.mxu0 0.0
  %1020 = vmatpush1.xpose.msra.mxu0 0.0
  %1021 = vmatprep.subr.mxu0 0.0
  %1022 = vmatpush1.xpose.msra.mxu0 0.0
  %1023 = vmatprep.subr.mxu0 0.0
  %1024 = vmatpush1.xpose.msra.mxu0 0.0
  %1025 = vmatprep.subr.mxu0 0.0
  %1026 = vmatpush1.xpose.msra.mxu0 0.0
  %1027 = vmatprep.subr.mxu0 0.0
  %1028 = vmatpush1.xpose.msra.mxu0 0.0
  %1029 = vmatprep.subr.mxu0 0.0
  %1030 = vmatpush1.xpose.msra.mxu0 0.0
  %1031 = vmatprep.subr.mxu0 0.0
  %1032 = vmatpush1.xpose.msra.mxu0 0.0
  %1033 = vmatprep.subr.mxu0 0.0
  %1034 = vmatpush1.xpose.msra.mxu0 0.0
  %1035 = vmatprep.subr.mxu0 0.0
  %1036 = vmatpush1.xpose.msra.mxu0 0.0
  %1037 = vmatprep.subr.mxu0 0.0
  %1038 = vmatpush1.xpose.msra.mxu0 0.0
  %1039 = vmatprep.subr.mxu0 0.0
  %1040 = vmatpush1.xpose.msra.mxu0 0.0
  %1041 = vmatprep.subr.mxu0 0.0
  %1042 = vmatpush1.xpose.msra.mxu0 0.0
  %1043 = vmatprep.subr.mxu0 0.0
  %1044 = vmatpush1.xpose.msra.mxu0 0.0
  %1045 = vmatprep.subr.mxu0 0.0
  %1046 = vmatpush1.xpose.msra.mxu0 0.0
  %1047 = vmatprep.subr.mxu0 0.0
  %1048 = vmatpush1.xpose.msra.mxu0 0.0
  %1049 = vmatprep.subr.mxu0 0.0
  %1050 = vmatpush1.xpose.msra.mxu0 0.0
  %1051 = vmatprep.subr.mxu0 0.0
  %1052 = vmatpush1.xpose.msra.mxu0 0.0
  %1053 = vmatprep.subr.mxu0 0.0
  %1054 = vmatpush1.xpose.msra.mxu0 0.0
  %1055 = vmatprep.mubr.f32.mxu0 0.0
  %1056 = vmatmul.mubr.f32.gmra.mrb[0].mxu0 %v986
  %v1057 = vpop.f32.mrb[0].mxu0
  %v1058 = vadd.f32 0.0, %v1057
  %v1059 = vpop.f32.mrb[0].mxu0
  %1060 = vdwg.mxu0
  %v1061 = vsel %vm452, -1e+09, %v982
  %v1062 = vsel %vm453, -1e+09, %v1058
  %v1063 = vsel %vm456, %v1061, -inf
  %1064 = vmax.xlane.f32.xlu0 %v1063
  %v1065 = vpop.xlane.xlu0 %1064
  %v1066 = vsel %vm456, %v1062, -inf
  %1067 = vmax.xlane.f32.xlu0 %v1066
  %v1068 = vpop.xlane.xlu0 %1067
  %v1069 = vsub.f32 %v1061, %v1065
  %v1070 = vsub.f32 %v1062, %v1068
  %v1071 = vmul.f32 %v1069, 1.442695
  %v1072 = vpow.pop %v1071
  %v1073 = vmul.f32 %v1070, 1.442695
  %v1074 = vpow.pop %v1073
  %v1075 = vsel %vm456, %v1072, 0.0
  %1076 = vadd.xlane.f32.xlu0 %v1075
  %v1077 = vpop.xlane.xlu0 %1076
  %v1078 = vsel %vm456, %v1074, 0.0
  %1079 = vadd.xlane.f32.xlu0 %v1078
  %v1080 = vpop.xlane.xlu0 %1079
  %v1081 = vrcp.pop %v1077
  %v1082 = vmul.f32 %v1072, %v1081
  %v1083 = vrcp.pop %v1080
  %v1084 = vmul.f32 %v1074, %v1083
  %v1086 = vsel %vm456, %v1082, 0
  %1088 = vmatprep.subr.mxu0 0.0
  %1089 = vmatpush1.msra.mxu0 %v901
  %1090 = vmatprep.subr.mxu0 0.0
  %1091 = vmatpush1.msra.mxu0 0.0
  %1092 = vmatprep.subr.mxu0 0.0
  %1093 = vmatpush1.msra.mxu0 0.0
  %1094 = vmatprep.subr.mxu0 0.0
  %1095 = vmatpush1.msra.mxu0 0.0
  %1096 = vmatprep.subr.mxu0 0.0
  %1097 = vmatpush1.msra.mxu0 0.0
  %1098 = vmatprep.subr.mxu0 0.0
  %1099 = vmatpush1.msra.mxu0 0.0
  %1100 = vmatprep.subr.mxu0 0.0
  %1101 = vmatpush1.msra.mxu0 0.0
  %1102 = vmatprep.subr.mxu0 0.0
  %1103 = vmatpush1.msra.mxu0 0.0
  %1104 = vmatprep.subr.mxu0 0.0
  %1105 = vmatpush1.msra.mxu0 0.0
  %1106 = vmatprep.subr.mxu0 0.0
  %1107 = vmatpush1.msra.mxu0 0.0
  %1108 = vmatprep.subr.mxu0 0.0
  %1109 = vmatpush1.msra.mxu0 0.0
  %1110 = vmatprep.subr.mxu0 0.0
  %1111 = vmatpush1.msra.mxu0 0.0
  %1112 = vmatprep.subr.mxu0 0.0
  %1113 = vmatpush1.msra.mxu0 0.0
  %1114 = vmatprep.subr.mxu0 0.0
  %1115 = vmatpush1.msra.mxu0 0.0
  %1116 = vmatprep.subr.mxu0 0.0
  %1117 = vmatpush1.msra.mxu0 0.0
  %1118 = vmatprep.subr.mxu0 0.0
  %1119 = vmatpush1.msra.mxu0 0.0
  %1120 = vmatprep.subr.mxu0 0.0
  %1121 = vmatpush1.msra.mxu0 0.0
  %1122 = vmatprep.subr.mxu0 0.0
  %1123 = vmatpush1.msra.mxu0 0.0
  %1124 = vmatprep.subr.mxu0 0.0
  %1125 = vmatpush1.msra.mxu0 0.0
  %1126 = vmatprep.subr.mxu0 0.0
  %1127 = vmatpush1.msra.mxu0 0.0
  %1128 = vmatprep.subr.mxu0 0.0
  %1129 = vmatpush1.msra.mxu0 0.0
  %1130 = vmatprep.subr.mxu0 0.0
  %1131 = vmatpush1.msra.mxu0 0.0
  %1132 = vmatprep.subr.mxu0 0.0
  %1133 = vmatpush1.msra.mxu0 0.0
  %1134 = vmatprep.subr.mxu0 0.0
  %1135 = vmatpush1.msra.mxu0 0.0
  %1136 = vmatprep.subr.mxu0 0.0
  %1137 = vmatpush1.msra.mxu0 0.0
  %1138 = vmatprep.subr.mxu0 0.0
  %1139 = vmatpush1.msra.mxu0 0.0
  %1140 = vmatprep.subr.mxu0 0.0
  %1141 = vmatpush1.msra.mxu0 0.0
  %1142 = vmatprep.subr.mxu0 0.0
  %1143 = vmatpush1.msra.mxu0 0.0
  %1144 = vmatprep.subr.mxu0 0.0
  %1145 = vmatpush1.msra.mxu0 0.0
  %1146 = vmatprep.subr.mxu0 0.0
  %1147 = vmatpush1.msra.mxu0 0.0
  %1148 = vmatprep.subr.mxu0 0.0
  %1149 = vmatpush1.msra.mxu0 0.0
  %1150 = vmatprep.subr.mxu0 0.0
  %1151 = vmatpush1.msra.mxu0 0.0
  %1152 = vmatprep.mubr.f32.mxu0 0.0
  %1153 = vmatmul.mubr.f32.gmra.mrb[0].mxu0 %v1086
  %v1154 = vpop.f32.mrb[0].mxu0
  %v1155 = vadd.f32 0.0, %v1154
  %v1156 = vpop.f32.mrb[0].mxu0
  %1157 = vdwg.mxu0
  %v1159 = vsel %vm456, %v1084, 0
  %1161 = vmatprep.subr.mxu0 0.0
  %1162 = vmatpush1.msra.mxu0 %v906
  %1163 = vmatprep.subr.mxu0 0.0
  %1164 = vmatpush1.msra.mxu0 0.0
  %1165 = vmatprep.subr.mxu0 0.0
  %1166 = vmatpush1.msra.mxu0 0.0
  %1167 = vmatprep.subr.mxu0 0.0
  %1168 = vmatpush1.msra.mxu0 0.0
  %1169 = vmatprep.subr.mxu0 0.0
  %1170 = vmatpush1.msra.mxu0 0.0
  %1171 = vmatprep.subr.mxu0 0.0
  %1172 = vmatpush1.msra.mxu0 0.0
  %1173 = vmatprep.subr.mxu0 0.0
  %1174 = vmatpush1.msra.mxu0 0.0
  %1175 = vmatprep.subr.mxu0 0.0
  %1176 = vmatpush1.msra.mxu0 0.0
  %1177 = vmatprep.subr.mxu0 0.0
  %1178 = vmatpush1.msra.mxu0 0.0
  %1179 = vmatprep.subr.mxu0 0.0
  %1180 = vmatpush1.msra.mxu0 0.0
  %1181 = vmatprep.subr.mxu0 0.0
  %1182 = vmatpush1.msra.mxu0 0.0
  %1183 = vmatprep.subr.mxu0 0.0
  %1184 = vmatpush1.msra.mxu0 0.0
  %1185 = vmatprep.subr.mxu0 0.0
  %1186 = vmatpush1.msra.mxu0 0.0
  %1187 = vmatprep.subr.mxu0 0.0
  %1188 = vmatpush1.msra.mxu0 0.0
  %1189 = vmatprep.subr.mxu0 0.0
  %1190 = vmatpush1.msra.mxu0 0.0
  %1191 = vmatprep.subr.mxu0 0.0
  %1192 = vmatpush1.msra.mxu0 0.0
  %1193 = vmatprep.subr.mxu0 0.0
  %1194 = vmatpush1.msra.mxu0 0.0
  %1195 = vmatprep.subr.mxu0 0.0
  %1196 = vmatpush1.msra.mxu0 0.0
  %1197 = vmatprep.subr.mxu0 0.0
  %1198 = vmatpush1.msra.mxu0 0.0
  %1199 = vmatprep.subr.mxu0 0.0
  %1200 = vmatpush1.msra.mxu0 0.0
  %1201 = vmatprep.subr.mxu0 0.0
  %1202 = vmatpush1.msra.mxu0 0.0
  %1203 = vmatprep.subr.mxu0 0.0
  %1204 = vmatpush1.msra.mxu0 0.0
  %1205 = vmatprep.subr.mxu0 0.0
  %1206 = vmatpush1.msra.mxu0 0.0
  %1207 = vmatprep.subr.mxu0 0.0
  %1208 = vmatpush1.msra.mxu0 0.0
  %1209 = vmatprep.subr.mxu0 0.0
  %1210 = vmatpush1.msra.mxu0 0.0
  %1211 = vmatprep.subr.mxu0 0.0
  %1212 = vmatpush1.msra.mxu0 0.0
  %1213 = vmatprep.subr.mxu0 0.0
  %1214 = vmatpush1.msra.mxu0 0.0
  %1215 = vmatprep.subr.mxu0 0.0
  %1216 = vmatpush1.msra.mxu0 0.0
  %1217 = vmatprep.subr.mxu0 0.0
  %1218 = vmatpush1.msra.mxu0 0.0
  %1219 = vmatprep.subr.mxu0 0.0
  %1220 = vmatpush1.msra.mxu0 0.0
  %1221 = vmatprep.subr.mxu0 0.0
  %1222 = vmatpush1.msra.mxu0 0.0
  %1223 = vmatprep.subr.mxu0 0.0
  %1224 = vmatpush1.msra.mxu0 0.0
  %1225 = vmatprep.mubr.f32.mxu0 0.0
  %1226 = vmatmul.mubr.f32.gmra.mrb[0].mxu0 %v1159
  %v1227 = vpop.f32.mrb[0].mxu0
  %v1228 = vadd.f32 0.0, %v1227
  %v1229 = vpop.f32.mrb[0].mxu0
  %1230 = vdwg.mxu0
  %1231 = vrot.lane.b32.xlu0 %v627, 32
  %v1232 = vpop.permute.xlu0 %1231
  %1233 = vrot.lane.b32.xlu0 %v628, 32
  %v1234 = vpop.permute.xlu0 %1233
  %v1238 = vsel %vm299, %v1155, 0
  %v1241 = vsel %vm299, %v1228, 0
  %1243 = vmatprep.subr.mxu0 0.0
  %1244 = vmatpush1.msra.mxu0 %v1232
  %1245 = vmatprep.subr.mxu0 0.0
  %1246 = vmatpush1.msra.mxu0 %v1234
  %1247 = vmatprep.subr.mxu0 0.0
  %1248 = vmatpush1.msra.mxu0 0.0
  %1249 = vmatprep.subr.mxu0 0.0
  %1250 = vmatpush1.msra.mxu0 0.0
  %1251 = vmatprep.subr.mxu0 0.0
  %1252 = vmatpush1.msra.mxu0 0.0
  %1253 = vmatprep.subr.mxu0 0.0
  %1254 = vmatpush1.msra.mxu0 0.0
  %1255 = vmatprep.subr.mxu0 0.0
  %1256 = vmatpush1.msra.mxu0 0.0
  %1257 = vmatprep.subr.mxu0 0.0
  %1258 = vmatpush1.msra.mxu0 0.0
  %1259 = vmatprep.subr.mxu0 0.0
  %1260 = vmatpush1.msra.mxu0 0.0
  %1261 = vmatprep.subr.mxu0 0.0
  %1262 = vmatpush1.msra.mxu0 0.0
  %1263 = vmatprep.subr.mxu0 0.0
  %1264 = vmatpush1.msra.mxu0 0.0
  %1265 = vmatprep.subr.mxu0 0.0
  %1266 = vmatpush1.msra.mxu0 0.0
  %1267 = vmatprep.subr.mxu0 0.0
  %1268 = vmatpush1.msra.mxu0 0.0
  %1269 = vmatprep.subr.mxu0 0.0
  %1270 = vmatpush1.msra.mxu0 0.0
  %1271 = vmatprep.subr.mxu0 0.0
  %1272 = vmatpush1.msra.mxu0 0.0
  %1273 = vmatprep.subr.mxu0 0.0
  %1274 = vmatpush1.msra.mxu0 0.0
  %1275 = vmatprep.subr.mxu0 0.0
  %1276 = vmatpush1.msra.mxu0 0.0
  %1277 = vmatprep.subr.mxu0 0.0
  %1278 = vmatpush1.msra.mxu0 0.0
  %1279 = vmatprep.subr.mxu0 0.0
  %1280 = vmatpush1.msra.mxu0 0.0
  %1281 = vmatprep.subr.mxu0 0.0
  %1282 = vmatpush1.msra.mxu0 0.0
  %1283 = vmatprep.subr.mxu0 0.0
  %1284 = vmatpush1.msra.mxu0 0.0
  %1285 = vmatprep.subr.mxu0 0.0
  %1286 = vmatpush1.msra.mxu0 0.0
  %1287 = vmatprep.subr.mxu0 0.0
  %1288 = vmatpush1.msra.mxu0 0.0
  %1289 = vmatprep.subr.mxu0 0.0
  %1290 = vmatpush1.msra.mxu0 0.0
  %1291 = vmatprep.subr.mxu0 0.0
  %1292 = vmatpush1.msra.mxu0 0.0
  %1293 = vmatprep.subr.mxu0 0.0
  %1294 = vmatpush1.msra.mxu0 0.0
  %1295 = vmatprep.subr.mxu0 0.0
  %1296 = vmatpush1.msra.mxu0 0.0
  %1297 = vmatprep.subr.mxu0 0.0
  %1298 = vmatpush1.msra.mxu0 0.0
  %1299 = vmatprep.subr.mxu0 0.0
  %1300 = vmatpush1.msra.mxu0 0.0
  %1301 = vmatprep.subr.mxu0 0.0
  %1302 = vmatpush1.msra.mxu0 0.0
  %1303 = vmatprep.subr.mxu0 0.0
  %1304 = vmatpush1.msra.mxu0 0.0
  %1305 = vmatprep.subr.mxu0 0.0
  %1306 = vmatpush1.msra.mxu0 0.0
  %1307 = vmatprep.mubr.f32.mxu0 0.0
  %1308 = vmatmul.mubr.f32.gmra.mrb[0].mxu0 %v1238
  %v1309 = vpop.f32.mrb[0].mxu0
  %v1310 = vadd.f32 0.0, %v1309
  %v1311 = vpop.f32.mrb[0].mxu0
  %1312 = vmatprep.mubr.f32.mxu0 0.0
  %1313 = vmatmul.mubr.f32.gmra.mrb[0].mxu0 %v1241
  %v1314 = vpop.f32.mrb[0].mxu0
  %v1315 = vadd.f32 0.0, %v1314
  %v1316 = vpop.f32.mrb[0].mxu0
  %1317 = vdwg.mxu0
  %1318 = vrot.lane.b32.xlu0 %v23, 32
  %v1319 = vpop.permute.xlu0 %1318
  %1320 = vrot.lane.b32.xlu0 %v24, 32
  %v1321 = vpop.permute.xlu0 %1320
  %v1325 = vsel %vm299, %v549, 0
  %v1328 = vsel %vm299, %v622, 0
  %1330 = vmatprep.subr.mxu0 0.0
  %1331 = vmatpush1.msra.mxu0 %v1319
  %1332 = vmatprep.subr.mxu0 0.0
  %1333 = vmatpush1.msra.mxu0 %v1321
  %1334 = vmatprep.subr.mxu0 0.0
  %1335 = vmatpush1.msra.mxu0 0.0
  %1336 = vmatprep.subr.mxu0 0.0
  %1337 = vmatpush1.msra.mxu0 0.0
  %1338 = vmatprep.subr.mxu0 0.0
  %1339 = vmatpush1.msra.mxu0 0.0
  %1340 = vmatprep.subr.mxu0 0.0
  %1341 = vmatpush1.msra.mxu0 0.0
  %1342 = vmatprep.subr.mxu0 0.0
  %1343 = vmatpush1.msra.mxu0 0.0
  %1344 = vmatprep.subr.mxu0 0.0
  %1345 = vmatpush1.msra.mxu0 0.0
  %1346 = vmatprep.subr.mxu0 0.0
  %1347 = vmatpush1.msra.mxu0 0.0
  %1348 = vmatprep.subr.mxu0 0.0
  %1349 = vmatpush1.msra.mxu0 0.0
  %1350 = vmatprep.subr.mxu0 0.0
  %1351 = vmatpush1.msra.mxu0 0.0
  %1352 = vmatprep.subr.mxu0 0.0
  %1353 = vmatpush1.msra.mxu0 0.0
  %1354 = vmatprep.subr.mxu0 0.0
  %1355 = vmatpush1.msra.mxu0 0.0
  %1356 = vmatprep.subr.mxu0 0.0
  %1357 = vmatpush1.msra.mxu0 0.0
  %1358 = vmatprep.subr.mxu0 0.0
  %1359 = vmatpush1.msra.mxu0 0.0
  %1360 = vmatprep.subr.mxu0 0.0
  %1361 = vmatpush1.msra.mxu0 0.0
  %1362 = vmatprep.subr.mxu0 0.0
  %1363 = vmatpush1.msra.mxu0 0.0
  %1364 = vmatprep.subr.mxu0 0.0
  %1365 = vmatpush1.msra.mxu0 0.0
  %1366 = vmatprep.subr.mxu0 0.0
  %1367 = vmatpush1.msra.mxu0 0.0
  %1368 = vmatprep.subr.mxu0 0.0
  %1369 = vmatpush1.msra.mxu0 0.0
  %1370 = vmatprep.subr.mxu0 0.0
  %1371 = vmatpush1.msra.mxu0 0.0
  %1372 = vmatprep.subr.mxu0 0.0
  %1373 = vmatpush1.msra.mxu0 0.0
  %1374 = vmatprep.subr.mxu0 0.0
  %1375 = vmatpush1.msra.mxu0 0.0
  %1376 = vmatprep.subr.mxu0 0.0
  %1377 = vmatpush1.msra.mxu0 0.0
  %1378 = vmatprep.subr.mxu0 0.0
  %1379 = vmatpush1.msra.mxu0 0.0
  %1380 = vmatprep.subr.mxu0 0.0
  %1381 = vmatpush1.msra.mxu0 0.0
  %1382 = vmatprep.subr.mxu0 0.0
  %1383 = vmatpush1.msra.mxu0 0.0
  %1384 = vmatprep.subr.mxu0 0.0
  %1385 = vmatpush1.msra.mxu0 0.0
  %1386 = vmatprep.subr.mxu0 0.0
  %1387 = vmatpush1.msra.mxu0 0.0
  %1388 = vmatprep.subr.mxu0 0.0
  %1389 = vmatpush1.msra.mxu0 0.0
  %1390 = vmatprep.subr.mxu0 0.0
  %1391 = vmatpush1.msra.mxu0 0.0
  %1392 = vmatprep.subr.mxu0 0.0
  %1393 = vmatpush1.msra.mxu0 0.0
  %1394 = vmatprep.mubr.f32.mxu0 0.0
  %1395 = vmatmul.mubr.f32.gmra.mrb[0].mxu0 %v1325
  %v1396 = vpop.f32.mrb[0].mxu0
  %v1397 = vadd.f32 %v1310, %v1396
  %v1398 = vpop.f32.mrb[0].mxu0
  %1399 = vmatprep.mubr.f32.mxu0 0.0
  %1400 = vmatmul.mubr.f32.gmra.mrb[0].mxu0 %v1328
  %v1401 = vpop.f32.mrb[0].mxu0
  %v1402 = vadd.f32 %v1315, %v1401
  %v1403 = vpop.f32.mrb[0].mxu0
  %1404 = vdwg.mxu0
  %v1405 = vld [vmem:[%s2 + $0xa0] sm:$0x1]
  %v1406 = vlaneseq
  %v1407 = vshrl.u32 %v1406, 7
  %v1408 = vsub.s32 0, %v1407
  %v1409 = vrot.slane %v1405, %v1408
  %1411 = vrot.lane.b32.xlu0 %v1409, 32
  %v1412 = vpop.permute.xlu0 %1411
  %v1414 = vadd.f32 %v1397, %v1412
  %v1415 = vadd.f32 %v1402, %v1412
  %v1416 = vld [vmem:[%s2 + $0xa3] sm:$0x1]
  %v1417 = vadd.f32 %v14, %v1414
  %v1418 = vadd.f32 %v15, %v1415
  %v1419 = vsel %vm32, %v1417, 0.0
  %1420 = vadd.xlane.f32.xlu0 %v1419
  %v1421 = vpop.xlane.xlu0 %1420
  %v1422 = vsel %vm32, %v1418, 0.0
  %1423 = vadd.xlane.f32.xlu0 %v1422
  %v1424 = vpop.xlane.xlu0 %1423
  %v1425 = vrcp.pop 32.0
  %v1426 = vmul.f32 %v1421, %v1425
  %v1427 = vmul.f32 %v1424, %v1425
  %v1428 = vsub.f32 %v1417, %v1426
  %v1429 = vsub.f32 %v1418, %v1427
  %v1430 = vmul.f32 %v1428, %v1428
  %v1431 = vmul.f32 %v1429, %v1429
  %v1432 = vsel %vm32, %v1430, 0.0
  %1433 = vadd.xlane.f32.xlu0 %v1432
  %v1434 = vpop.xlane.xlu0 %1433
  %v1435 = vsel %vm32, %v1431, 0.0
  %1436 = vadd.xlane.f32.xlu0 %v1435
  %v1437 = vpop.xlane.xlu0 %1436
  %v1438 = vmul.f32 %v1434, %v1425
  %v1439 = vmul.f32 %v1437, %v1425
  %v1440 = vadd.f32 %v1438, 1e-06
  %v1441 = vadd.f32 %v1439, 1e-06
  %v1442 = vrsqrt.pop %v1440
  %v1443 = vrsqrt.pop %v1441
  %v1444 = vmul.f32 %v1428, %v1442
  %v1445 = vmul.f32 %v1429, %v1443
  %v1446 = vlaneseq
  %v1447 = vshrl.u32 %v1446, 7
  %v1448 = vsub.s32 0, %v1447
  %v1449 = vrot.slane %v1416, %v1448
  %v1450 = vmul.f32 %v1444, %v1449
  %v1451 = vmul.f32 %v1445, %v1449
  %1453 = vrot.lane.b32.xlu0 %v1449, 96
  %v1454 = vpop.permute.xlu0 %1453
  %v1456 = vadd.f32 %v1450, %v1454
  %v1457 = vadd.f32 %v1451, %v1454
  %v1458 = vld [vmem:[%s2 + $0x20] sm:$0xff]
  %v1459 = vld [vmem:[%s2 + $0x28] sm:$0xff]
  %v1460 = vld [vmem:[%s2 + $0x30] sm:$0xff]
  %v1461 = vld [vmem:[%s2 + $0x38] sm:$0xff]
  %v1462 = vld [vmem:[%s2 + $0xa1] sm:$0x1]
  %v1463 = vlaneseq
  %v1464 = vshrl.u32 %v1463, 7
  %v1465 = vsub.s32 0, %v1464
  %v1466 = vrot.slane %v1462, %v1465
  %v1468 = vsel %vm32, %v1456, 0
  %v1471 = vsel %vm32, %v1457, 0
  %1473 = vmatprep.subr.mxu0 0.0
  %1474 = vmatpush1.msra.mxu0 %v1458
  %1475 = vmatprep.subr.mxu0 0.0
  %1476 = vmatpush1.msra.mxu0 %v1459
  %1477 = vmatprep.subr.mxu0 0.0
  %1478 = vmatpush1.msra.mxu0 %v1460
  %1479 = vmatprep.subr.mxu0 0.0
  %1480 = vmatpush1.msra.mxu0 %v1461
  %1481 = vmatprep.subr.mxu0 0.0
  %1482 = vmatpush1.msra.mxu0 0.0
  %1483 = vmatprep.subr.mxu0 0.0
  %1484 = vmatpush1.msra.mxu0 0.0
  %1485 = vmatprep.subr.mxu0 0.0
  %1486 = vmatpush1.msra.mxu0 0.0
  %1487 = vmatprep.subr.mxu0 0.0
  %1488 = vmatpush1.msra.mxu0 0.0
  %1489 = vmatprep.subr.mxu0 0.0
  %1490 = vmatpush1.msra.mxu0 0.0
  %1491 = vmatprep.subr.mxu0 0.0
  %1492 = vmatpush1.msra.mxu0 0.0
  %1493 = vmatprep.subr.mxu0 0.0
  %1494 = vmatpush1.msra.mxu0 0.0
  %1495 = vmatprep.subr.mxu0 0.0
  %1496 = vmatpush1.msra.mxu0 0.0
  %1497 = vmatprep.subr.mxu0 0.0
  %1498 = vmatpush1.msra.mxu0 0.0
  %1499 = vmatprep.subr.mxu0 0.0
  %1500 = vmatpush1.msra.mxu0 0.0
  %1501 = vmatprep.subr.mxu0 0.0
  %1502 = vmatpush1.msra.mxu0 0.0
  %1503 = vmatprep.subr.mxu0 0.0
  %1504 = vmatpush1.msra.mxu0 0.0
  %1505 = vmatprep.subr.mxu0 0.0
  %1506 = vmatpush1.msra.mxu0 0.0
  %1507 = vmatprep.subr.mxu0 0.0
  %1508 = vmatpush1.msra.mxu0 0.0
  %1509 = vmatprep.subr.mxu0 0.0
  %1510 = vmatpush1.msra.mxu0 0.0
  %1511 = vmatprep.subr.mxu0 0.0
  %1512 = vmatpush1.msra.mxu0 0.0
  %1513 = vmatprep.subr.mxu0 0.0
  %1514 = vmatpush1.msra.mxu0 0.0
  %1515 = vmatprep.subr.mxu0 0.0
  %1516 = vmatpush1.msra.mxu0 0.0
  %1517 = vmatprep.subr.mxu0 0.0
  %1518 = vmatpush1.msra.mxu0 0.0
  %1519 = vmatprep.subr.mxu0 0.0
  %1520 = vmatpush1.msra.mxu0 0.0
  %1521 = vmatprep.subr.mxu0 0.0
  %1522 = vmatpush1.msra.mxu0 0.0
  %1523 = vmatprep.subr.mxu0 0.0
  %1524 = vmatpush1.msra.mxu0 0.0
  %1525 = vmatprep.subr.mxu0 0.0
  %1526 = vmatpush1.msra.mxu0 0.0
  %1527 = vmatprep.subr.mxu0 0.0
  %1528 = vmatpush1.msra.mxu0 0.0
  %1529 = vmatprep.subr.mxu0 0.0
  %1530 = vmatpush1.msra.mxu0 0.0
  %1531 = vmatprep.subr.mxu0 0.0
  %1532 = vmatpush1.msra.mxu0 0.0
  %1533 = vmatprep.subr.mxu0 0.0
  %1534 = vmatpush1.msra.mxu0 0.0
  %1535 = vmatprep.subr.mxu0 0.0
  %1536 = vmatpush1.msra.mxu0 0.0
  %1537 = vmatprep.mubr.f32.mxu0 0.0
  %1538 = vmatmul.mubr.f32.gmra.mrb[0].mxu0 %v1468
  %v1539 = vpop.f32.mrb[0].mxu0
  %v1540 = vadd.f32 %v1466, %v1539
  %v1541 = vpop.f32.mrb[0].mxu0
  %1542 = vmatprep.mubr.f32.mxu0 0.0
  %1543 = vmatmul.mubr.f32.gmra.mrb[0].mxu0 %v1471
  %v1544 = vpop.f32.mrb[0].mxu0
  %v1545 = vadd.f32 %v1466, %v1544
  %v1546 = vpop.f32.mrb[0].mxu0
  %1547 = vdwg.mxu0
  %1552 = vrot.lane.b32.xlu0 %v1458, 96
  %v1553 = vpop.permute.xlu0 %1552
  %1554 = vrot.lane.b32.xlu0 %v1459, 96
  %v1555 = vpop.permute.xlu0 %1554
  %1556 = vrot.lane.b32.xlu0 %v1460, 96
  %v1557 = vpop.permute.xlu0 %1556
  %1558 = vrot.lane.b32.xlu0 %v1461, 96
  %v1559 = vpop.permute.xlu0 %1558
  %1565 = vrot.lane.b32.xlu0 %v1466, 96
  %v1566 = vpop.permute.xlu0 %1565
  %v1569 = vsel %vm32, %v16, 0
  %v1572 = vsel %vm32, %v17, 0
  %1574 = vmatprep.subr.mxu0 0.0
  %1575 = vmatpush1.msra.mxu0 %v1553
  %1576 = vmatprep.subr.mxu0 0.0
  %1577 = vmatpush1.msra.mxu0 %v1555
  %1578 = vmatprep.subr.mxu0 0.0
  %1579 = vmatpush1.msra.mxu0 %v1557
  %1580 = vmatprep.subr.mxu0 0.0
  %1581 = vmatpush1.msra.mxu0 %v1559
  %1582 = vmatprep.subr.mxu0 0.0
  %1583 = vmatpush1.msra.mxu0 0.0
  %1584 = vmatprep.subr.mxu0 0.0
  %1585 = vmatpush1.msra.mxu0 0.0
  %1586 = vmatprep.subr.mxu0 0.0
  %1587 = vmatpush1.msra.mxu0 0.0
  %1588 = vmatprep.subr.mxu0 0.0
  %1589 = vmatpush1.msra.mxu0 0.0
  %1590 = vmatprep.subr.mxu0 0.0
  %1591 = vmatpush1.msra.mxu0 0.0
  %1592 = vmatprep.subr.mxu0 0.0
  %1593 = vmatpush1.msra.mxu0 0.0
  %1594 = vmatprep.subr.mxu0 0.0
  %1595 = vmatpush1.msra.mxu0 0.0
  %1596 = vmatprep.subr.mxu0 0.0
  %1597 = vmatpush1.msra.mxu0 0.0
  %1598 = vmatprep.subr.mxu0 0.0
  %1599 = vmatpush1.msra.mxu0 0.0
  %1600 = vmatprep.subr.mxu0 0.0
  %1601 = vmatpush1.msra.mxu0 0.0
  %1602 = vmatprep.subr.mxu0 0.0
  %1603 = vmatpush1.msra.mxu0 0.0
  %1604 = vmatprep.subr.mxu0 0.0
  %1605 = vmatpush1.msra.mxu0 0.0
  %1606 = vmatprep.subr.mxu0 0.0
  %1607 = vmatpush1.msra.mxu0 0.0
  %1608 = vmatprep.subr.mxu0 0.0
  %1609 = vmatpush1.msra.mxu0 0.0
  %1610 = vmatprep.subr.mxu0 0.0
  %1611 = vmatpush1.msra.mxu0 0.0
  %1612 = vmatprep.subr.mxu0 0.0
  %1613 = vmatpush1.msra.mxu0 0.0
  %1614 = vmatprep.subr.mxu0 0.0
  %1615 = vmatpush1.msra.mxu0 0.0
  %1616 = vmatprep.subr.mxu0 0.0
  %1617 = vmatpush1.msra.mxu0 0.0
  %1618 = vmatprep.subr.mxu0 0.0
  %1619 = vmatpush1.msra.mxu0 0.0
  %1620 = vmatprep.subr.mxu0 0.0
  %1621 = vmatpush1.msra.mxu0 0.0
  %1622 = vmatprep.subr.mxu0 0.0
  %1623 = vmatpush1.msra.mxu0 0.0
  %1624 = vmatprep.subr.mxu0 0.0
  %1625 = vmatpush1.msra.mxu0 0.0
  %1626 = vmatprep.subr.mxu0 0.0
  %1627 = vmatpush1.msra.mxu0 0.0
  %1628 = vmatprep.subr.mxu0 0.0
  %1629 = vmatpush1.msra.mxu0 0.0
  %1630 = vmatprep.subr.mxu0 0.0
  %1631 = vmatpush1.msra.mxu0 0.0
  %1632 = vmatprep.subr.mxu0 0.0
  %1633 = vmatpush1.msra.mxu0 0.0
  %1634 = vmatprep.subr.mxu0 0.0
  %1635 = vmatpush1.msra.mxu0 0.0
  %1636 = vmatprep.subr.mxu0 0.0
  %1637 = vmatpush1.msra.mxu0 0.0
  %1638 = vmatprep.mubr.f32.mxu0 0.0
  %1639 = vmatmul.mubr.f32.gmra.mrb[0].mxu0 %v1569
  %v1640 = vpop.f32.mrb[0].mxu0
  %v1641 = vadd.f32 %v1566, %v1640
  %v1642 = vpop.f32.mrb[0].mxu0
  %1643 = vmatprep.mubr.f32.mxu0 0.0
  %1644 = vmatmul.mubr.f32.gmra.mrb[0].mxu0 %v1572
  %v1645 = vpop.f32.mrb[0].mxu0
  %v1646 = vadd.f32 %v1566, %v1645
  %v1647 = vpop.f32.mrb[0].mxu0
  %1648 = vdwg.mxu0
  %1649 = vrot.lane.b32.xlu0 %v1458, 64
  %v1650 = vpop.permute.xlu0 %1649
  %1651 = vrot.lane.b32.xlu0 %v1459, 64
  %v1652 = vpop.permute.xlu0 %1651
  %1653 = vrot.lane.b32.xlu0 %v1460, 64
  %v1654 = vpop.permute.xlu0 %1653
  %1655 = vrot.lane.b32.xlu0 %v1461, 64
  %v1656 = vpop.permute.xlu0 %1655
  %1661 = vrot.lane.b32.xlu0 %v1466, 64
  %v1662 = vpop.permute.xlu0 %1661
  %1664 = vmatprep.subr.mxu0 0.0
  %1665 = vmatpush1.msra.mxu0 %v1650
  %1666 = vmatprep.subr.mxu0 0.0
  %1667 = vmatpush1.msra.mxu0 %v1652
  %1668 = vmatprep.subr.mxu0 0.0
  %1669 = vmatpush1.msra.mxu0 %v1654
  %1670 = vmatprep.subr.mxu0 0.0
  %1671 = vmatpush1.msra.mxu0 %v1656
  %1672 = vmatprep.subr.mxu0 0.0
  %1673 = vmatpush1.msra.mxu0 0.0
  %1674 = vmatprep.subr.mxu0 0.0
  %1675 = vmatpush1.msra.mxu0 0.0
  %1676 = vmatprep.subr.mxu0 0.0
  %1677 = vmatpush1.msra.mxu0 0.0
  %1678 = vmatprep.subr.mxu0 0.0
  %1679 = vmatpush1.msra.mxu0 0.0
  %1680 = vmatprep.subr.mxu0 0.0
  %1681 = vmatpush1.msra.mxu0 0.0
  %1682 = vmatprep.subr.mxu0 0.0
  %1683 = vmatpush1.msra.mxu0 0.0
  %1684 = vmatprep.subr.mxu0 0.0
  %1685 = vmatpush1.msra.mxu0 0.0
  %1686 = vmatprep.subr.mxu0 0.0
  %1687 = vmatpush1.msra.mxu0 0.0
  %1688 = vmatprep.subr.mxu0 0.0
  %1689 = vmatpush1.msra.mxu0 0.0
  %1690 = vmatprep.subr.mxu0 0.0
  %1691 = vmatpush1.msra.mxu0 0.0
  %1692 = vmatprep.subr.mxu0 0.0
  %1693 = vmatpush1.msra.mxu0 0.0
  %1694 = vmatprep.subr.mxu0 0.0
  %1695 = vmatpush1.msra.mxu0 0.0
  %1696 = vmatprep.subr.mxu0 0.0
  %1697 = vmatpush1.msra.mxu0 0.0
  %1698 = vmatprep.subr.mxu0 0.0
  %1699 = vmatpush1.msra.mxu0 0.0
  %1700 = vmatprep.subr.mxu0 0.0
  %1701 = vmatpush1.msra.mxu0 0.0
  %1702 = vmatprep.subr.mxu0 0.0
  %1703 = vmatpush1.msra.mxu0 0.0
  %1704 = vmatprep.subr.mxu0 0.0
  %1705 = vmatpush1.msra.mxu0 0.0
  %1706 = vmatprep.subr.mxu0 0.0
  %1707 = vmatpush1.msra.mxu0 0.0
  %1708 = vmatprep.subr.mxu0 0.0
  %1709 = vmatpush1.msra.mxu0 0.0
  %1710 = vmatprep.subr.mxu0 0.0
  %1711 = vmatpush1.msra.mxu0 0.0
  %1712 = vmatprep.subr.mxu0 0.0
  %1713 = vmatpush1.msra.mxu0 0.0
  %1714 = vmatprep.subr.mxu0 0.0
  %1715 = vmatpush1.msra.mxu0 0.0
  %1716 = vmatprep.subr.mxu0 0.0
  %1717 = vmatpush1.msra.mxu0 0.0
  %1718 = vmatprep.subr.mxu0 0.0
  %1719 = vmatpush1.msra.mxu0 0.0
  %1720 = vmatprep.subr.mxu0 0.0
  %1721 = vmatpush1.msra.mxu0 0.0
  %1722 = vmatprep.subr.mxu0 0.0
  %1723 = vmatpush1.msra.mxu0 0.0
  %1724 = vmatprep.subr.mxu0 0.0
  %1725 = vmatpush1.msra.mxu0 0.0
  %1726 = vmatprep.subr.mxu0 0.0
  %1727 = vmatpush1.msra.mxu0 0.0
  %1728 = vmatprep.mubr.f32.mxu0 0.0
  %1729 = vmatmul.mubr.f32.gmra.mrb[0].mxu0 %v1569
  %v1730 = vpop.f32.mrb[0].mxu0
  %v1731 = vadd.f32 %v1662, %v1730
  %v1732 = vpop.f32.mrb[0].mxu0
  %1733 = vmatprep.mubr.f32.mxu0 0.0
  %1734 = vmatmul.mubr.f32.gmra.mrb[0].mxu0 %v1572
  %v1735 = vpop.f32.mrb[0].mxu0
  %v1736 = vadd.f32 %v1662, %v1735
  %v1737 = vpop.f32.mrb[0].mxu0
  %1738 = vdwg.mxu0
  %v1740 = vsel %vm299, %v1540, 0
  %v1743 = vsel %vm299, %v1641, 0
  %1745 = vmatprep.subr.mxu0 0.0
  %1746 = vmatpush1.xpose.msra.mxu0 %v1743
  %1747 = vmatprep.subr.mxu0 0.0
  %1748 = vmatpush1.xpose.msra.mxu0 0.0
  %1749 = vmatprep.subr.mxu0 0.0
  %1750 = vmatpush1.xpose.msra.mxu0 0.0
  %1751 = vmatprep.subr.mxu0 0.0
  %1752 = vmatpush1.xpose.msra.mxu0 0.0
  %1753 = vmatprep.subr.mxu0 0.0
  %1754 = vmatpush1.xpose.msra.mxu0 0.0
  %1755 = vmatprep.subr.mxu0 0.0
  %1756 = vmatpush1.xpose.msra.mxu0 0.0
  %1757 = vmatprep.subr.mxu0 0.0
  %1758 = vmatpush1.xpose.msra.mxu0 0.0
  %1759 = vmatprep.subr.mxu0 0.0
  %1760 = vmatpush1.xpose.msra.mxu0 0.0
  %1761 = vmatprep.subr.mxu0 0.0
  %1762 = vmatpush1.xpose.msra.mxu0 0.0
  %1763 = vmatprep.subr.mxu0 0.0
  %1764 = vmatpush1.xpose.msra.mxu0 0.0
  %1765 = vmatprep.subr.mxu0 0.0
  %1766 = vmatpush1.xpose.msra.mxu0 0.0
  %1767 = vmatprep.subr.mxu0 0.0
  %1768 = vmatpush1.xpose.msra.mxu0 0.0
  %1769 = vmatprep.subr.mxu0 0.0
  %1770 = vmatpush1.xpose.msra.mxu0 0.0
  %1771 = vmatprep.subr.mxu0 0.0
  %1772 = vmatpush1.xpose.msra.mxu0 0.0
  %1773 = vmatprep.subr.mxu0 0.0
  %1774 = vmatpush1.xpose.msra.mxu0 0.0
  %1775 = vmatprep.subr.mxu0 0.0
  %1776 = vmatpush1.xpose.msra.mxu0 0.0
  %1777 = vmatprep.subr.mxu0 0.0
  %1778 = vmatpush1.xpose.msra.mxu0 0.0
  %1779 = vmatprep.subr.mxu0 0.0
  %1780 = vmatpush1.xpose.msra.mxu0 0.0
  %1781 = vmatprep.subr.mxu0 0.0
  %1782 = vmatpush1.xpose.msra.mxu0 0.0
  %1783 = vmatprep.subr.mxu0 0.0
  %1784 = vmatpush1.xpose.msra.mxu0 0.0
  %1785 = vmatprep.subr.mxu0 0.0
  %1786 = vmatpush1.xpose.msra.mxu0 0.0
  %1787 = vmatprep.subr.mxu0 0.0
  %1788 = vmatpush1.xpose.msra.mxu0 0.0
  %1789 = vmatprep.subr.mxu0 0.0
  %1790 = vmatpush1.xpose.msra.mxu0 0.0
  %1791 = vmatprep.subr.mxu0 0.0
  %1792 = vmatpush1.xpose.msra.mxu0 0.0
  %1793 = vmatprep.subr.mxu0 0.0
  %1794 = vmatpush1.xpose.msra.mxu0 0.0
  %1795 = vmatprep.subr.mxu0 0.0
  %1796 = vmatpush1.xpose.msra.mxu0 0.0
  %1797 = vmatprep.subr.mxu0 0.0
  %1798 = vmatpush1.xpose.msra.mxu0 0.0
  %1799 = vmatprep.subr.mxu0 0.0
  %1800 = vmatpush1.xpose.msra.mxu0 0.0
  %1801 = vmatprep.subr.mxu0 0.0
  %1802 = vmatpush1.xpose.msra.mxu0 0.0
  %1803 = vmatprep.subr.mxu0 0.0
  %1804 = vmatpush1.xpose.msra.mxu0 0.0
  %1805 = vmatprep.subr.mxu0 0.0
  %1806 = vmatpush1.xpose.msra.mxu0 0.0
  %1807 = vmatprep.subr.mxu0 0.0
  %1808 = vmatpush1.xpose.msra.mxu0 0.0
  %1809 = vmatprep.mubr.f32.mxu0 0.0
  %1810 = vmatmul.mubr.f32.gmra.mrb[0].mxu0 %v1740
  %v1811 = vpop.f32.mrb[0].mxu0
  %v1812 = vadd.f32 0.0, %v1811
  %v1813 = vpop.f32.mrb[0].mxu0
  %1814 = vdwg.mxu0
  %v1816 = vsel %vm299, %v1545, 0
  %v1819 = vsel %vm299, %v1646, 0
  %1821 = vmatprep.subr.mxu0 0.0
  %1822 = vmatpush1.xpose.msra.mxu0 %v1819
  %1823 = vmatprep.subr.mxu0 0.0
  %1824 = vmatpush1.xpose.msra.mxu0 0.0
  %1825 = vmatprep.subr.mxu0 0.0
  %1826 = vmatpush1.xpose.msra.mxu0 0.0
  %1827 = vmatprep.subr.mxu0 0.0
  %1828 = vmatpush1.xpose.msra.mxu0 0.0
  %1829 = vmatprep.subr.mxu0 0.0
  %1830 = vmatpush1.xpose.msra.mxu0 0.0
  %1831 = vmatprep.subr.mxu0 0.0
  %1832 = vmatpush1.xpose.msra.mxu0 0.0
  %1833 = vmatprep.subr.mxu0 0.0
  %1834 = vmatpush1.xpose.msra.mxu0 0.0
  %1835 = vmatprep.subr.mxu0 0.0
  %1836 = vmatpush1.xpose.msra.mxu0 0.0
  %1837 = vmatprep.subr.mxu0 0.0
  %1838 = vmatpush1.xpose.msra.mxu0 0.0
  %1839 = vmatprep.subr.mxu0 0.0
  %1840 = vmatpush1.xpose.msra.mxu0 0.0
  %1841 = vmatprep.subr.mxu0 0.0
  %1842 = vmatpush1.xpose.msra.mxu0 0.0
  %1843 = vmatprep.subr.mxu0 0.0
  %1844 = vmatpush1.xpose.msra.mxu0 0.0
  %1845 = vmatprep.subr.mxu0 0.0
  %1846 = vmatpush1.xpose.msra.mxu0 0.0
  %1847 = vmatprep.subr.mxu0 0.0
  %1848 = vmatpush1.xpose.msra.mxu0 0.0
  %1849 = vmatprep.subr.mxu0 0.0
  %1850 = vmatpush1.xpose.msra.mxu0 0.0
  %1851 = vmatprep.subr.mxu0 0.0
  %1852 = vmatpush1.xpose.msra.mxu0 0.0
  %1853 = vmatprep.subr.mxu0 0.0
  %1854 = vmatpush1.xpose.msra.mxu0 0.0
  %1855 = vmatprep.subr.mxu0 0.0
  %1856 = vmatpush1.xpose.msra.mxu0 0.0
  %1857 = vmatprep.subr.mxu0 0.0
  %1858 = vmatpush1.xpose.msra.mxu0 0.0
  %1859 = vmatprep.subr.mxu0 0.0
  %1860 = vmatpush1.xpose.msra.mxu0 0.0
  %1861 = vmatprep.subr.mxu0 0.0
  %1862 = vmatpush1.xpose.msra.mxu0 0.0
  %1863 = vmatprep.subr.mxu0 0.0
  %1864 = vmatpush1.xpose.msra.mxu0 0.0
  %1865 = vmatprep.subr.mxu0 0.0
  %1866 = vmatpush1.xpose.msra.mxu0 0.0
  %1867 = vmatprep.subr.mxu0 0.0
  %1868 = vmatpush1.xpose.msra.mxu0 0.0
  %1869 = vmatprep.subr.mxu0 0.0
  %1870 = vmatpush1.xpose.msra.mxu0 0.0
  %1871 = vmatprep.subr.mxu0 0.0
  %1872 = vmatpush1.xpose.msra.mxu0 0.0
  %1873 = vmatprep.subr.mxu0 0.0
  %1874 = vmatpush1.xpose.msra.mxu0 0.0
  %1875 = vmatprep.subr.mxu0 0.0
  %1876 = vmatpush1.xpose.msra.mxu0 0.0
  %1877 = vmatprep.subr.mxu0 0.0
  %1878 = vmatpush1.xpose.msra.mxu0 0.0
  %1879 = vmatprep.subr.mxu0 0.0
  %1880 = vmatpush1.xpose.msra.mxu0 0.0
  %1881 = vmatprep.subr.mxu0 0.0
  %1882 = vmatpush1.xpose.msra.mxu0 0.0
  %1883 = vmatprep.subr.mxu0 0.0
  %1884 = vmatpush1.xpose.msra.mxu0 0.0
  %1885 = vmatprep.mubr.f32.mxu0 0.0
  %1886 = vmatmul.mubr.f32.gmra.mrb[0].mxu0 %v1816
  %v1887 = vpop.f32.mrb[0].mxu0
  %v1888 = vadd.f32 0.0, %v1887
  %v1889 = vpop.f32.mrb[0].mxu0
  %1890 = vdwg.mxu0
  %vm1891 = vcmp.gt.f32.partialorder %v21, 0.0
  %vm1892 = vcmp.gt.f32.partialorder %v22, 0.0
  %v1893 = vsel %vm1891, -1e+09, %v1812
  %v1894 = vsel %vm1892, -1e+09, %v1888
  %v1895 = vsel %vm456, %v1893, -inf
  %1896 = vmax.xlane.f32.xlu0 %v1895
  %v1897 = vpop.xlane.xlu0 %1896
  %v1898 = vsel %vm456, %v1894, -inf
  %1899 = vmax.xlane.f32.xlu0 %v1898
  %v1900 = vpop.xlane.xlu0 %1899
  %v1901 = vsub.f32 %v1893, %v1897
  %v1902 = vsub.f32 %v1894, %v1900
  %v1903 = vmul.f32 %v1901, 1.442695
  %v1904 = vpow.pop %v1903
  %v1905 = vmul.f32 %v1902, 1.442695
  %v1906 = vpow.pop %v1905
  %v1907 = vsel %vm456, %v1904, 0.0
  %1908 = vadd.xlane.f32.xlu0 %v1907
  %v1909 = vpop.xlane.xlu0 %1908
  %v1910 = vsel %vm456, %v1906, 0.0
  %1911 = vadd.xlane.f32.xlu0 %v1910
  %v1912 = vpop.xlane.xlu0 %1911
  %v1913 = vrcp.pop %v1909
  %v1914 = vmul.f32 %v1904, %v1913
  %v1915 = vrcp.pop %v1912
  %v1916 = vmul.f32 %v1906, %v1915
  %v1918 = vsel %vm456, %v1914, 0
  %1920 = vmatprep.subr.mxu0 0.0
  %1921 = vmatpush1.msra.mxu0 %v1731
  %1922 = vmatprep.subr.mxu0 0.0
  %1923 = vmatpush1.msra.mxu0 0.0
  %1924 = vmatprep.subr.mxu0 0.0
  %1925 = vmatpush1.msra.mxu0 0.0
  %1926 = vmatprep.subr.mxu0 0.0
  %1927 = vmatpush1.msra.mxu0 0.0
  %1928 = vmatprep.subr.mxu0 0.0
  %1929 = vmatpush1.msra.mxu0 0.0
  %1930 = vmatprep.subr.mxu0 0.0
  %1931 = vmatpush1.msra.mxu0 0.0
  %1932 = vmatprep.subr.mxu0 0.0
  %1933 = vmatpush1.msra.mxu0 0.0
  %1934 = vmatprep.subr.mxu0 0.0
  %1935 = vmatpush1.msra.mxu0 0.0
  %1936 = vmatprep.subr.mxu0 0.0
  %1937 = vmatpush1.msra.mxu0 0.0
  %1938 = vmatprep.subr.mxu0 0.0
  %1939 = vmatpush1.msra.mxu0 0.0
  %1940 = vmatprep.subr.mxu0 0.0
  %1941 = vmatpush1.msra.mxu0 0.0
  %1942 = vmatprep.subr.mxu0 0.0
  %1943 = vmatpush1.msra.mxu0 0.0
  %1944 = vmatprep.subr.mxu0 0.0
  %1945 = vmatpush1.msra.mxu0 0.0
  %1946 = vmatprep.subr.mxu0 0.0
  %1947 = vmatpush1.msra.mxu0 0.0
  %1948 = vmatprep.subr.mxu0 0.0
  %1949 = vmatpush1.msra.mxu0 0.0
  %1950 = vmatprep.subr.mxu0 0.0
  %1951 = vmatpush1.msra.mxu0 0.0
  %1952 = vmatprep.subr.mxu0 0.0
  %1953 = vmatpush1.msra.mxu0 0.0
  %1954 = vmatprep.subr.mxu0 0.0
  %1955 = vmatpush1.msra.mxu0 0.0
  %1956 = vmatprep.subr.mxu0 0.0
  %1957 = vmatpush1.msra.mxu0 0.0
  %1958 = vmatprep.subr.mxu0 0.0
  %1959 = vmatpush1.msra.mxu0 0.0
  %1960 = vmatprep.subr.mxu0 0.0
  %1961 = vmatpush1.msra.mxu0 0.0
  %1962 = vmatprep.subr.mxu0 0.0
  %1963 = vmatpush1.msra.mxu0 0.0
  %1964 = vmatprep.subr.mxu0 0.0
  %1965 = vmatpush1.msra.mxu0 0.0
  %1966 = vmatprep.subr.mxu0 0.0
  %1967 = vmatpush1.msra.mxu0 0.0
  %1968 = vmatprep.subr.mxu0 0.0
  %1969 = vmatpush1.msra.mxu0 0.0
  %1970 = vmatprep.subr.mxu0 0.0
  %1971 = vmatpush1.msra.mxu0 0.0
  %1972 = vmatprep.subr.mxu0 0.0
  %1973 = vmatpush1.msra.mxu0 0.0
  %1974 = vmatprep.subr.mxu0 0.0
  %1975 = vmatpush1.msra.mxu0 0.0
  %1976 = vmatprep.subr.mxu0 0.0
  %1977 = vmatpush1.msra.mxu0 0.0
  %1978 = vmatprep.subr.mxu0 0.0
  %1979 = vmatpush1.msra.mxu0 0.0
  %1980 = vmatprep.subr.mxu0 0.0
  %1981 = vmatpush1.msra.mxu0 0.0
  %1982 = vmatprep.subr.mxu0 0.0
  %1983 = vmatpush1.msra.mxu0 0.0
  %1984 = vmatprep.mubr.f32.mxu0 0.0
  %1985 = vmatmul.mubr.f32.gmra.mrb[0].mxu0 %v1918
  %v1986 = vpop.f32.mrb[0].mxu0
  %v1987 = vadd.f32 0.0, %v1986
  %v1988 = vpop.f32.mrb[0].mxu0
  %1989 = vdwg.mxu0
  %v1991 = vsel %vm456, %v1916, 0
  %1993 = vmatprep.subr.mxu0 0.0
  %1994 = vmatpush1.msra.mxu0 %v1736
  %1995 = vmatprep.subr.mxu0 0.0
  %1996 = vmatpush1.msra.mxu0 0.0
  %1997 = vmatprep.subr.mxu0 0.0
  %1998 = vmatpush1.msra.mxu0 0.0
  %1999 = vmatprep.subr.mxu0 0.0
  %2000 = vmatpush1.msra.mxu0 0.0
  %2001 = vmatprep.subr.mxu0 0.0
  %2002 = vmatpush1.msra.mxu0 0.0
  %2003 = vmatprep.subr.mxu0 0.0
  %2004 = vmatpush1.msra.mxu0 0.0
  %2005 = vmatprep.subr.mxu0 0.0
  %2006 = vmatpush1.msra.mxu0 0.0
  %2007 = vmatprep.subr.mxu0 0.0
  %2008 = vmatpush1.msra.mxu0 0.0
  %2009 = vmatprep.subr.mxu0 0.0
  %2010 = vmatpush1.msra.mxu0 0.0
  %2011 = vmatprep.subr.mxu0 0.0
  %2012 = vmatpush1.msra.mxu0 0.0
  %2013 = vmatprep.subr.mxu0 0.0
  %2014 = vmatpush1.msra.mxu0 0.0
  %2015 = vmatprep.subr.mxu0 0.0
  %2016 = vmatpush1.msra.mxu0 0.0
  %2017 = vmatprep.subr.mxu0 0.0
  %2018 = vmatpush1.msra.mxu0 0.0
  %2019 = vmatprep.subr.mxu0 0.0
  %2020 = vmatpush1.msra.mxu0 0.0
  %2021 = vmatprep.subr.mxu0 0.0
  %2022 = vmatpush1.msra.mxu0 0.0
  %2023 = vmatprep.subr.mxu0 0.0
  %2024 = vmatpush1.msra.mxu0 0.0
  %2025 = vmatprep.subr.mxu0 0.0
  %2026 = vmatpush1.msra.mxu0 0.0
  %2027 = vmatprep.subr.mxu0 0.0
  %2028 = vmatpush1.msra.mxu0 0.0
  %2029 = vmatprep.subr.mxu0 0.0
  %2030 = vmatpush1.msra.mxu0 0.0
  %2031 = vmatprep.subr.mxu0 0.0
  %2032 = vmatpush1.msra.mxu0 0.0
  %2033 = vmatprep.subr.mxu0 0.0
  %2034 = vmatpush1.msra.mxu0 0.0
  %2035 = vmatprep.subr.mxu0 0.0
  %2036 = vmatpush1.msra.mxu0 0.0
  %2037 = vmatprep.subr.mxu0 0.0
  %2038 = vmatpush1.msra.mxu0 0.0
  %2039 = vmatprep.subr.mxu0 0.0
  %2040 = vmatpush1.msra.mxu0 0.0
  %2041 = vmatprep.subr.mxu0 0.0
  %2042 = vmatpush1.msra.mxu0 0.0
  %2043 = vmatprep.subr.mxu0 0.0
  %2044 = vmatpush1.msra.mxu0 0.0
  %2045 = vmatprep.subr.mxu0 0.0
  %2046 = vmatpush1.msra.mxu0 0.0
  %2047 = vmatprep.subr.mxu0 0.0
  %2048 = vmatpush1.msra.mxu0 0.0
  %2049 = vmatprep.subr.mxu0 0.0
  %2050 = vmatpush1.msra.mxu0 0.0
  %2051 = vmatprep.subr.mxu0 0.0
  %2052 = vmatpush1.msra.mxu0 0.0
  %2053 = vmatprep.subr.mxu0 0.0
  %2054 = vmatpush1.msra.mxu0 0.0
  %2055 = vmatprep.subr.mxu0 0.0
  %2056 = vmatpush1.msra.mxu0 0.0
  %2057 = vmatprep.mubr.f32.mxu0 0.0
  %2058 = vmatmul.mubr.f32.gmra.mrb[0].mxu0 %v1991
  %v2059 = vpop.f32.mrb[0].mxu0
  %v2060 = vadd.f32 0.0, %v2059
  %v2061 = vpop.f32.mrb[0].mxu0
  %2062 = vdwg.mxu0
  %v2063 = vld [vmem:[%s2 + $0x20] sm:$0xff]
  %v2064 = vld [vmem:[%s2 + $0x28] sm:$0xff]
  %v2065 = vld [vmem:[%s2 + $0x30] sm:$0xff]
  %v2066 = vld [vmem:[%s2 + $0x38] sm:$0xff]
  %v2067 = vld [vmem:[%s2 + $0xa1] sm:$0x1]
  %v2068 = vlaneseq
  %v2069 = vshrl.u32 %v2068, 7
  %v2070 = vsub.s32 0, %v2069
  %v2071 = vrot.slane %v2067, %v2070
  %2076 = vrot.lane.b32.xlu0 %v2063, 112
  %v2077 = vpop.permute.xlu0 %2076
  %2078 = vrot.lane.b32.xlu0 %v2064, 112
  %v2079 = vpop.permute.xlu0 %2078
  %2080 = vrot.lane.b32.xlu0 %v2065, 112
  %v2081 = vpop.permute.xlu0 %2080
  %2082 = vrot.lane.b32.xlu0 %v2066, 112
  %v2083 = vpop.permute.xlu0 %2082
  %2089 = vrot.lane.b32.xlu0 %v2071, 112
  %v2090 = vpop.permute.xlu0 %2089
  %2092 = vmatprep.subr.mxu0 0.0
  %2093 = vmatpush1.msra.mxu0 %v2077
  %2094 = vmatprep.subr.mxu0 0.0
  %2095 = vmatpush1.msra.mxu0 %v2079
  %2096 = vmatprep.subr.mxu0 0.0
  %2097 = vmatpush1.msra.mxu0 %v2081
  %2098 = vmatprep.subr.mxu0 0.0
  %2099 = vmatpush1.msra.mxu0 %v2083
  %2100 = vmatprep.subr.mxu0 0.0
  %2101 = vmatpush1.msra.mxu0 0.0
  %2102 = vmatprep.subr.mxu0 0.0
  %2103 = vmatpush1.msra.mxu0 0.0
  %2104 = vmatprep.subr.mxu0 0.0
  %2105 = vmatpush1.msra.mxu0 0.0
  %2106 = vmatprep.subr.mxu0 0.0
  %2107 = vmatpush1.msra.mxu0 0.0
  %2108 = vmatprep.subr.mxu0 0.0
  %2109 = vmatpush1.msra.mxu0 0.0
  %2110 = vmatprep.subr.mxu0 0.0
  %2111 = vmatpush1.msra.mxu0 0.0
  %2112 = vmatprep.subr.mxu0 0.0
  %2113 = vmatpush1.msra.mxu0 0.0
  %2114 = vmatprep.subr.mxu0 0.0
  %2115 = vmatpush1.msra.mxu0 0.0
  %2116 = vmatprep.subr.mxu0 0.0
  %2117 = vmatpush1.msra.mxu0 0.0
  %2118 = vmatprep.subr.mxu0 0.0
  %2119 = vmatpush1.msra.mxu0 0.0
  %2120 = vmatprep.subr.mxu0 0.0
  %2121 = vmatpush1.msra.mxu0 0.0
  %2122 = vmatprep.subr.mxu0 0.0
  %2123 = vmatpush1.msra.mxu0 0.0
  %2124 = vmatprep.subr.mxu0 0.0
  %2125 = vmatpush1.msra.mxu0 0.0
  %2126 = vmatprep.subr.mxu0 0.0
  %2127 = vmatpush1.msra.mxu0 0.0
  %2128 = vmatprep.subr.mxu0 0.0
  %2129 = vmatpush1.msra.mxu0 0.0
  %2130 = vmatprep.subr.mxu0 0.0
  %2131 = vmatpush1.msra.mxu0 0.0
  %2132 = vmatprep.subr.mxu0 0.0
  %2133 = vmatpush1.msra.mxu0 0.0
  %2134 = vmatprep.subr.mxu0 0.0
  %2135 = vmatpush1.msra.mxu0 0.0
  %2136 = vmatprep.subr.mxu0 0.0
  %2137 = vmatpush1.msra.mxu0 0.0
  %2138 = vmatprep.subr.mxu0 0.0
  %2139 = vmatpush1.msra.mxu0 0.0
  %2140 = vmatprep.subr.mxu0 0.0
  %2141 = vmatpush1.msra.mxu0 0.0
  %2142 = vmatprep.subr.mxu0 0.0
  %2143 = vmatpush1.msra.mxu0 0.0
  %2144 = vmatprep.subr.mxu0 0.0
  %2145 = vmatpush1.msra.mxu0 0.0
  %2146 = vmatprep.subr.mxu0 0.0
  %2147 = vmatpush1.msra.mxu0 0.0
  %2148 = vmatprep.subr.mxu0 0.0
  %2149 = vmatpush1.msra.mxu0 0.0
  %2150 = vmatprep.subr.mxu0 0.0
  %2151 = vmatpush1.msra.mxu0 0.0
  %2152 = vmatprep.subr.mxu0 0.0
  %2153 = vmatpush1.msra.mxu0 0.0
  %2154 = vmatprep.subr.mxu0 0.0
  %2155 = vmatpush1.msra.mxu0 0.0
  %2156 = vmatprep.mubr.f32.mxu0 0.0
  %2157 = vmatmul.mubr.f32.gmra.mrb[0].mxu0 %v1468
  %v2158 = vpop.f32.mrb[0].mxu0
  %v2159 = vadd.f32 %v2090, %v2158
  %v2160 = vpop.f32.mrb[0].mxu0
  %2161 = vmatprep.mubr.f32.mxu0 0.0
  %2162 = vmatmul.mubr.f32.gmra.mrb[0].mxu0 %v1471
  %v2163 = vpop.f32.mrb[0].mxu0
  %v2164 = vadd.f32 %v2090, %v2163
  %v2165 = vpop.f32.mrb[0].mxu0
  %2166 = vdwg.mxu0
  %2167 = vrot.lane.b32.xlu0 %v2063, 80
  %v2168 = vpop.permute.xlu0 %2167
  %2169 = vrot.lane.b32.xlu0 %v2064, 80
  %v2170 = vpop.permute.xlu0 %2169
  %2171 = vrot.lane.b32.xlu0 %v2065, 80
  %v2172 = vpop.permute.xlu0 %2171
  %2173 = vrot.lane.b32.xlu0 %v2066, 80
  %v2174 = vpop.permute.xlu0 %2173
  %2179 = vrot.lane.b32.xlu0 %v2071, 80
  %v2180 = vpop.permute.xlu0 %2179
  %2182 = vmatprep.subr.mxu0 0.0
  %2183 = vmatpush1.msra.mxu0 %v2168
  %2184 = vmatprep.subr.mxu0 0.0
  %2185 = vmatpush1.msra.mxu0 %v2170
  %2186 = vmatprep.subr.mxu0 0.0
  %2187 = vmatpush1.msra.mxu0 %v2172
  %2188 = vmatprep.subr.mxu0 0.0
  %2189 = vmatpush1.msra.mxu0 %v2174
  %2190 = vmatprep.subr.mxu0 0.0
  %2191 = vmatpush1.msra.mxu0 0.0
  %2192 = vmatprep.subr.mxu0 0.0
  %2193 = vmatpush1.msra.mxu0 0.0
  %2194 = vmatprep.subr.mxu0 0.0
  %2195 = vmatpush1.msra.mxu0 0.0
  %2196 = vmatprep.subr.mxu0 0.0
  %2197 = vmatpush1.msra.mxu0 0.0
  %2198 = vmatprep.subr.mxu0 0.0
  %2199 = vmatpush1.msra.mxu0 0.0
  %2200 = vmatprep.subr.mxu0 0.0
  %2201 = vmatpush1.msra.mxu0 0.0
  %2202 = vmatprep.subr.mxu0 0.0
  %2203 = vmatpush1.msra.mxu0 0.0
  %2204 = vmatprep.subr.mxu0 0.0
  %2205 = vmatpush1.msra.mxu0 0.0
  %2206 = vmatprep.subr.mxu0 0.0
  %2207 = vmatpush1.msra.mxu0 0.0
  %2208 = vmatprep.subr.mxu0 0.0
  %2209 = vmatpush1.msra.mxu0 0.0
  %2210 = vmatprep.subr.mxu0 0.0
  %2211 = vmatpush1.msra.mxu0 0.0
  %2212 = vmatprep.subr.mxu0 0.0
  %2213 = vmatpush1.msra.mxu0 0.0
  %2214 = vmatprep.subr.mxu0 0.0
  %2215 = vmatpush1.msra.mxu0 0.0
  %2216 = vmatprep.subr.mxu0 0.0
  %2217 = vmatpush1.msra.mxu0 0.0
  %2218 = vmatprep.subr.mxu0 0.0
  %2219 = vmatpush1.msra.mxu0 0.0
  %2220 = vmatprep.subr.mxu0 0.0
  %2221 = vmatpush1.msra.mxu0 0.0
  %2222 = vmatprep.subr.mxu0 0.0
  %2223 = vmatpush1.msra.mxu0 0.0
  %2224 = vmatprep.subr.mxu0 0.0
  %2225 = vmatpush1.msra.mxu0 0.0
  %2226 = vmatprep.subr.mxu0 0.0
  %2227 = vmatpush1.msra.mxu0 0.0
  %2228 = vmatprep.subr.mxu0 0.0
  %2229 = vmatpush1.msra.mxu0 0.0
  %2230 = vmatprep.subr.mxu0 0.0
  %2231 = vmatpush1.msra.mxu0 0.0
  %2232 = vmatprep.subr.mxu0 0.0
  %2233 = vmatpush1.msra.mxu0 0.0
  %2234 = vmatprep.subr.mxu0 0.0
  %2235 = vmatpush1.msra.mxu0 0.0
  %2236 = vmatprep.subr.mxu0 0.0
  %2237 = vmatpush1.msra.mxu0 0.0
  %2238 = vmatprep.subr.mxu0 0.0
  %2239 = vmatpush1.msra.mxu0 0.0
  %2240 = vmatprep.subr.mxu0 0.0
  %2241 = vmatpush1.msra.mxu0 0.0
  %2242 = vmatprep.subr.mxu0 0.0
  %2243 = vmatpush1.msra.mxu0 0.0
  %2244 = vmatprep.subr.mxu0 0.0
  %2245 = vmatpush1.msra.mxu0 0.0
  %2246 = vmatprep.mubr.f32.mxu0 0.0
  %2247 = vmatmul.mubr.f32.gmra.mrb[0].mxu0 %v1569
  %v2248 = vpop.f32.mrb[0].mxu0
  %v2249 = vadd.f32 %v2180, %v2248
  %v2250 = vpop.f32.mrb[0].mxu0
  %2251 = vmatprep.mubr.f32.mxu0 0.0
  %2252 = vmatmul.mubr.f32.gmra.mrb[0].mxu0 %v1572
  %v2253 = vpop.f32.mrb[0].mxu0
  %v2254 = vadd.f32 %v2180, %v2253
  %v2255 = vpop.f32.mrb[0].mxu0
  %2256 = vdwg.mxu0
  %2257 = vrot.lane.b32.xlu0 %v2063, 48
  %v2258 = vpop.permute.xlu0 %2257
  %2259 = vrot.lane.b32.xlu0 %v2064, 48
  %v2260 = vpop.permute.xlu0 %2259
  %2261 = vrot.lane.b32.xlu0 %v2065, 48
  %v2262 = vpop.permute.xlu0 %2261
  %2263 = vrot.lane.b32.xlu0 %v2066, 48
  %v2264 = vpop.permute.xlu0 %2263
  %2269 = vrot.lane.b32.xlu0 %v2071, 48
  %v2270 = vpop.permute.xlu0 %2269
  %2272 = vmatprep.subr.mxu0 0.0
  %2273 = vmatpush1.msra.mxu0 %v2258
  %2274 = vmatprep.subr.mxu0 0.0
  %2275 = vmatpush1.msra.mxu0 %v2260
  %2276 = vmatprep.subr.mxu0 0.0
  %2277 = vmatpush1.msra.mxu0 %v2262
  %2278 = vmatprep.subr.mxu0 0.0
  %2279 = vmatpush1.msra.mxu0 %v2264
  %2280 = vmatprep.subr.mxu0 0.0
  %2281 = vmatpush1.msra.mxu0 0.0
  %2282 = vmatprep.subr.mxu0 0.0
  %2283 = vmatpush1.msra.mxu0 0.0
  %2284 = vmatprep.subr.mxu0 0.0
  %2285 = vmatpush1.msra.mxu0 0.0
  %2286 = vmatprep.subr.mxu0 0.0
  %2287 = vmatpush1.msra.mxu0 0.0
  %2288 = vmatprep.subr.mxu0 0.0
  %2289 = vmatpush1.msra.mxu0 0.0
  %2290 = vmatprep.subr.mxu0 0.0
  %2291 = vmatpush1.msra.mxu0 0.0
  %2292 = vmatprep.subr.mxu0 0.0
  %2293 = vmatpush1.msra.mxu0 0.0
  %2294 = vmatprep.subr.mxu0 0.0
  %2295 = vmatpush1.msra.mxu0 0.0
  %2296 = vmatprep.subr.mxu0 0.0
  %2297 = vmatpush1.msra.mxu0 0.0
  %2298 = vmatprep.subr.mxu0 0.0
  %2299 = vmatpush1.msra.mxu0 0.0
  %2300 = vmatprep.subr.mxu0 0.0
  %2301 = vmatpush1.msra.mxu0 0.0
  %2302 = vmatprep.subr.mxu0 0.0
  %2303 = vmatpush1.msra.mxu0 0.0
  %2304 = vmatprep.subr.mxu0 0.0
  %2305 = vmatpush1.msra.mxu0 0.0
  %2306 = vmatprep.subr.mxu0 0.0
  %2307 = vmatpush1.msra.mxu0 0.0
  %2308 = vmatprep.subr.mxu0 0.0
  %2309 = vmatpush1.msra.mxu0 0.0
  %2310 = vmatprep.subr.mxu0 0.0
  %2311 = vmatpush1.msra.mxu0 0.0
  %2312 = vmatprep.subr.mxu0 0.0
  %2313 = vmatpush1.msra.mxu0 0.0
  %2314 = vmatprep.subr.mxu0 0.0
  %2315 = vmatpush1.msra.mxu0 0.0
  %2316 = vmatprep.subr.mxu0 0.0
  %2317 = vmatpush1.msra.mxu0 0.0
  %2318 = vmatprep.subr.mxu0 0.0
  %2319 = vmatpush1.msra.mxu0 0.0
  %2320 = vmatprep.subr.mxu0 0.0
  %2321 = vmatpush1.msra.mxu0 0.0
  %2322 = vmatprep.subr.mxu0 0.0
  %2323 = vmatpush1.msra.mxu0 0.0
  %2324 = vmatprep.subr.mxu0 0.0
  %2325 = vmatpush1.msra.mxu0 0.0
  %2326 = vmatprep.subr.mxu0 0.0
  %2327 = vmatpush1.msra.mxu0 0.0
  %2328 = vmatprep.subr.mxu0 0.0
  %2329 = vmatpush1.msra.mxu0 0.0
  %2330 = vmatprep.subr.mxu0 0.0
  %2331 = vmatpush1.msra.mxu0 0.0
  %2332 = vmatprep.subr.mxu0 0.0
  %2333 = vmatpush1.msra.mxu0 0.0
  %2334 = vmatprep.subr.mxu0 0.0
  %2335 = vmatpush1.msra.mxu0 0.0
  %2336 = vmatprep.mubr.f32.mxu0 0.0
  %2337 = vmatmul.mubr.f32.gmra.mrb[0].mxu0 %v1569
  %v2338 = vpop.f32.mrb[0].mxu0
  %v2339 = vadd.f32 %v2270, %v2338
  %v2340 = vpop.f32.mrb[0].mxu0
  %2341 = vmatprep.mubr.f32.mxu0 0.0
  %2342 = vmatmul.mubr.f32.gmra.mrb[0].mxu0 %v1572
  %v2343 = vpop.f32.mrb[0].mxu0
  %v2344 = vadd.f32 %v2270, %v2343
  %v2345 = vpop.f32.mrb[0].mxu0
  %2346 = vdwg.mxu0
  %v2348 = vsel %vm299, %v2159, 0
  %v2351 = vsel %vm299, %v2249, 0
  %2353 = vmatprep.subr.mxu0 0.0
  %2354 = vmatpush1.xpose.msra.mxu0 %v2351
  %2355 = vmatprep.subr.mxu0 0.0
  %2356 = vmatpush1.xpose.msra.mxu0 0.0
  %2357 = vmatprep.subr.mxu0 0.0
  %2358 = vmatpush1.xpose.msra.mxu0 0.0
  %2359 = vmatprep.subr.mxu0 0.0
  %2360 = vmatpush1.xpose.msra.mxu0 0.0
  %2361 = vmatprep.subr.mxu0 0.0
  %2362 = vmatpush1.xpose.msra.mxu0 0.0
  %2363 = vmatprep.subr.mxu0 0.0
  %2364 = vmatpush1.xpose.msra.mxu0 0.0
  %2365 = vmatprep.subr.mxu0 0.0
  %2366 = vmatpush1.xpose.msra.mxu0 0.0
  %2367 = vmatprep.subr.mxu0 0.0
  %2368 = vmatpush1.xpose.msra.mxu0 0.0
  %2369 = vmatprep.subr.mxu0 0.0
  %2370 = vmatpush1.xpose.msra.mxu0 0.0
  %2371 = vmatprep.subr.mxu0 0.0
  %2372 = vmatpush1.xpose.msra.mxu0 0.0
  %2373 = vmatprep.subr.mxu0 0.0
  %2374 = vmatpush1.xpose.msra.mxu0 0.0
  %2375 = vmatprep.subr.mxu0 0.0
  %2376 = vmatpush1.xpose.msra.mxu0 0.0
  %2377 = vmatprep.subr.mxu0 0.0
  %2378 = vmatpush1.xpose.msra.mxu0 0.0
  %2379 = vmatprep.subr.mxu0 0.0
  %2380 = vmatpush1.xpose.msra.mxu0 0.0
  %2381 = vmatprep.subr.mxu0 0.0
  %2382 = vmatpush1.xpose.msra.mxu0 0.0
  %2383 = vmatprep.subr.mxu0 0.0
  %2384 = vmatpush1.xpose.msra.mxu0 0.0
  %2385 = vmatprep.subr.mxu0 0.0
  %2386 = vmatpush1.xpose.msra.mxu0 0.0
  %2387 = vmatprep.subr.mxu0 0.0
  %2388 = vmatpush1.xpose.msra.mxu0 0.0
  %2389 = vmatprep.subr.mxu0 0.0
  %2390 = vmatpush1.xpose.msra.mxu0 0.0
  %2391 = vmatprep.subr.mxu0 0.0
  %2392 = vmatpush1.xpose.msra.mxu0 0.0
  %2393 = vmatprep.subr.mxu0 0.0
  %2394 = vmatpush1.xpose.msra.mxu0 0.0
  %2395 = vmatprep.subr.mxu0 0.0
  %2396 = vmatpush1.xpose.msra.mxu0 0.0
  %2397 = vmatprep.subr.mxu0 0.0
  %2398 = vmatpush1.xpose.msra.mxu0 0.0
  %2399 = vmatprep.subr.mxu0 0.0
  %2400 = vmatpush1.xpose.msra.mxu0 0.0
  %2401 = vmatprep.subr.mxu0 0.0
  %2402 = vmatpush1.xpose.msra.mxu0 0.0
  %2403 = vmatprep.subr.mxu0 0.0
  %2404 = vmatpush1.xpose.msra.mxu0 0.0
  %2405 = vmatprep.subr.mxu0 0.0
  %2406 = vmatpush1.xpose.msra.mxu0 0.0
  %2407 = vmatprep.subr.mxu0 0.0
  %2408 = vmatpush1.xpose.msra.mxu0 0.0
  %2409 = vmatprep.subr.mxu0 0.0
  %2410 = vmatpush1.xpose.msra.mxu0 0.0
  %2411 = vmatprep.subr.mxu0 0.0
  %2412 = vmatpush1.xpose.msra.mxu0 0.0
  %2413 = vmatprep.subr.mxu0 0.0
  %2414 = vmatpush1.xpose.msra.mxu0 0.0
  %2415 = vmatprep.subr.mxu0 0.0
  %2416 = vmatpush1.xpose.msra.mxu0 0.0
  %2417 = vmatprep.mubr.f32.mxu0 0.0
  %2418 = vmatmul.mubr.f32.gmra.mrb[0].mxu0 %v2348
  %v2419 = vpop.f32.mrb[0].mxu0
  %v2420 = vadd.f32 0.0, %v2419
  %v2421 = vpop.f32.mrb[0].mxu0
  %2422 = vdwg.mxu0
  %v2424 = vsel %vm299, %v2164, 0
  %v2427 = vsel %vm299, %v2254, 0
  %2429 = vmatprep.subr.mxu0 0.0
  %2430 = vmatpush1.xpose.msra.mxu0 %v2427
  %2431 = vmatprep.subr.mxu0 0.0
  %2432 = vmatpush1.xpose.msra.mxu0 0.0
  %2433 = vmatprep.subr.mxu0 0.0
  %2434 = vmatpush1.xpose.msra.mxu0 0.0
  %2435 = vmatprep.subr.mxu0 0.0
  %2436 = vmatpush1.xpose.msra.mxu0 0.0
  %2437 = vmatprep.subr.mxu0 0.0
  %2438 = vmatpush1.xpose.msra.mxu0 0.0
  %2439 = vmatprep.subr.mxu0 0.0
  %2440 = vmatpush1.xpose.msra.mxu0 0.0
  %2441 = vmatprep.subr.mxu0 0.0
  %2442 = vmatpush1.xpose.msra.mxu0 0.0
  %2443 = vmatprep.subr.mxu0 0.0
  %2444 = vmatpush1.xpose.msra.mxu0 0.0
  %2445 = vmatprep.subr.mxu0 0.0
  %2446 = vmatpush1.xpose.msra.mxu0 0.0
  %2447 = vmatprep.subr.mxu0 0.0
  %2448 = vmatpush1.xpose.msra.mxu0 0.0
  %2449 = vmatprep.subr.mxu0 0.0
  %2450 = vmatpush1.xpose.msra.mxu0 0.0
  %2451 = vmatprep.subr.mxu0 0.0
  %2452 = vmatpush1.xpose.msra.mxu0 0.0
  %2453 = vmatprep.subr.mxu0 0.0
  %2454 = vmatpush1.xpose.msra.mxu0 0.0
  %2455 = vmatprep.subr.mxu0 0.0
  %2456 = vmatpush1.xpose.msra.mxu0 0.0
  %2457 = vmatprep.subr.mxu0 0.0
  %2458 = vmatpush1.xpose.msra.mxu0 0.0
  %2459 = vmatprep.subr.mxu0 0.0
  %2460 = vmatpush1.xpose.msra.mxu0 0.0
  %2461 = vmatprep.subr.mxu0 0.0
  %2462 = vmatpush1.xpose.msra.mxu0 0.0
  %2463 = vmatprep.subr.mxu0 0.0
  %2464 = vmatpush1.xpose.msra.mxu0 0.0
  %2465 = vmatprep.subr.mxu0 0.0
  %2466 = vmatpush1.xpose.msra.mxu0 0.0
  %2467 = vmatprep.subr.mxu0 0.0
  %2468 = vmatpush1.xpose.msra.mxu0 0.0
  %2469 = vmatprep.subr.mxu0 0.0
  %2470 = vmatpush1.xpose.msra.mxu0 0.0
  %2471 = vmatprep.subr.mxu0 0.0
  %2472 = vmatpush1.xpose.msra.mxu0 0.0
  %2473 = vmatprep.subr.mxu0 0.0
  %2474 = vmatpush1.xpose.msra.mxu0 0.0
  %2475 = vmatprep.subr.mxu0 0.0
  %2476 = vmatpush1.xpose.msra.mxu0 0.0
  %2477 = vmatprep.subr.mxu0 0.0
  %2478 = vmatpush1.xpose.msra.mxu0 0.0
  %2479 = vmatprep.subr.mxu0 0.0
  %2480 = vmatpush1.xpose.msra.mxu0 0.0
  %2481 = vmatprep.subr.mxu0 0.0
  %2482 = vmatpush1.xpose.msra.mxu0 0.0
  %2483 = vmatprep.subr.mxu0 0.0
  %2484 = vmatpush1.xpose.msra.mxu0 0.0
  %2485 = vmatprep.subr.mxu0 0.0
  %2486 = vmatpush1.xpose.msra.mxu0 0.0
  %2487 = vmatprep.subr.mxu0 0.0
  %2488 = vmatpush1.xpose.msra.mxu0 0.0
  %2489 = vmatprep.subr.mxu0 0.0
  %2490 = vmatpush1.xpose.msra.mxu0 0.0
  %2491 = vmatprep.subr.mxu0 0.0
  %2492 = vmatpush1.xpose.msra.mxu0 0.0
  %2493 = vmatprep.mubr.f32.mxu0 0.0
  %2494 = vmatmul.mubr.f32.gmra.mrb[0].mxu0 %v2424
  %v2495 = vpop.f32.mrb[0].mxu0
  %v2496 = vadd.f32 0.0, %v2495
  %v2497 = vpop.f32.mrb[0].mxu0
  %2498 = vdwg.mxu0
  %v2499 = vsel %vm1891, -1e+09, %v2420
  %v2500 = vsel %vm1892, -1e+09, %v2496
  %v2501 = vsel %vm456, %v2499, -inf
  %2502 = vmax.xlane.f32.xlu0 %v2501
  %v2503 = vpop.xlane.xlu0 %2502
  %v2504 = vsel %vm456, %v2500, -inf
  %2505 = vmax.xlane.f32.xlu0 %v2504
  %v2506 = vpop.xlane.xlu0 %2505
  %v2507 = vsub.f32 %v2499, %v2503
  %v2508 = vsub.f32 %v2500, %v2506
  %v2509 = vmul.f32 %v2507, 1.442695
  %v2510 = vpow.pop %v2509
  %v2511 = vmul.f32 %v2508, 1.442695
  %v2512 = vpow.pop %v2511
  %v2513 = vsel %vm456, %v2510, 0.0
  %2514 = vadd.xlane.f32.xlu0 %v2513
  %v2515 = vpop.xlane.xlu0 %2514
  %v2516 = vsel %vm456, %v2512, 0.0
  %2517 = vadd.xlane.f32.xlu0 %v2516
  %v2518 = vpop.xlane.xlu0 %2517
  %v2519 = vrcp.pop %v2515
  %v2520 = vmul.f32 %v2510, %v2519
  %v2521 = vrcp.pop %v2518
  %v2522 = vmul.f32 %v2512, %v2521
  %v2524 = vsel %vm456, %v2520, 0
  %2526 = vmatprep.subr.mxu0 0.0
  %2527 = vmatpush1.msra.mxu0 %v2339
  %2528 = vmatprep.subr.mxu0 0.0
  %2529 = vmatpush1.msra.mxu0 0.0
  %2530 = vmatprep.subr.mxu0 0.0
  %2531 = vmatpush1.msra.mxu0 0.0
  %2532 = vmatprep.subr.mxu0 0.0
  %2533 = vmatpush1.msra.mxu0 0.0
  %2534 = vmatprep.subr.mxu0 0.0
  %2535 = vmatpush1.msra.mxu0 0.0
  %2536 = vmatprep.subr.mxu0 0.0
  %2537 = vmatpush1.msra.mxu0 0.0
  %2538 = vmatprep.subr.mxu0 0.0
  %2539 = vmatpush1.msra.mxu0 0.0
  %2540 = vmatprep.subr.mxu0 0.0
  %2541 = vmatpush1.msra.mxu0 0.0
  %2542 = vmatprep.subr.mxu0 0.0
  %2543 = vmatpush1.msra.mxu0 0.0
  %2544 = vmatprep.subr.mxu0 0.0
  %2545 = vmatpush1.msra.mxu0 0.0
  %2546 = vmatprep.subr.mxu0 0.0
  %2547 = vmatpush1.msra.mxu0 0.0
  %2548 = vmatprep.subr.mxu0 0.0
  %2549 = vmatpush1.msra.mxu0 0.0
  %2550 = vmatprep.subr.mxu0 0.0
  %2551 = vmatpush1.msra.mxu0 0.0
  %2552 = vmatprep.subr.mxu0 0.0
  %2553 = vmatpush1.msra.mxu0 0.0
  %2554 = vmatprep.subr.mxu0 0.0
  %2555 = vmatpush1.msra.mxu0 0.0
  %2556 = vmatprep.subr.mxu0 0.0
  %2557 = vmatpush1.msra.mxu0 0.0
  %2558 = vmatprep.subr.mxu0 0.0
  %2559 = vmatpush1.msra.mxu0 0.0
  %2560 = vmatprep.subr.mxu0 0.0
  %2561 = vmatpush1.msra.mxu0 0.0
  %2562 = vmatprep.subr.mxu0 0.0
  %2563 = vmatpush1.msra.mxu0 0.0
  %2564 = vmatprep.subr.mxu0 0.0
  %2565 = vmatpush1.msra.mxu0 0.0
  %2566 = vmatprep.subr.mxu0 0.0
  %2567 = vmatpush1.msra.mxu0 0.0
  %2568 = vmatprep.subr.mxu0 0.0
  %2569 = vmatpush1.msra.mxu0 0.0
  %2570 = vmatprep.subr.mxu0 0.0
  %2571 = vmatpush1.msra.mxu0 0.0
  %2572 = vmatprep.subr.mxu0 0.0
  %2573 = vmatpush1.msra.mxu0 0.0
  %2574 = vmatprep.subr.mxu0 0.0
  %2575 = vmatpush1.msra.mxu0 0.0
  %2576 = vmatprep.subr.mxu0 0.0
  %2577 = vmatpush1.msra.mxu0 0.0
  %2578 = vmatprep.subr.mxu0 0.0
  %2579 = vmatpush1.msra.mxu0 0.0
  %2580 = vmatprep.subr.mxu0 0.0
  %2581 = vmatpush1.msra.mxu0 0.0
  %2582 = vmatprep.subr.mxu0 0.0
  %2583 = vmatpush1.msra.mxu0 0.0
  %2584 = vmatprep.subr.mxu0 0.0
  %2585 = vmatpush1.msra.mxu0 0.0
  %2586 = vmatprep.subr.mxu0 0.0
  %2587 = vmatpush1.msra.mxu0 0.0
  %2588 = vmatprep.subr.mxu0 0.0
  %2589 = vmatpush1.msra.mxu0 0.0
  %2590 = vmatprep.mubr.f32.mxu0 0.0
  %2591 = vmatmul.mubr.f32.gmra.mrb[0].mxu0 %v2524
  %v2592 = vpop.f32.mrb[0].mxu0
  %v2593 = vadd.f32 0.0, %v2592
  %v2594 = vpop.f32.mrb[0].mxu0
  %2595 = vdwg.mxu0
  %v2597 = vsel %vm456, %v2522, 0
  %2599 = vmatprep.subr.mxu0 0.0
  %2600 = vmatpush1.msra.mxu0 %v2344
  %2601 = vmatprep.subr.mxu0 0.0
  %2602 = vmatpush1.msra.mxu0 0.0
  %2603 = vmatprep.subr.mxu0 0.0
  %2604 = vmatpush1.msra.mxu0 0.0
  %2605 = vmatprep.subr.mxu0 0.0
  %2606 = vmatpush1.msra.mxu0 0.0
  %2607 = vmatprep.subr.mxu0 0.0
  %2608 = vmatpush1.msra.mxu0 0.0
  %2609 = vmatprep.subr.mxu0 0.0
  %2610 = vmatpush1.msra.mxu0 0.0
  %2611 = vmatprep.subr.mxu0 0.0
  %2612 = vmatpush1.msra.mxu0 0.0
  %2613 = vmatprep.subr.mxu0 0.0
  %2614 = vmatpush1.msra.mxu0 0.0
  %2615 = vmatprep.subr.mxu0 0.0
  %2616 = vmatpush1.msra.mxu0 0.0
  %2617 = vmatprep.subr.mxu0 0.0
  %2618 = vmatpush1.msra.mxu0 0.0
  %2619 = vmatprep.subr.mxu0 0.0
  %2620 = vmatpush1.msra.mxu0 0.0
  %2621 = vmatprep.subr.mxu0 0.0
  %2622 = vmatpush1.msra.mxu0 0.0
  %2623 = vmatprep.subr.mxu0 0.0
  %2624 = vmatpush1.msra.mxu0 0.0
  %2625 = vmatprep.subr.mxu0 0.0
  %2626 = vmatpush1.msra.mxu0 0.0
  %2627 = vmatprep.subr.mxu0 0.0
  %2628 = vmatpush1.msra.mxu0 0.0
  %2629 = vmatprep.subr.mxu0 0.0
  %2630 = vmatpush1.msra.mxu0 0.0
  %2631 = vmatprep.subr.mxu0 0.0
  %2632 = vmatpush1.msra.mxu0 0.0
  %2633 = vmatprep.subr.mxu0 0.0
  %2634 = vmatpush1.msra.mxu0 0.0
  %2635 = vmatprep.subr.mxu0 0.0
  %2636 = vmatpush1.msra.mxu0 0.0
  %2637 = vmatprep.subr.mxu0 0.0
  %2638 = vmatpush1.msra.mxu0 0.0
  %2639 = vmatprep.subr.mxu0 0.0
  %2640 = vmatpush1.msra.mxu0 0.0
  %2641 = vmatprep.subr.mxu0 0.0
  %2642 = vmatpush1.msra.mxu0 0.0
  %2643 = vmatprep.subr.mxu0 0.0
  %2644 = vmatpush1.msra.mxu0 0.0
  %2645 = vmatprep.subr.mxu0 0.0
  %2646 = vmatpush1.msra.mxu0 0.0
  %2647 = vmatprep.subr.mxu0 0.0
  %2648 = vmatpush1.msra.mxu0 0.0
  %2649 = vmatprep.subr.mxu0 0.0
  %2650 = vmatpush1.msra.mxu0 0.0
  %2651 = vmatprep.subr.mxu0 0.0
  %2652 = vmatpush1.msra.mxu0 0.0
  %2653 = vmatprep.subr.mxu0 0.0
  %2654 = vmatpush1.msra.mxu0 0.0
  %2655 = vmatprep.subr.mxu0 0.0
  %2656 = vmatpush1.msra.mxu0 0.0
  %2657 = vmatprep.subr.mxu0 0.0
  %2658 = vmatpush1.msra.mxu0 0.0
  %2659 = vmatprep.subr.mxu0 0.0
  %2660 = vmatpush1.msra.mxu0 0.0
  %2661 = vmatprep.subr.mxu0 0.0
  %2662 = vmatpush1.msra.mxu0 0.0
  %2663 = vmatprep.mubr.f32.mxu0 0.0
  %2664 = vmatmul.mubr.f32.gmra.mrb[0].mxu0 %v2597
  %v2665 = vpop.f32.mrb[0].mxu0
  %v2666 = vadd.f32 0.0, %v2665
  %v2667 = vpop.f32.mrb[0].mxu0
  %2668 = vdwg.mxu0
  %2669 = vrot.lane.b32.xlu0 %v2065, 32
  %v2670 = vpop.permute.xlu0 %2669
  %2671 = vrot.lane.b32.xlu0 %v2066, 32
  %v2672 = vpop.permute.xlu0 %2671
  %v2676 = vsel %vm299, %v2593, 0
  %v2679 = vsel %vm299, %v2666, 0
  %2681 = vmatprep.subr.mxu0 0.0
  %2682 = vmatpush1.msra.mxu0 %v2670
  %2683 = vmatprep.subr.mxu0 0.0
  %2684 = vmatpush1.msra.mxu0 %v2672
  %2685 = vmatprep.subr.mxu0 0.0
  %2686 = vmatpush1.msra.mxu0 0.0
  %2687 = vmatprep.subr.mxu0 0.0
  %2688 = vmatpush1.msra.mxu0 0.0
  %2689 = vmatprep.subr.mxu0 0.0
  %2690 = vmatpush1.msra.mxu0 0.0
  %2691 = vmatprep.subr.mxu0 0.0
  %2692 = vmatpush1.msra.mxu0 0.0
  %2693 = vmatprep.subr.mxu0 0.0
  %2694 = vmatpush1.msra.mxu0 0.0
  %2695 = vmatprep.subr.mxu0 0.0
  %2696 = vmatpush1.msra.mxu0 0.0
  %2697 = vmatprep.subr.mxu0 0.0
  %2698 = vmatpush1.msra.mxu0 0.0
  %2699 = vmatprep.subr.mxu0 0.0
  %2700 = vmatpush1.msra.mxu0 0.0
  %2701 = vmatprep.subr.mxu0 0.0
  %2702 = vmatpush1.msra.mxu0 0.0
  %2703 = vmatprep.subr.mxu0 0.0
  %2704 = vmatpush1.msra.mxu0 0.0
  %2705 = vmatprep.subr.mxu0 0.0
  %2706 = vmatpush1.msra.mxu0 0.0
  %2707 = vmatprep.subr.mxu0 0.0
  %2708 = vmatpush1.msra.mxu0 0.0
  %2709 = vmatprep.subr.mxu0 0.0
  %2710 = vmatpush1.msra.mxu0 0.0
  %2711 = vmatprep.subr.mxu0 0.0
  %2712 = vmatpush1.msra.mxu0 0.0
  %2713 = vmatprep.subr.mxu0 0.0
  %2714 = vmatpush1.msra.mxu0 0.0
  %2715 = vmatprep.subr.mxu0 0.0
  %2716 = vmatpush1.msra.mxu0 0.0
  %2717 = vmatprep.subr.mxu0 0.0
  %2718 = vmatpush1.msra.mxu0 0.0
  %2719 = vmatprep.subr.mxu0 0.0
  %2720 = vmatpush1.msra.mxu0 0.0
  %2721 = vmatprep.subr.mxu0 0.0
  %2722 = vmatpush1.msra.mxu0 0.0
  %2723 = vmatprep.subr.mxu0 0.0
  %2724 = vmatpush1.msra.mxu0 0.0
  %2725 = vmatprep.subr.mxu0 0.0
  %2726 = vmatpush1.msra.mxu0 0.0
  %2727 = vmatprep.subr.mxu0 0.0
  %2728 = vmatpush1.msra.mxu0 0.0
  %2729 = vmatprep.subr.mxu0 0.0
  %2730 = vmatpush1.msra.mxu0 0.0
  %2731 = vmatprep.subr.mxu0 0.0
  %2732 = vmatpush1.msra.mxu0 0.0
  %2733 = vmatprep.subr.mxu0 0.0
  %2734 = vmatpush1.msra.mxu0 0.0
  %2735 = vmatprep.subr.mxu0 0.0
  %2736 = vmatpush1.msra.mxu0 0.0
  %2737 = vmatprep.subr.mxu0 0.0
  %2738 = vmatpush1.msra.mxu0 0.0
  %2739 = vmatprep.subr.mxu0 0.0
  %2740 = vmatpush1.msra.mxu0 0.0
  %2741 = vmatprep.subr.mxu0 0.0
  %2742 = vmatpush1.msra.mxu0 0.0
  %2743 = vmatprep.subr.mxu0 0.0
  %2744 = vmatpush1.msra.mxu0 0.0
  %2745 = vmatprep.mubr.f32.mxu0 0.0
  %2746 = vmatmul.mubr.f32.gmra.mrb[0].mxu0 %v2676
  %v2747 = vpop.f32.mrb[0].mxu0
  %v2748 = vadd.f32 0.0, %v2747
  %v2749 = vpop.f32.mrb[0].mxu0
  %2750 = vmatprep.mubr.f32.mxu0 0.0
  %2751 = vmatmul.mubr.f32.gmra.mrb[0].mxu0 %v2679
  %v2752 = vpop.f32.mrb[0].mxu0
  %v2753 = vadd.f32 0.0, %v2752
  %v2754 = vpop.f32.mrb[0].mxu0
  %2755 = vdwg.mxu0
  %2756 = vrot.lane.b32.xlu0 %v1458, 32
  %v2757 = vpop.permute.xlu0 %2756
  %2758 = vrot.lane.b32.xlu0 %v1459, 32
  %v2759 = vpop.permute.xlu0 %2758
  %v2763 = vsel %vm299, %v1987, 0
  %v2766 = vsel %vm299, %v2060, 0
  %2768 = vmatprep.subr.mxu0 0.0
  %2769 = vmatpush1.msra.mxu0 %v2757
  %2770 = vmatprep.subr.mxu0 0.0
  %2771 = vmatpush1.msra.mxu0 %v2759
  %2772 = vmatprep.subr.mxu0 0.0
  %2773 = vmatpush1.msra.mxu0 0.0
  %2774 = vmatprep.subr.mxu0 0.0
  %2775 = vmatpush1.msra.mxu0 0.0
  %2776 = vmatprep.subr.mxu0 0.0
  %2777 = vmatpush1.msra.mxu0 0.0
  %2778 = vmatprep.subr.mxu0 0.0
  %2779 = vmatpush1.msra.mxu0 0.0
  %2780 = vmatprep.subr.mxu0 0.0
  %2781 = vmatpush1.msra.mxu0 0.0
  %2782 = vmatprep.subr.mxu0 0.0
  %2783 = vmatpush1.msra.mxu0 0.0
  %2784 = vmatprep.subr.mxu0 0.0
  %2785 = vmatpush1.msra.mxu0 0.0
  %2786 = vmatprep.subr.mxu0 0.0
  %2787 = vmatpush1.msra.mxu0 0.0
  %2788 = vmatprep.subr.mxu0 0.0
  %2789 = vmatpush1.msra.mxu0 0.0
  %2790 = vmatprep.subr.mxu0 0.0
  %2791 = vmatpush1.msra.mxu0 0.0
  %2792 = vmatprep.subr.mxu0 0.0
  %2793 = vmatpush1.msra.mxu0 0.0
  %2794 = vmatprep.subr.mxu0 0.0
  %2795 = vmatpush1.msra.mxu0 0.0
  %2796 = vmatprep.subr.mxu0 0.0
  %2797 = vmatpush1.msra.mxu0 0.0
  %2798 = vmatprep.subr.mxu0 0.0
  %2799 = vmatpush1.msra.mxu0 0.0
  %2800 = vmatprep.subr.mxu0 0.0
  %2801 = vmatpush1.msra.mxu0 0.0
  %2802 = vmatprep.subr.mxu0 0.0
  %2803 = vmatpush1.msra.mxu0 0.0
  %2804 = vmatprep.subr.mxu0 0.0
  %2805 = vmatpush1.msra.mxu0 0.0
  %2806 = vmatprep.subr.mxu0 0.0
  %2807 = vmatpush1.msra.mxu0 0.0
  %2808 = vmatprep.subr.mxu0 0.0
  %2809 = vmatpush1.msra.mxu0 0.0
  %2810 = vmatprep.subr.mxu0 0.0
  %2811 = vmatpush1.msra.mxu0 0.0
  %2812 = vmatprep.subr.mxu0 0.0
  %2813 = vmatpush1.msra.mxu0 0.0
  %2814 = vmatprep.subr.mxu0 0.0
  %2815 = vmatpush1.msra.mxu0 0.0
  %2816 = vmatprep.subr.mxu0 0.0
  %2817 = vmatpush1.msra.mxu0 0.0
  %2818 = vmatprep.subr.mxu0 0.0
  %2819 = vmatpush1.msra.mxu0 0.0
  %2820 = vmatprep.subr.mxu0 0.0
  %2821 = vmatpush1.msra.mxu0 0.0
  %2822 = vmatprep.subr.mxu0 0.0
  %2823 = vmatpush1.msra.mxu0 0.0
  %2824 = vmatprep.subr.mxu0 0.0
  %2825 = vmatpush1.msra.mxu0 0.0
  %2826 = vmatprep.subr.mxu0 0.0
  %2827 = vmatpush1.msra.mxu0 0.0
  %2828 = vmatprep.subr.mxu0 0.0
  %2829 = vmatpush1.msra.mxu0 0.0
  %2830 = vmatprep.subr.mxu0 0.0
  %2831 = vmatpush1.msra.mxu0 0.0
  %2832 = vmatprep.mubr.f32.mxu0 0.0
  %2833 = vmatmul.mubr.f32.gmra.mrb[0].mxu0 %v2763
  %v2834 = vpop.f32.mrb[0].mxu0
  %v2835 = vadd.f32 %v2748, %v2834
  %v2836 = vpop.f32.mrb[0].mxu0
  %2837 = vmatprep.mubr.f32.mxu0 0.0
  %2838 = vmatmul.mubr.f32.gmra.mrb[0].mxu0 %v2766
  %v2839 = vpop.f32.mrb[0].mxu0
  %v2840 = vadd.f32 %v2753, %v2839
  %v2841 = vpop.f32.mrb[0].mxu0
  %2842 = vdwg.mxu0
  %v2843 = vld [vmem:[%s2 + $0xa1] sm:$0x1]
  %v2844 = vlaneseq
  %v2845 = vshrl.u32 %v2844, 7
  %v2846 = vsub.s32 0, %v2845
  %v2847 = vrot.slane %v2843, %v2846
  %2849 = vrot.lane.b32.xlu0 %v2847, 32
  %v2850 = vpop.permute.xlu0 %2849
  %v2852 = vadd.f32 %v2835, %v2850
  %v2853 = vadd.f32 %v2840, %v2850
  %v2854 = vld [vmem:[%s2 + $0xa3] sm:$0x1]
  %v2855 = vadd.f32 %v1456, %v2852
  %v2856 = vadd.f32 %v1457, %v2853
  %v2857 = vsel %vm32, %v2855, 0.0
  %2858 = vadd.xlane.f32.xlu0 %v2857
  %v2859 = vpop.xlane.xlu0 %2858
  %v2860 = vsel %vm32, %v2856, 0.0
  %2861 = vadd.xlane.f32.xlu0 %v2860
  %v2862 = vpop.xlane.xlu0 %2861
  %v2863 = vmul.f32 %v2859, %v1425
  %v2864 = vmul.f32 %v2862, %v1425
  %v2865 = vsub.f32 %v2855, %v2863
  %v2866 = vsub.f32 %v2856, %v2864
  %v2867 = vmul.f32 %v2865, %v2865
  %v2868 = vmul.f32 %v2866, %v2866
  %v2869 = vsel %vm32, %v2867, 0.0
  %2870 = vadd.xlane.f32.xlu0 %v2869
  %v2871 = vpop.xlane.xlu0 %2870
  %v2872 = vsel %vm32, %v2868, 0.0
  %2873 = vadd.xlane.f32.xlu0 %v2872
  %v2874 = vpop.xlane.xlu0 %2873
  %v2875 = vmul.f32 %v2871, %v1425
  %v2876 = vmul.f32 %v2874, %v1425
  %v2877 = vadd.f32 %v2875, 1e-06
  %v2878 = vadd.f32 %v2876, 1e-06
  %v2879 = vrsqrt.pop %v2877
  %v2880 = vrsqrt.pop %v2878
  %v2881 = vmul.f32 %v2865, %v2879
  %v2882 = vmul.f32 %v2866, %v2880
  %v2883 = vlaneseq
  %v2884 = vshrl.u32 %v2883, 7
  %v2885 = vsub.s32 0, %v2884
  %v2886 = vrot.slane %v2854, %v2885
  %2888 = vrot.lane.b32.xlu0 %v2886, 64
  %v2889 = vpop.permute.xlu0 %2888
  %v2891 = vmul.f32 %v2881, %v2889
  %v2892 = vmul.f32 %v2882, %v2889
  %2893 = vrot.lane.b32.xlu0 %v2886, 32
  %v2894 = vpop.permute.xlu0 %2893
  %v2896 = vadd.f32 %v2891, %v2894
  %v2897 = vadd.f32 %v2892, %v2894
  %v2898 = vld [vmem:[%s2 + $0x40] sm:$0xff]
  %v2899 = vld [vmem:[%s2 + $0x48] sm:$0xff]
  %v2900 = vld [vmem:[%s2 + $0x50] sm:$0xff]
  %v2901 = vld [vmem:[%s2 + $0x58] sm:$0xff]
  %v2902 = vld [vmem:[%s2 + $0xa2] sm:$0x1]
  %v2903 = vld [vmem:[%s2 + $0x60] sm:$0xff]
  %v2904 = vld [vmem:[%s2 + $0x68] sm:$0xff]
  %v2905 = vld [vmem:[%s2 + $0x70] sm:$0xff]
  %v2906 = vld [vmem:[%s2 + $0x78] sm:$0xff]
  %v2907 = vld [vmem:[%s2 + $0x80] sm:$0xff]
  %v2908 = vld [vmem:[%s2 + $0x88] sm:$0xff]
  %v2909 = vld [vmem:[%s2 + $0x90] sm:$0xff]
  %v2910 = vld [vmem:[%s2 + $0x98] sm:$0xff]
  %v2911 = vlaneseq
  %v2912 = vshrl.u32 %v2911, 7
  %v2913 = vsub.s32 0, %v2912
  %v2914 = vrot.slane %v2902, %v2913
  %v2916 = vsel %vm32, %v2896, 0
  %v2919 = vsel %vm32, %v2897, 0
  %2921 = vmatprep.subr.mxu0 0.0
  %2922 = vmatpush1.msra.mxu0 %v2898
  %2923 = vmatprep.subr.mxu0 0.0
  %2924 = vmatpush1.msra.mxu0 %v2899
  %2925 = vmatprep.subr.mxu0 0.0
  %2926 = vmatpush1.msra.mxu0 %v2900
  %2927 = vmatprep.subr.mxu0 0.0
  %2928 = vmatpush1.msra.mxu0 %v2901
  %2929 = vmatprep.subr.mxu0 0.0
  %2930 = vmatpush1.msra.mxu0 0.0
  %2931 = vmatprep.subr.mxu0 0.0
  %2932 = vmatpush1.msra.mxu0 0.0
  %2933 = vmatprep.subr.mxu0 0.0
  %2934 = vmatpush1.msra.mxu0 0.0
  %2935 = vmatprep.subr.mxu0 0.0
  %2936 = vmatpush1.msra.mxu0 0.0
  %2937 = vmatprep.subr.mxu0 0.0
  %2938 = vmatpush1.msra.mxu0 0.0
  %2939 = vmatprep.subr.mxu0 0.0
  %2940 = vmatpush1.msra.mxu0 0.0
  %2941 = vmatprep.subr.mxu0 0.0
  %2942 = vmatpush1.msra.mxu0 0.0
  %2943 = vmatprep.subr.mxu0 0.0
  %2944 = vmatpush1.msra.mxu0 0.0
  %2945 = vmatprep.subr.mxu0 0.0
  %2946 = vmatpush1.msra.mxu0 0.0
  %2947 = vmatprep.subr.mxu0 0.0
  %2948 = vmatpush1.msra.mxu0 0.0
  %2949 = vmatprep.subr.mxu0 0.0
  %2950 = vmatpush1.msra.mxu0 0.0
  %2951 = vmatprep.subr.mxu0 0.0
  %2952 = vmatpush1.msra.mxu0 0.0
  %2953 = vmatprep.subr.mxu0 0.0
  %2954 = vmatpush1.msra.mxu0 0.0
  %2955 = vmatprep.subr.mxu0 0.0
  %2956 = vmatpush1.msra.mxu0 0.0
  %2957 = vmatprep.subr.mxu0 0.0
  %2958 = vmatpush1.msra.mxu0 0.0
  %2959 = vmatprep.subr.mxu0 0.0
  %2960 = vmatpush1.msra.mxu0 0.0
  %2961 = vmatprep.subr.mxu0 0.0
  %2962 = vmatpush1.msra.mxu0 0.0
  %2963 = vmatprep.subr.mxu0 0.0
  %2964 = vmatpush1.msra.mxu0 0.0
  %2965 = vmatprep.subr.mxu0 0.0
  %2966 = vmatpush1.msra.mxu0 0.0
  %2967 = vmatprep.subr.mxu0 0.0
  %2968 = vmatpush1.msra.mxu0 0.0
  %2969 = vmatprep.subr.mxu0 0.0
  %2970 = vmatpush1.msra.mxu0 0.0
  %2971 = vmatprep.subr.mxu0 0.0
  %2972 = vmatpush1.msra.mxu0 0.0
  %2973 = vmatprep.subr.mxu0 0.0
  %2974 = vmatpush1.msra.mxu0 0.0
  %2975 = vmatprep.subr.mxu0 0.0
  %2976 = vmatpush1.msra.mxu0 0.0
  %2977 = vmatprep.subr.mxu0 0.0
  %2978 = vmatpush1.msra.mxu0 0.0
  %2979 = vmatprep.subr.mxu0 0.0
  %2980 = vmatpush1.msra.mxu0 0.0
  %2981 = vmatprep.subr.mxu0 0.0
  %2982 = vmatpush1.msra.mxu0 0.0
  %2983 = vmatprep.subr.mxu0 0.0
  %2984 = vmatpush1.msra.mxu0 0.0
  %2985 = vmatprep.mubr.f32.mxu0 0.0
  %2986 = vmatmul.mubr.f32.gmra.mrb[0].mxu0 %v2916
  %v2987 = vpop.f32.mrb[0].mxu0
  %v2988 = vadd.f32 %v2914, %v2987
  %v2989 = vpop.f32.mrb[0].mxu0
  %2990 = vmatprep.mubr.f32.mxu0 0.0
  %2991 = vmatmul.mubr.f32.gmra.mrb[0].mxu0 %v2919
  %v2992 = vpop.f32.mrb[0].mxu0
  %v2993 = vadd.f32 %v2914, %v2992
  %v2994 = vpop.f32.mrb[0].mxu0
  %2995 = vdwg.mxu0
  %v2996 = vmul.f32 %v2988, 0.5
  %v2997 = vmul.f32 %v2993, 0.5
  %v2998 = vmul.f32 %v2988, 0.70710677
  %v2999 = vmul.f32 %v2993, 0.70710677
  %v3000 = verf.f32.pop %v2998
  %v3001 = verf.f32.pop %v2999
  %v3002 = vadd.f32 %v3000, 1.0
  %v3003 = vadd.f32 %v3001, 1.0
  %v3004 = vmul.f32 %v2996, %v3002
  %v3005 = vmul.f32 %v2997, %v3003
  %3007 = vrot.lane.b32.xlu0 %v2914, 64
  %v3008 = vpop.permute.xlu0 %3007
  %vm3010 = vcmask 523264
  %v3012 = vsel %vm3010, %v3004, 0
  %v3015 = vsel %vm3010, %v3005, 0
  %3017 = vmatprep.subr.mxu0 0.0
  %3018 = vmatpush1.msra.mxu0 %v2903
  %3019 = vmatprep.subr.mxu0 0.0
  %3020 = vmatpush1.msra.mxu0 %v2904
  %3021 = vmatprep.subr.mxu0 0.0
  %3022 = vmatpush1.msra.mxu0 %v2905
  %3023 = vmatprep.subr.mxu0 0.0
  %3024 = vmatpush1.msra.mxu0 %v2906
  %3025 = vmatprep.subr.mxu0 0.0
  %3026 = vmatpush1.msra.mxu0 %v2907
  %3027 = vmatprep.subr.mxu0 0.0
  %3028 = vmatpush1.msra.mxu0 %v2908
  %3029 = vmatprep.subr.mxu0 0.0
  %3030 = vmatpush1.msra.mxu0 %v2909
  %3031 = vmatprep.subr.mxu0 0.0
  %3032 = vmatpush1.msra.mxu0 %v2910
  %3033 = vmatprep.subr.mxu0 0.0
  %3034 = vmatpush1.msra.mxu0 0.0
  %3035 = vmatprep.subr.mxu0 0.0
  %3036 = vmatpush1.msra.mxu0 0.0
  %3037 = vmatprep.subr.mxu0 0.0
  %3038 = vmatpush1.msra.mxu0 0.0
  %3039 = vmatprep.subr.mxu0 0.0
  %3040 = vmatpush1.msra.mxu0 0.0
  %3041 = vmatprep.subr.mxu0 0.0
  %3042 = vmatpush1.msra.mxu0 0.0
  %3043 = vmatprep.subr.mxu0 0.0
  %3044 = vmatpush1.msra.mxu0 0.0
  %3045 = vmatprep.subr.mxu0 0.0
  %3046 = vmatpush1.msra.mxu0 0.0
  %3047 = vmatprep.subr.mxu0 0.0
  %3048 = vmatpush1.msra.mxu0 0.0
  %3049 = vmatprep.subr.mxu0 0.0
  %3050 = vmatpush1.msra.mxu0 0.0
  %3051 = vmatprep.subr.mxu0 0.0
  %3052 = vmatpush1.msra.mxu0 0.0
  %3053 = vmatprep.subr.mxu0 0.0
  %3054 = vmatpush1.msra.mxu0 0.0
  %3055 = vmatprep.subr.mxu0 0.0
  %3056 = vmatpush1.msra.mxu0 0.0
  %3057 = vmatprep.subr.mxu0 0.0
  %3058 = vmatpush1.msra.mxu0 0.0
  %3059 = vmatprep.subr.mxu0 0.0
  %3060 = vmatpush1.msra.mxu0 0.0
  %3061 = vmatprep.subr.mxu0 0.0
  %3062 = vmatpush1.msra.mxu0 0.0
  %3063 = vmatprep.subr.mxu0 0.0
  %3064 = vmatpush1.msra.mxu0 0.0
  %3065 = vmatprep.subr.mxu0 0.0
  %3066 = vmatpush1.msra.mxu0 0.0
  %3067 = vmatprep.subr.mxu0 0.0
  %3068 = vmatpush1.msra.mxu0 0.0
  %3069 = vmatprep.subr.mxu0 0.0
  %3070 = vmatpush1.msra.mxu0 0.0
  %3071 = vmatprep.subr.mxu0 0.0
  %3072 = vmatpush1.msra.mxu0 0.0
  %3073 = vmatprep.subr.mxu0 0.0
  %3074 = vmatpush1.msra.mxu0 0.0
  %3075 = vmatprep.subr.mxu0 0.0
  %3076 = vmatpush1.msra.mxu0 0.0
  %3077 = vmatprep.subr.mxu0 0.0
  %3078 = vmatpush1.msra.mxu0 0.0
  %3079 = vmatprep.subr.mxu0 0.0
  %3080 = vmatpush1.msra.mxu0 0.0
  %3081 = vmatprep.mubr.f32.mxu0 0.0
  %3082 = vmatmul.mubr.f32.gmra.mrb[0].mxu0 %v3012
  %v3083 = vpop.f32.mrb[0].mxu0
  %v3084 = vadd.f32 %v3008, %v3083
  %v3085 = vpop.f32.mrb[0].mxu0
  %3086 = vmatprep.mubr.f32.mxu0 0.0
  %3087 = vmatmul.mubr.f32.gmra.mrb[0].mxu0 %v3015
  %v3088 = vpop.f32.mrb[0].mxu0
  %v3089 = vadd.f32 %v3008, %v3088
  %v3090 = vpop.f32.mrb[0].mxu0
  %3091 = vdwg.mxu0
  %v3092 = vld [vmem:[%s2 + $0xa4] sm:$0x1]
  %v3093 = vadd.f32 %v2896, %v3084
  %v3094 = vadd.f32 %v2897, %v3089
  %v3095 = vsel %vm32, %v3093, 0.0
  %3096 = vadd.xlane.f32.xlu0 %v3095
  %v3097 = vpop.xlane.xlu0 %3096
  %v3098 = vsel %vm32, %v3094, 0.0
  %3099 = vadd.xlane.f32.xlu0 %v3098
  %v3100 = vpop.xlane.xlu0 %3099
  %v3101 = vmul.f32 %v3097, %v1425
  %v3102 = vmul.f32 %v3100, %v1425
  %v3103 = vsub.f32 %v3093, %v3101
  %v3104 = vsub.f32 %v3094, %v3102
  %v3105 = vmul.f32 %v3103, %v3103
  %v3106 = vmul.f32 %v3104, %v3104
  %v3107 = vsel %vm32, %v3105, 0.0
  %3108 = vadd.xlane.f32.xlu0 %v3107
  %v3109 = vpop.xlane.xlu0 %3108
  %v3110 = vsel %vm32, %v3106, 0.0
  %3111 = vadd.xlane.f32.xlu0 %v3110
  %v3112 = vpop.xlane.xlu0 %3111
  %v3113 = vmul.f32 %v3109, %v1425
  %v3114 = vmul.f32 %v3112, %v1425
  %v3115 = vadd.f32 %v3113, 1e-06
  %v3116 = vadd.f32 %v3114, 1e-06
  %v3117 = vrsqrt.pop %v3115
  %v3118 = vrsqrt.pop %v3116
  %v3119 = vmul.f32 %v3103, %v3117
  %v3120 = vmul.f32 %v3104, %v3118
  %v3121 = vlaneseq
  %v3122 = vshrl.u32 %v3121, 7
  %v3123 = vsub.s32 0, %v3122
  %v3124 = vrot.slane %v3092, %v3123
  %v3125 = vmul.f32 %v3119, %v3124
  %v3126 = vmul.f32 %v3120, %v3124
  %3128 = vrot.lane.b32.xlu0 %v3124, 96
  %v3129 = vpop.permute.xlu0 %3128
  %v3131 = vadd.f32 %v3125, %v3129
  %v3132 = vadd.f32 %v3126, %v3129
  %3133 = vrot.lane.b32.xlu0 %v476, 32
  %v3134 = vpop.permute.xlu0 %3133
  %3135 = vrot.lane.b32.xlu0 %v478, 32
  %v3136 = vpop.permute.xlu0 %3135
  %3139 = vrot.lane.b32.xlu0 %v1082, 40
  %v3140 = vpop.permute.xlu0 %3139
  %3141 = vrot.lane.b32.xlu0 %v1084, 40
  %v3142 = vpop.permute.xlu0 %3141
  %3145 = vrot.lane.b32.xlu0 %v1914, 48
  %v3146 = vpop.permute.xlu0 %3145
  %3147 = vrot.lane.b32.xlu0 %v1916, 48
  %v3148 = vpop.permute.xlu0 %3147
  %3151 = vrot.lane.b32.xlu0 %v2520, 56
  %v3152 = vpop.permute.xlu0 %3151
  %3153 = vrot.lane.b32.xlu0 %v2522, 56
  %v3154 = vpop.permute.xlu0 %3153
  %v3157 = vsel %vm32, %v3131, %v3134
  %v3158 = vsel %vm32, %v3132, %v3136
  %vm3159 = vcmask 326656
  %v3160 = vsel %vm3159, %v3157, %v3140
  %v3161 = vsel %vm3159, %v3158, %v3142
  %vm3162 = vcmask 392192
  %v3163 = vsel %vm3162, %v3160, %v3146
  %v3164 = vsel %vm3162, %v3161, %v3148
  %vm3165 = vcmask 457728
  %v3166 = vsel %vm3165, %v3163, %v3152
  %v3167 = vsel %vm3165, %v3164, %v3154
  %3168 = vst.msk [vmem:[%s3] sm:$0xff] %vm3010, %v3166
  %3169 = vst.msk [vmem:[%s3 + $0x8] sm:$0xff] %vm3010, %v3167
  // Predicated region
  $region14: #{decoder_layer.1} parent=0 // pred_check
    _
  $region15: #{decoder_layer.1} parent=0 // pred_check_branch
    %3171 = sbr.rel (0) target = $region17
  $region16: #{decoder_layer.1} parent=0 // pred_region
    _
  $region17: #{decoder_layer.1} parent=0 // pred_fallthru
    _
  // Predicated region
  $region18: #{decoder_layer.1} parent=0 // pred_check
    _
  $region19: #{decoder_layer.1} parent=0 // pred_check_branch
    %3173 = sbr.rel (0) target = $region21
  $region20: #{decoder_layer.1} parent=0 // pred_region
    _
  $region21: #{decoder_layer.1} parent=0 // pred_fallthru
    _

</llo_original>
